<compile_context>
chip_gen: v7x
topology: tpu7x:2x2x1
jax: 0.10.0
libtpu: 0.0.40
codegen_flags: <defaults>
</compile_context>

<pallas_src>
import functools

import jax
import jax.numpy as jnp
from jax import lax
from jax.experimental import pallas as pl
from jax.experimental.pallas import tpu as pltpu

_NEG_INF = float("-inf")
_POS_INF = float("inf")


# --------------------------------- kernel ------------------------------------

def _cldice_sums_kernel(HS, PW, Hp, Wp, H, W, SH, PL, S, iter_,
                        yt_ref, yp_ref, out_ref):
    # Output block is per-core resident across the "arbitrary" slab axis.
    @pl.when(pl.program_id(1) == 0)
    def _():
        out_ref[...] = jnp.zeros_like(out_ref)

    # Boundary masks: built ONCE per grid step, reused by every shift of every
    # slab.  Packing factors are powers of two -> bitwise AND, no vector mod.
    row = lax.broadcasted_iota(jnp.int32, (HS, PW), 0)
    col = lax.broadcasted_iota(jnp.int32, (HS, PW), 1)
    rowh = (row & (Hp - 1)) if SH > 1 else row      # row index within image
    colw = (col & (Wp - 1)) if PL > 1 else col      # col index within image

    keep_h_m1 = (rowh >= 1) & (rowh < H)   # x[i-1] exists AND pos is a real row
    keep_h_p1 = rowh < (H - 1)             # x[i+1] exists (false on pad rows)
    keep_w_m1 = (colw >= 1) & (colw < W)
    keep_w_p1 = colw < (W - 1)

    # Ones matrix for MXU-based sublane reductions (MXU is otherwise idle).
    ones_lhs = jnp.ones((8, HS), jnp.float32)

    def sh_h_m1(x, fill):   # out[i] = x[i-1] along packed H
        return jnp.where(keep_h_m1, pltpu.roll(x, shift=1, axis=0), fill)

    def sh_h_p1(x, fill):   # out[i] = x[i+1] along packed H
        return jnp.where(keep_h_p1, pltpu.roll(x, shift=HS - 1, axis=0), fill)

    def sh_w_m1(x, fill):   # out[j] = x[j-1] along packed W
        return jnp.where(keep_w_m1, pltpu.roll(x, shift=1, axis=1), fill)

    def sh_w_p1(x, fill):   # out[j] = x[j+1] along packed W
        return jnp.where(keep_w_p1, pltpu.roll(x, shift=PW - 1, axis=1), fill)

    # 3-wide min/max pools, stride 1, implicit +/-inf padding (F.max_pool2d).
    def minpool_h(x):
        return jnp.minimum(jnp.minimum(sh_h_m1(x, _POS_INF), x),
                           sh_h_p1(x, _POS_INF))

    def minpool_w(x):
        return jnp.minimum(jnp.minimum(sh_w_m1(x, _POS_INF), x),
                           sh_w_p1(x, _POS_INF))

    def maxpool_h(x):
        return jnp.maximum(jnp.maximum(sh_h_m1(x, _NEG_INF), x),
                           sh_h_p1(x, _NEG_INF))

    def maxpool_w(x):
        return jnp.maximum(jnp.maximum(sh_w_m1(x, _NEG_INF), x),
                           sh_w_p1(x, _NEG_INF))

    def soft_erode(x):      # min of (3,1) and (1,3) pools
        return jnp.minimum(minpool_h(x), minpool_w(x))

    def soft_dilate(x):     # 3x3 max pool == separable 3-max along H then W
        return maxpool_w(maxpool_h(x))

    def relu(x):
        return jnp.maximum(x, 0.0)

    def soft_skel(img):
        # Reuses erode(img) both inside soft_open and as the next iteration's
        # image -> one fewer erode per iteration, bit-identical result.
        # Kept unrolled for small iter_ (live set bounded by the fori_loop
        # over slabs, per-slab arrays are <= 8 vregs each).
        e = soft_erode(img)
        img1 = soft_dilate(e)
        skel = relu(img - img1)
        for _ in range(iter_):
            img = e
            e = soft_erode(img)
            img1 = soft_dilate(e)
            delta = relu(img - img1)
            skel = skel + relu(delta - skel * delta)
        return skel

    def rowsum(q):
        # Sublane reduction on the idle MXU instead of the roll-saturated XLU.
        return jnp.dot(ones_lhs, q, preferred_element_type=jnp.float32)[0:1]

    def slab_body(s, acc):
        yt = yt_ref[s]      # (HS, PW) float32
        yp = yp_ref[s]
        skel_p = soft_skel(yp)
        skel_t = soft_skel(yt)
        partial = jnp.concatenate(
            [rowsum(yt * yp),       # dice intersection
             rowsum(yt),            # sum y_true
             rowsum(yp),            # sum y_pred
             rowsum(skel_p * yt),   # tprec numerator
             rowsum(skel_p),        # tprec denominator
             rowsum(skel_t * yp),   # tsens numerator
             rowsum(skel_t),        # tsens denominator
             jnp.zeros((1, PW), jnp.float32)],
            axis=0)                 # (8, PW)
        return acc + partial

    acc = lax.fori_loop(0, S, slab_body, jnp.zeros((8, PW), jnp.float32))
    out_ref[...] = out_ref[...] + acc[None]


# --------------------------------- wrapper ------------------------------------

def soft_dice_cldice(y_true, y_pred, iter_=3, alpha=0.5, smooth=1e-7):
    y_true = y_true.astype(jnp.float32)
    y_pred = y_pred.astype(jnp.float32)
    B, C, H, W = y_true.shape

    # Channel 0 never contributes to the loss -> drop it before any compute.
    N = B * (C - 1)
    yt = y_true[:, 1:].reshape(N, H, W)
    yp = y_pred[:, 1:].reshape(N, H, W)

    # ---- packing geometry (all static Python ints) ----
    # Lane axis: PL images of Wp columns, PW = PL*Wp is a multiple of 128.
    if W >= 128:
        Wp = ((W + 127) // 128) * 128
        PL = 1
    else:
        Wp = pl.next_power_of_2(W)
        PL = 128 // Wp
    PW = PL * Wp
    # Sublane axis: SH images of Hp rows, HS = SH*Hp <= 64 f32 sublanes
    # (<= 8 vregs per live array inside soft_skel).
    H2 = pl.next_power_of_2(H)
    if H2 <= 32:
        Hp = max(H2, 8)
        SH = 64 // Hp
    else:
        Hp = ((H + 7) // 8) * 8
        SH = 1
    HS = SH * Hp

    imgs_per_slab = SH * PL
    n_slabs = max(1, -(-N // imgs_per_slab))

    # Slabs per grid step: ~1 MiB per input block (x2 inputs x2 DMA buffers
    # ~= 4 MiB -> comfortably under every chip's VMEM budget, incl. v7x).
    slab_bytes = HS * PW * 4
    S = max(1, min((1 << 20) // slab_bytes, n_slabs))
    steps_total = -(-n_slabs // S)
    NC = 2 if steps_total >= 2 else 1          # 2-core split (v7x megacore)
    steps_per_core = -(-steps_total // NC)
    total_slabs = NC * steps_per_core * S      # pad with all-zero slabs

    def pack(x):
        # (N,H,W) -> zero-pad -> (slabs, SH, PL, Hp, Wp) -> (slabs, HS, PW).
        # Zero-padded images/rows/cols contribute exactly 0 to every sum and
        # are isolated by the in-kernel boundary masks.  When SH == PL == 1
        # the transpose is a no-op reshape (large-image fast path).
        x = jnp.pad(x, ((0, total_slabs * imgs_per_slab - N),
                        (0, Hp - H), (0, Wp - W)))
        x = x.reshape(total_slabs, SH, PL, Hp, Wp).transpose(0, 1, 3, 2, 4)
        return x.reshape(total_slabs, HS, PW)

    yt_p = pack(yt)
    yp_p = pack(yp)

    kern = functools.partial(_cldice_sums_kernel,
                             HS, PW, Hp, Wp, H, W, SH, PL, S, iter_)
    out = pl.pallas_call(
        kern,
        out_shape=jax.ShapeDtypeStruct((NC, 8, PW), jnp.float32),
        grid_spec=pltpu.PrefetchScalarGridSpec(
            num_scalar_prefetch=0,
            grid=(NC, steps_per_core),
            in_specs=[
                pl.BlockSpec((S, HS, PW),
                             lambda c, g: (c * steps_per_core + g, 0, 0)),
                pl.BlockSpec((S, HS, PW),
                             lambda c, g: (c * steps_per_core + g, 0, 0)),
            ],
            out_specs=pl.BlockSpec((1, 8, PW), lambda c, g: (c, 0, 0)),
        ),
        compiler_params=pltpu.CompilerParams(
            dimension_semantics=("parallel", "arbitrary"),
            vmem_limit_bytes=32 * 1024 * 1024,
        ),
    )(yt_p, yp_p)

    sums = jnp.sum(out, axis=(0, 2))            # reduce cores + lanes -> (8,)
    inter, sum_t, sum_p = sums[0], sums[1], sums[2]
    sp_t, sp_sum, st_p, st_sum = sums[3], sums[4], sums[5], sums[6]

    # NOTE: DiceLoss() is not defined in the reference snippet; this uses the
    # clDice repo's soft_dice (channels 1:, smooth = 1.0).  The `smooth`
    # argument only affects tprec/tsens, matching that repo.
    dice_smooth = 1.0
    dice = 1.0 - (2.0 * inter + dice_smooth) / (sum_t + sum_p + dice_smooth)

    tprec = (sp_t + smooth) / (sp_sum + smooth)
    tsens = (st_p + smooth) / (st_sum + smooth)
    cl_dice = 1.0 - 2.0 * (tprec * tsens) / (tprec + tsens)
    return (1.0 - alpha) * dice + alpha * cl_dice


# ----------------------- pure-JAX reference (for checking) -------------------

def _pool_ref(x, kh, kw, ph, pw, op, init):
    return lax.reduce_window(x, jnp.float32(init), op,
                             (1, 1, kh, kw), (1, 1, 1, 1),
                             ((0, 0), (0, 0), (ph, ph), (pw, pw)))


def _soft_erode_ref(x):
    p1 = _pool_ref(x, 3, 1, 1, 0, lax.min, _POS_INF)
    p2 = _pool_ref(x, 1, 3, 0, 1, lax.min, _POS_INF)
    return jnp.minimum(p1, p2)


def _soft_dilate_ref(x):
    return _pool_ref(x, 3, 3, 1, 1, lax.max, _NEG_INF)


def _soft_skel_ref(img, iter_):
    img1 = _soft_dilate_ref(_soft_erode_ref(img))
    skel = jnp.maximum(img - img1, 0.0)
    for _ in range(iter_):
        img = _soft_erode_ref(img)
        img1 = _soft_dilate_ref(_soft_erode_ref(img))
        delta = jnp.maximum(img - img1, 0.0)
        skel = skel + jnp.maximum(delta - skel * delta, 0.0)
    return skel


def _reference_loss(y_true, y_pred, iter_=3, alpha=0.5, smooth=1e-7):
    skel_p = _soft_skel_ref(y_pred, iter_)
    skel_t = _soft_skel_ref(y_true, iter_)
    inter = jnp.sum((y_true * y_pred)[:, 1:])
    dice = 1.0 - (2.0 * inter + 1.0) / (jnp.sum(y_true[:, 1:]) +
                                        jnp.sum(y_pred[:, 1:]) + 1.0)
    tprec = (jnp.sum((skel_p * y_true)[:, 1:]) + smooth) / (jnp.sum(skel_p[:, 1:]) + smooth)
    tsens = (jnp.sum((skel_t * y_pred)[:, 1:]) + smooth) / (jnp.sum(skel_t[:, 1:]) + smooth)
    cl_dice = 1.0 - 2.0 * (tprec * tsens) / (tprec + tsens)
    return (1.0 - alpha) * dice + alpha * cl_dice


# ----------------------------------- main -------------------------------------

if __name__ == "__main__":
    key = jax.random.PRNGKey(0)
    k1, k2 = jax.random.split(key)
    B, C, H, W = 2, 4, 16, 16

    y_pred = jax.random.uniform(k1, (B, C, H, W), dtype=jnp.float32)
    y_true = (jax.random.uniform(k2, (B, C, H, W), dtype=jnp.float32) > 0.5
              ).astype(jnp.float32)

    loss = soft_dice_cldice(y_true, y_pred, iter_=3, alpha=0.5, smooth=1e-7)
    loss = jax.block_until_ready(loss)

    ref = jax.block_until_ready(_reference_loss(y_true, y_pred))
    assert abs(float(loss) - float(ref)) < 1e-4, (float(loss), float(ref))

    print("KERNEL_OK")
</pallas_src>

<mosaic_0001>
module attributes {stable_mosaic.version = 11 : i64} {
  func.func @_cldice_sums_kernel(%arg0: i32, %arg1: i32, %arg2: memref<1x64x128xf32, #tpu.memory_space<vmem>>, %arg3: memref<1x64x128xf32, #tpu.memory_space<vmem>>, %arg4: memref<1x8x128xf32, #tpu.memory_space<vmem>>) attributes {dimension_semantics = [#tpu.dimension_semantics<parallel>, #tpu.dimension_semantics<arbitrary>], iteration_bounds = array<i64: 1, 1>, scalar_prefetch = 0 : i64, scratch_operands = 0 : i64, tpu.core_type = #tpu.core_type<tc>, window_params = [{transform_indices = @transform_0, window_bounds = array<i64: 1, 64, 128>}, {transform_indices = @transform_1, window_bounds = array<i64: 1, 64, 128>}, {transform_indices = @transform_2, window_bounds = array<i64: 1, 8, 128>}]} {
    %c0_i32 = arith.constant 0 : i32
    %0 = arith.cmpi eq, %arg1, %c0_i32 : i32
    %1 = arith.extui %0 : i1 to i32
    %c0_i32_0 = arith.constant 0 : i32
    %2 = arith.cmpi ne, %1, %c0_i32_0 : i32
    scf.if %2 {
      %cst_166 = arith.constant 0.000000e+00 : f32
      %373 = vector.broadcast %cst_166 : f32 to vector<1x8x128xf32>
      %c0_167 = arith.constant 0 : index
      %c0_168 = arith.constant 0 : index
      %c0_169 = arith.constant 0 : index
      %374 = vector.load %arg4[%c0_167, %c0_168, %c0_169] : memref<1x8x128xf32, #tpu.memory_space<vmem>>, vector<1x8x128xf32>
      tpu.vector_store %arg4[%c0_167, %c0_168, %c0_169], %373 {strides = array<i32>} : memref<1x8x128xf32, #tpu.memory_space<vmem>>, vector<1x8x128xf32>,
    } else {
    }
    %3 = tpu.iota {dimensions = array<i32: 0>} : vector<64x128xi32>
    %4 = tpu.iota {dimensions = array<i32: 1>} : vector<64x128xi32>
    %c15_i32 = arith.constant 15 : i32
    %5 = vector.broadcast %c15_i32 : i32 to vector<64x128xi32>
    %6 = arith.andi %3, %5 : vector<64x128xi32>
    %c15_i32_1 = arith.constant 15 : i32
    %7 = vector.broadcast %c15_i32_1 : i32 to vector<64x128xi32>
    %8 = arith.andi %4, %7 : vector<64x128xi32>
    %c1_i32 = arith.constant 1 : i32
    %9 = vector.broadcast %c1_i32 : i32 to vector<64x128xi32>
    %10 = arith.cmpi sge, %6, %9 : vector<64x128xi32>
    %c16_i32 = arith.constant 16 : i32
    %11 = vector.broadcast %c16_i32 : i32 to vector<64x128xi32>
    %12 = arith.cmpi slt, %6, %11 : vector<64x128xi32>
    %13 = arith.andi %10, %12 : vector<64x128xi1>
    %c15_i32_2 = arith.constant 15 : i32
    %14 = vector.broadcast %c15_i32_2 : i32 to vector<64x128xi32>
    %15 = arith.cmpi slt, %6, %14 : vector<64x128xi32>
    %c1_i32_3 = arith.constant 1 : i32
    %16 = vector.broadcast %c1_i32_3 : i32 to vector<64x128xi32>
    %17 = arith.cmpi sge, %8, %16 : vector<64x128xi32>
    %c16_i32_4 = arith.constant 16 : i32
    %18 = vector.broadcast %c16_i32_4 : i32 to vector<64x128xi32>
    %19 = arith.cmpi slt, %8, %18 : vector<64x128xi32>
    %20 = arith.andi %17, %19 : vector<64x128xi1>
    %c15_i32_5 = arith.constant 15 : i32
    %21 = vector.broadcast %c15_i32_5 : i32 to vector<64x128xi32>
    %22 = arith.cmpi slt, %8, %21 : vector<64x128xi32>
    %cst = arith.constant 1.000000e+00 : f32
    %23 = vector.broadcast %cst : f32 to vector<8x64xf32>
    %cst_6 = arith.constant 0.000000e+00 : f32
    %24 = vector.broadcast %cst_6 : f32 to vector<8x128xf32>
    %c0_i32_7 = arith.constant 0 : i32
    %25 = arith.index_cast %c0_i32_7 : i32 to index
    %c0 = arith.constant 0 : index
    %c0_8 = arith.constant 0 : index
    %26 = vector.load %arg2[%25, %c0, %c0_8] : memref<1x64x128xf32, #tpu.memory_space<vmem>>, vector<1x64x128xf32>
    %27 = vector.shape_cast %26 : vector<1x64x128xf32> to vector<64x128xf32>
    %28 = arith.index_cast %c0_i32_7 : i32 to index
    %c0_9 = arith.constant 0 : index
    %c0_10 = arith.constant 0 : index
    %29 = vector.load %arg3[%28, %c0_9, %c0_10] : memref<1x64x128xf32, #tpu.memory_space<vmem>>, vector<1x64x128xf32>
    %30 = vector.shape_cast %29 : vector<1x64x128xf32> to vector<64x128xf32>
    %c1_i32_11 = arith.constant 1 : i32
    %31 = tpu.dynamic_rotate %30 by %c1_i32_11 dim 0 : vector<64x128xf32>, i32 -> vector<64x128xf32>
    %cst_12 = arith.constant 0x7F800000 : f32
    %32 = vector.broadcast %cst_12 : f32 to vector<64x128xf32>
    %33 = arith.select %13, %31, %32 : vector<64x128xi1>, vector<64x128xf32>
    %34 = arith.minimumf %33, %30 : vector<64x128xf32>
    %c63_i32 = arith.constant 63 : i32
    %35 = tpu.dynamic_rotate %30 by %c63_i32 dim 0 : vector<64x128xf32>, i32 -> vector<64x128xf32>
    %cst_13 = arith.constant 0x7F800000 : f32
    %36 = vector.broadcast %cst_13 : f32 to vector<64x128xf32>
    %37 = arith.select %15, %35, %36 : vector<64x128xi1>, vector<64x128xf32>
    %38 = arith.minimumf %34, %37 : vector<64x128xf32>
    %c1_i32_14 = arith.constant 1 : i32
    %39 = tpu.dynamic_rotate %30 by %c1_i32_14 dim 1 : vector<64x128xf32>, i32 -> vector<64x128xf32>
    %cst_15 = arith.constant 0x7F800000 : f32
    %40 = vector.broadcast %cst_15 : f32 to vector<64x128xf32>
    %41 = arith.select %20, %39, %40 : vector<64x128xi1>, vector<64x128xf32>
    %42 = arith.minimumf %41, %30 : vector<64x128xf32>
    %c127_i32 = arith.constant 127 : i32
    %43 = tpu.dynamic_rotate %30 by %c127_i32 dim 1 : vector<64x128xf32>, i32 -> vector<64x128xf32>
    %cst_16 = arith.constant 0x7F800000 : f32
    %44 = vector.broadcast %cst_16 : f32 to vector<64x128xf32>
    %45 = arith.select %22, %43, %44 : vector<64x128xi1>, vector<64x128xf32>
    %46 = arith.minimumf %42, %45 : vector<64x128xf32>
    %47 = arith.minimumf %38, %46 : vector<64x128xf32>
    %c1_i32_17 = arith.constant 1 : i32
    %48 = tpu.dynamic_rotate %47 by %c1_i32_17 dim 0 : vector<64x128xf32>, i32 -> vector<64x128xf32>
    %cst_18 = arith.constant 0xFF800000 : f32
    %49 = vector.broadcast %cst_18 : f32 to vector<64x128xf32>
    %50 = arith.select %13, %48, %49 : vector<64x128xi1>, vector<64x128xf32>
    %51 = arith.maximumf %50, %47 : vector<64x128xf32>
    %c63_i32_19 = arith.constant 63 : i32
    %52 = tpu.dynamic_rotate %47 by %c63_i32_19 dim 0 : vector<64x128xf32>, i32 -> vector<64x128xf32>
    %cst_20 = arith.constant 0xFF800000 : f32
    %53 = vector.broadcast %cst_20 : f32 to vector<64x128xf32>
    %54 = arith.select %15, %52, %53 : vector<64x128xi1>, vector<64x128xf32>
    %55 = arith.maximumf %51, %54 : vector<64x128xf32>
    %c1_i32_21 = arith.constant 1 : i32
    %56 = tpu.dynamic_rotate %55 by %c1_i32_21 dim 1 : vector<64x128xf32>, i32 -> vector<64x128xf32>
    %cst_22 = arith.constant 0xFF800000 : f32
    %57 = vector.broadcast %cst_22 : f32 to vector<64x128xf32>
    %58 = arith.select %20, %56, %57 : vector<64x128xi1>, vector<64x128xf32>
    %59 = arith.maximumf %58, %55 : vector<64x128xf32>
    %c127_i32_23 = arith.constant 127 : i32
    %60 = tpu.dynamic_rotate %55 by %c127_i32_23 dim 1 : vector<64x128xf32>, i32 -> vector<64x128xf32>
    %cst_24 = arith.constant 0xFF800000 : f32
    %61 = vector.broadcast %cst_24 : f32 to vector<64x128xf32>
    %62 = arith.select %22, %60, %61 : vector<64x128xi1>, vector<64x128xf32>
    %63 = arith.maximumf %59, %62 : vector<64x128xf32>
    %64 = arith.subf %30, %63 : vector<64x128xf32>
    %cst_25 = arith.constant 0.000000e+00 : f32
    %65 = vector.broadcast %cst_25 : f32 to vector<64x128xf32>
    %66 = arith.maximumf %64, %65 : vector<64x128xf32>
    %c1_i32_26 = arith.constant 1 : i32
    %67 = tpu.dynamic_rotate %47 by %c1_i32_26 dim 0 : vector<64x128xf32>, i32 -> vector<64x128xf32>
    %cst_27 = arith.constant 0x7F800000 : f32
    %68 = vector.broadcast %cst_27 : f32 to vector<64x128xf32>
    %69 = arith.select %13, %67, %68 : vector<64x128xi1>, vector<64x128xf32>
    %70 = arith.minimumf %69, %47 : vector<64x128xf32>
    %c63_i32_28 = arith.constant 63 : i32
    %71 = tpu.dynamic_rotate %47 by %c63_i32_28 dim 0 : vector<64x128xf32>, i32 -> vector<64x128xf32>
    %cst_29 = arith.constant 0x7F800000 : f32
    %72 = vector.broadcast %cst_29 : f32 to vector<64x128xf32>
    %73 = arith.select %15, %71, %72 : vector<64x128xi1>, vector<64x128xf32>
    %74 = arith.minimumf %70, %73 : vector<64x128xf32>
    %c1_i32_30 = arith.constant 1 : i32
    %75 = tpu.dynamic_rotate %47 by %c1_i32_30 dim 1 : vector<64x128xf32>, i32 -> vector<64x128xf32>
    %cst_31 = arith.constant 0x7F800000 : f32
    %76 = vector.broadcast %cst_31 : f32 to vector<64x128xf32>
    %77 = arith.select %20, %75, %76 : vector<64x128xi1>, vector<64x128xf32>
    %78 = arith.minimumf %77, %47 : vector<64x128xf32>
    %c127_i32_32 = arith.constant 127 : i32
    %79 = tpu.dynamic_rotate %47 by %c127_i32_32 dim 1 : vector<64x128xf32>, i32 -> vector<64x128xf32>
    %cst_33 = arith.constant 0x7F800000 : f32
    %80 = vector.broadcast %cst_33 : f32 to vector<64x128xf32>
    %81 = arith.select %22, %79, %80 : vector<64x128xi1>, vector<64x128xf32>
    %82 = arith.minimumf %78, %81 : vector<64x128xf32>
    %83 = arith.minimumf %74, %82 : vector<64x128xf32>
    %c1_i32_34 = arith.constant 1 : i32
    %84 = tpu.dynamic_rotate %83 by %c1_i32_34 dim 0 : vector<64x128xf32>, i32 -> vector<64x128xf32>
    %cst_35 = arith.constant 0xFF800000 : f32
    %85 = vector.broadcast %cst_35 : f32 to vector<64x128xf32>
    %86 = arith.select %13, %84, %85 : vector<64x128xi1>, vector<64x128xf32>
    %87 = arith.maximumf %86, %83 : vector<64x128xf32>
    %c63_i32_36 = arith.constant 63 : i32
    %88 = tpu.dynamic_rotate %83 by %c63_i32_36 dim 0 : vector<64x128xf32>, i32 -> vector<64x128xf32>
    %cst_37 = arith.constant 0xFF800000 : f32
    %89 = vector.broadcast %cst_37 : f32 to vector<64x128xf32>
    %90 = arith.select %15, %88, %89 : vector<64x128xi1>, vector<64x128xf32>
    %91 = arith.maximumf %87, %90 : vector<64x128xf32>
    %c1_i32_38 = arith.constant 1 : i32
    %92 = tpu.dynamic_rotate %91 by %c1_i32_38 dim 1 : vector<64x128xf32>, i32 -> vector<64x128xf32>
    %cst_39 = arith.constant 0xFF800000 : f32
    %93 = vector.broadcast %cst_39 : f32 to vector<64x128xf32>
    %94 = arith.select %20, %92, %93 : vector<64x128xi1>, vector<64x128xf32>
    %95 = arith.maximumf %94, %91 : vector<64x128xf32>
    %c127_i32_40 = arith.constant 127 : i32
    %96 = tpu.dynamic_rotate %91 by %c127_i32_40 dim 1 : vector<64x128xf32>, i32 -> vector<64x128xf32>
    %cst_41 = arith.constant 0xFF800000 : f32
    %97 = vector.broadcast %cst_41 : f32 to vector<64x128xf32>
    %98 = arith.select %22, %96, %97 : vector<64x128xi1>, vector<64x128xf32>
    %99 = arith.maximumf %95, %98 : vector<64x128xf32>
    %100 = arith.subf %47, %99 : vector<64x128xf32>
    %cst_42 = arith.constant 0.000000e+00 : f32
    %101 = vector.broadcast %cst_42 : f32 to vector<64x128xf32>
    %102 = arith.maximumf %100, %101 : vector<64x128xf32>
    %103 = arith.mulf %66, %102 : vector<64x128xf32>
    %104 = arith.subf %102, %103 : vector<64x128xf32>
    %cst_43 = arith.constant 0.000000e+00 : f32
    %105 = vector.broadcast %cst_43 : f32 to vector<64x128xf32>
    %106 = arith.maximumf %104, %105 : vector<64x128xf32>
    %107 = arith.addf %66, %106 : vector<64x128xf32>
    %c1_i32_44 = arith.constant 1 : i32
    %108 = tpu.dynamic_rotate %83 by %c1_i32_44 dim 0 : vector<64x128xf32>, i32 -> vector<64x128xf32>
    %cst_45 = arith.constant 0x7F800000 : f32
    %109 = vector.broadcast %cst_45 : f32 to vector<64x128xf32>
    %110 = arith.select %13, %108, %109 : vector<64x128xi1>, vector<64x128xf32>
    %111 = arith.minimumf %110, %83 : vector<64x128xf32>
    %c63_i32_46 = arith.constant 63 : i32
    %112 = tpu.dynamic_rotate %83 by %c63_i32_46 dim 0 : vector<64x128xf32>, i32 -> vector<64x128xf32>
    %cst_47 = arith.constant 0x7F800000 : f32
    %113 = vector.broadcast %cst_47 : f32 to vector<64x128xf32>
    %114 = arith.select %15, %112, %113 : vector<64x128xi1>, vector<64x128xf32>
    %115 = arith.minimumf %111, %114 : vector<64x128xf32>
    %c1_i32_48 = arith.constant 1 : i32
    %116 = tpu.dynamic_rotate %83 by %c1_i32_48 dim 1 : vector<64x128xf32>, i32 -> vector<64x128xf32>
    %cst_49 = arith.constant 0x7F800000 : f32
    %117 = vector.broadcast %cst_49 : f32 to vector<64x128xf32>
    %118 = arith.select %20, %116, %117 : vector<64x128xi1>, vector<64x128xf32>
    %119 = arith.minimumf %118, %83 : vector<64x128xf32>
    %c127_i32_50 = arith.constant 127 : i32
    %120 = tpu.dynamic_rotate %83 by %c127_i32_50 dim 1 : vector<64x128xf32>, i32 -> vector<64x128xf32>
    %cst_51 = arith.constant 0x7F800000 : f32
    %121 = vector.broadcast %cst_51 : f32 to vector<64x128xf32>
    %122 = arith.select %22, %120, %121 : vector<64x128xi1>, vector<64x128xf32>
    %123 = arith.minimumf %119, %122 : vector<64x128xf32>
    %124 = arith.minimumf %115, %123 : vector<64x128xf32>
    %c1_i32_52 = arith.constant 1 : i32
    %125 = tpu.dynamic_rotate %124 by %c1_i32_52 dim 0 : vector<64x128xf32>, i32 -> vector<64x128xf32>
    %cst_53 = arith.constant 0xFF800000 : f32
    %126 = vector.broadcast %cst_53 : f32 to vector<64x128xf32>
    %127 = arith.select %13, %125, %126 : vector<64x128xi1>, vector<64x128xf32>
    %128 = arith.maximumf %127, %124 : vector<64x128xf32>
    %c63_i32_54 = arith.constant 63 : i32
    %129 = tpu.dynamic_rotate %124 by %c63_i32_54 dim 0 : vector<64x128xf32>, i32 -> vector<64x128xf32>
    %cst_55 = arith.constant 0xFF800000 : f32
    %130 = vector.broadcast %cst_55 : f32 to vector<64x128xf32>
    %131 = arith.select %15, %129, %130 : vector<64x128xi1>, vector<64x128xf32>
    %132 = arith.maximumf %128, %131 : vector<64x128xf32>
    %c1_i32_56 = arith.constant 1 : i32
    %133 = tpu.dynamic_rotate %132 by %c1_i32_56 dim 1 : vector<64x128xf32>, i32 -> vector<64x128xf32>
    %cst_57 = arith.constant 0xFF800000 : f32
    %134 = vector.broadcast %cst_57 : f32 to vector<64x128xf32>
    %135 = arith.select %20, %133, %134 : vector<64x128xi1>, vector<64x128xf32>
    %136 = arith.maximumf %135, %132 : vector<64x128xf32>
    %c127_i32_58 = arith.constant 127 : i32
    %137 = tpu.dynamic_rotate %132 by %c127_i32_58 dim 1 : vector<64x128xf32>, i32 -> vector<64x128xf32>
    %cst_59 = arith.constant 0xFF800000 : f32
    %138 = vector.broadcast %cst_59 : f32 to vector<64x128xf32>
    %139 = arith.select %22, %137, %138 : vector<64x128xi1>, vector<64x128xf32>
    %140 = arith.maximumf %136, %139 : vector<64x128xf32>
    %141 = arith.subf %83, %140 : vector<64x128xf32>
    %cst_60 = arith.constant 0.000000e+00 : f32
    %142 = vector.broadcast %cst_60 : f32 to vector<64x128xf32>
    %143 = arith.maximumf %141, %142 : vector<64x128xf32>
    %144 = arith.mulf %107, %143 : vector<64x128xf32>
    %145 = arith.subf %143, %144 : vector<64x128xf32>
    %cst_61 = arith.constant 0.000000e+00 : f32
    %146 = vector.broadcast %cst_61 : f32 to vector<64x128xf32>
    %147 = arith.maximumf %145, %146 : vector<64x128xf32>
    %148 = arith.addf %107, %147 : vector<64x128xf32>
    %c1_i32_62 = arith.constant 1 : i32
    %149 = tpu.dynamic_rotate %124 by %c1_i32_62 dim 0 : vector<64x128xf32>, i32 -> vector<64x128xf32>
    %cst_63 = arith.constant 0x7F800000 : f32
    %150 = vector.broadcast %cst_63 : f32 to vector<64x128xf32>
    %151 = arith.select %13, %149, %150 : vector<64x128xi1>, vector<64x128xf32>
    %152 = arith.minimumf %151, %124 : vector<64x128xf32>
    %c63_i32_64 = arith.constant 63 : i32
    %153 = tpu.dynamic_rotate %124 by %c63_i32_64 dim 0 : vector<64x128xf32>, i32 -> vector<64x128xf32>
    %cst_65 = arith.constant 0x7F800000 : f32
    %154 = vector.broadcast %cst_65 : f32 to vector<64x128xf32>
    %155 = arith.select %15, %153, %154 : vector<64x128xi1>, vector<64x128xf32>
    %156 = arith.minimumf %152, %155 : vector<64x128xf32>
    %c1_i32_66 = arith.constant 1 : i32
    %157 = tpu.dynamic_rotate %124 by %c1_i32_66 dim 1 : vector<64x128xf32>, i32 -> vector<64x128xf32>
    %cst_67 = arith.constant 0x7F800000 : f32
    %158 = vector.broadcast %cst_67 : f32 to vector<64x128xf32>
    %159 = arith.select %20, %157, %158 : vector<64x128xi1>, vector<64x128xf32>
    %160 = arith.minimumf %159, %124 : vector<64x128xf32>
    %c127_i32_68 = arith.constant 127 : i32
    %161 = tpu.dynamic_rotate %124 by %c127_i32_68 dim 1 : vector<64x128xf32>, i32 -> vector<64x128xf32>
    %cst_69 = arith.constant 0x7F800000 : f32
    %162 = vector.broadcast %cst_69 : f32 to vector<64x128xf32>
    %163 = arith.select %22, %161, %162 : vector<64x128xi1>, vector<64x128xf32>
    %164 = arith.minimumf %160, %163 : vector<64x128xf32>
    %165 = arith.minimumf %156, %164 : vector<64x128xf32>
    %c1_i32_70 = arith.constant 1 : i32
    %166 = tpu.dynamic_rotate %165 by %c1_i32_70 dim 0 : vector<64x128xf32>, i32 -> vector<64x128xf32>
    %cst_71 = arith.constant 0xFF800000 : f32
    %167 = vector.broadcast %cst_71 : f32 to vector<64x128xf32>
    %168 = arith.select %13, %166, %167 : vector<64x128xi1>, vector<64x128xf32>
    %169 = arith.maximumf %168, %165 : vector<64x128xf32>
    %c63_i32_72 = arith.constant 63 : i32
    %170 = tpu.dynamic_rotate %165 by %c63_i32_72 dim 0 : vector<64x128xf32>, i32 -> vector<64x128xf32>
    %cst_73 = arith.constant 0xFF800000 : f32
    %171 = vector.broadcast %cst_73 : f32 to vector<64x128xf32>
    %172 = arith.select %15, %170, %171 : vector<64x128xi1>, vector<64x128xf32>
    %173 = arith.maximumf %169, %172 : vector<64x128xf32>
    %c1_i32_74 = arith.constant 1 : i32
    %174 = tpu.dynamic_rotate %173 by %c1_i32_74 dim 1 : vector<64x128xf32>, i32 -> vector<64x128xf32>
    %cst_75 = arith.constant 0xFF800000 : f32
    %175 = vector.broadcast %cst_75 : f32 to vector<64x128xf32>
    %176 = arith.select %20, %174, %175 : vector<64x128xi1>, vector<64x128xf32>
    %177 = arith.maximumf %176, %173 : vector<64x128xf32>
    %c127_i32_76 = arith.constant 127 : i32
    %178 = tpu.dynamic_rotate %173 by %c127_i32_76 dim 1 : vector<64x128xf32>, i32 -> vector<64x128xf32>
    %cst_77 = arith.constant 0xFF800000 : f32
    %179 = vector.broadcast %cst_77 : f32 to vector<64x128xf32>
    %180 = arith.select %22, %178, %179 : vector<64x128xi1>, vector<64x128xf32>
    %181 = arith.maximumf %177, %180 : vector<64x128xf32>
    %182 = arith.subf %124, %181 : vector<64x128xf32>
    %cst_78 = arith.constant 0.000000e+00 : f32
    %183 = vector.broadcast %cst_78 : f32 to vector<64x128xf32>
    %184 = arith.maximumf %182, %183 : vector<64x128xf32>
    %185 = arith.mulf %148, %184 : vector<64x128xf32>
    %186 = arith.subf %184, %185 : vector<64x128xf32>
    %cst_79 = arith.constant 0.000000e+00 : f32
    %187 = vector.broadcast %cst_79 : f32 to vector<64x128xf32>
    %188 = arith.maximumf %186, %187 : vector<64x128xf32>
    %189 = arith.addf %148, %188 : vector<64x128xf32>
    %c1_i32_80 = arith.constant 1 : i32
    %190 = tpu.dynamic_rotate %27 by %c1_i32_80 dim 0 : vector<64x128xf32>, i32 -> vector<64x128xf32>
    %cst_81 = arith.constant 0x7F800000 : f32
    %191 = vector.broadcast %cst_81 : f32 to vector<64x128xf32>
    %192 = arith.select %13, %190, %191 : vector<64x128xi1>, vector<64x128xf32>
    %193 = arith.minimumf %192, %27 : vector<64x128xf32>
    %c63_i32_82 = arith.constant 63 : i32
    %194 = tpu.dynamic_rotate %27 by %c63_i32_82 dim 0 : vector<64x128xf32>, i32 -> vector<64x128xf32>
    %cst_83 = arith.constant 0x7F800000 : f32
    %195 = vector.broadcast %cst_83 : f32 to vector<64x128xf32>
    %196 = arith.select %15, %194, %195 : vector<64x128xi1>, vector<64x128xf32>
    %197 = arith.minimumf %193, %196 : vector<64x128xf32>
    %c1_i32_84 = arith.constant 1 : i32
    %198 = tpu.dynamic_rotate %27 by %c1_i32_84 dim 1 : vector<64x128xf32>, i32 -> vector<64x128xf32>
    %cst_85 = arith.constant 0x7F800000 : f32
    %199 = vector.broadcast %cst_85 : f32 to vector<64x128xf32>
    %200 = arith.select %20, %198, %199 : vector<64x128xi1>, vector<64x128xf32>
    %201 = arith.minimumf %200, %27 : vector<64x128xf32>
    %c127_i32_86 = arith.constant 127 : i32
    %202 = tpu.dynamic_rotate %27 by %c127_i32_86 dim 1 : vector<64x128xf32>, i32 -> vector<64x128xf32>
    %cst_87 = arith.constant 0x7F800000 : f32
    %203 = vector.broadcast %cst_87 : f32 to vector<64x128xf32>
    %204 = arith.select %22, %202, %203 : vector<64x128xi1>, vector<64x128xf32>
    %205 = arith.minimumf %201, %204 : vector<64x128xf32>
    %206 = arith.minimumf %197, %205 : vector<64x128xf32>
    %c1_i32_88 = arith.constant 1 : i32
    %207 = tpu.dynamic_rotate %206 by %c1_i32_88 dim 0 : vector<64x128xf32>, i32 -> vector<64x128xf32>
    %cst_89 = arith.constant 0xFF800000 : f32
    %208 = vector.broadcast %cst_89 : f32 to vector<64x128xf32>
    %209 = arith.select %13, %207, %208 : vector<64x128xi1>, vector<64x128xf32>
    %210 = arith.maximumf %209, %206 : vector<64x128xf32>
    %c63_i32_90 = arith.constant 63 : i32
    %211 = tpu.dynamic_rotate %206 by %c63_i32_90 dim 0 : vector<64x128xf32>, i32 -> vector<64x128xf32>
    %cst_91 = arith.constant 0xFF800000 : f32
    %212 = vector.broadcast %cst_91 : f32 to vector<64x128xf32>
    %213 = arith.select %15, %211, %212 : vector<64x128xi1>, vector<64x128xf32>
    %214 = arith.maximumf %210, %213 : vector<64x128xf32>
    %c1_i32_92 = arith.constant 1 : i32
    %215 = tpu.dynamic_rotate %214 by %c1_i32_92 dim 1 : vector<64x128xf32>, i32 -> vector<64x128xf32>
    %cst_93 = arith.constant 0xFF800000 : f32
    %216 = vector.broadcast %cst_93 : f32 to vector<64x128xf32>
    %217 = arith.select %20, %215, %216 : vector<64x128xi1>, vector<64x128xf32>
    %218 = arith.maximumf %217, %214 : vector<64x128xf32>
    %c127_i32_94 = arith.constant 127 : i32
    %219 = tpu.dynamic_rotate %214 by %c127_i32_94 dim 1 : vector<64x128xf32>, i32 -> vector<64x128xf32>
    %cst_95 = arith.constant 0xFF800000 : f32
    %220 = vector.broadcast %cst_95 : f32 to vector<64x128xf32>
    %221 = arith.select %22, %219, %220 : vector<64x128xi1>, vector<64x128xf32>
    %222 = arith.maximumf %218, %221 : vector<64x128xf32>
    %223 = arith.subf %27, %222 : vector<64x128xf32>
    %cst_96 = arith.constant 0.000000e+00 : f32
    %224 = vector.broadcast %cst_96 : f32 to vector<64x128xf32>
    %225 = arith.maximumf %223, %224 : vector<64x128xf32>
    %c1_i32_97 = arith.constant 1 : i32
    %226 = tpu.dynamic_rotate %206 by %c1_i32_97 dim 0 : vector<64x128xf32>, i32 -> vector<64x128xf32>
    %cst_98 = arith.constant 0x7F800000 : f32
    %227 = vector.broadcast %cst_98 : f32 to vector<64x128xf32>
    %228 = arith.select %13, %226, %227 : vector<64x128xi1>, vector<64x128xf32>
    %229 = arith.minimumf %228, %206 : vector<64x128xf32>
    %c63_i32_99 = arith.constant 63 : i32
    %230 = tpu.dynamic_rotate %206 by %c63_i32_99 dim 0 : vector<64x128xf32>, i32 -> vector<64x128xf32>
    %cst_100 = arith.constant 0x7F800000 : f32
    %231 = vector.broadcast %cst_100 : f32 to vector<64x128xf32>
    %232 = arith.select %15, %230, %231 : vector<64x128xi1>, vector<64x128xf32>
    %233 = arith.minimumf %229, %232 : vector<64x128xf32>
    %c1_i32_101 = arith.constant 1 : i32
    %234 = tpu.dynamic_rotate %206 by %c1_i32_101 dim 1 : vector<64x128xf32>, i32 -> vector<64x128xf32>
    %cst_102 = arith.constant 0x7F800000 : f32
    %235 = vector.broadcast %cst_102 : f32 to vector<64x128xf32>
    %236 = arith.select %20, %234, %235 : vector<64x128xi1>, vector<64x128xf32>
    %237 = arith.minimumf %236, %206 : vector<64x128xf32>
    %c127_i32_103 = arith.constant 127 : i32
    %238 = tpu.dynamic_rotate %206 by %c127_i32_103 dim 1 : vector<64x128xf32>, i32 -> vector<64x128xf32>
    %cst_104 = arith.constant 0x7F800000 : f32
    %239 = vector.broadcast %cst_104 : f32 to vector<64x128xf32>
    %240 = arith.select %22, %238, %239 : vector<64x128xi1>, vector<64x128xf32>
    %241 = arith.minimumf %237, %240 : vector<64x128xf32>
    %242 = arith.minimumf %233, %241 : vector<64x128xf32>
    %c1_i32_105 = arith.constant 1 : i32
    %243 = tpu.dynamic_rotate %242 by %c1_i32_105 dim 0 : vector<64x128xf32>, i32 -> vector<64x128xf32>
    %cst_106 = arith.constant 0xFF800000 : f32
    %244 = vector.broadcast %cst_106 : f32 to vector<64x128xf32>
    %245 = arith.select %13, %243, %244 : vector<64x128xi1>, vector<64x128xf32>
    %246 = arith.maximumf %245, %242 : vector<64x128xf32>
    %c63_i32_107 = arith.constant 63 : i32
    %247 = tpu.dynamic_rotate %242 by %c63_i32_107 dim 0 : vector<64x128xf32>, i32 -> vector<64x128xf32>
    %cst_108 = arith.constant 0xFF800000 : f32
    %248 = vector.broadcast %cst_108 : f32 to vector<64x128xf32>
    %249 = arith.select %15, %247, %248 : vector<64x128xi1>, vector<64x128xf32>
    %250 = arith.maximumf %246, %249 : vector<64x128xf32>
    %c1_i32_109 = arith.constant 1 : i32
    %251 = tpu.dynamic_rotate %250 by %c1_i32_109 dim 1 : vector<64x128xf32>, i32 -> vector<64x128xf32>
    %cst_110 = arith.constant 0xFF800000 : f32
    %252 = vector.broadcast %cst_110 : f32 to vector<64x128xf32>
    %253 = arith.select %20, %251, %252 : vector<64x128xi1>, vector<64x128xf32>
    %254 = arith.maximumf %253, %250 : vector<64x128xf32>
    %c127_i32_111 = arith.constant 127 : i32
    %255 = tpu.dynamic_rotate %250 by %c127_i32_111 dim 1 : vector<64x128xf32>, i32 -> vector<64x128xf32>
    %cst_112 = arith.constant 0xFF800000 : f32
    %256 = vector.broadcast %cst_112 : f32 to vector<64x128xf32>
    %257 = arith.select %22, %255, %256 : vector<64x128xi1>, vector<64x128xf32>
    %258 = arith.maximumf %254, %257 : vector<64x128xf32>
    %259 = arith.subf %206, %258 : vector<64x128xf32>
    %cst_113 = arith.constant 0.000000e+00 : f32
    %260 = vector.broadcast %cst_113 : f32 to vector<64x128xf32>
    %261 = arith.maximumf %259, %260 : vector<64x128xf32>
    %262 = arith.mulf %225, %261 : vector<64x128xf32>
    %263 = arith.subf %261, %262 : vector<64x128xf32>
    %cst_114 = arith.constant 0.000000e+00 : f32
    %264 = vector.broadcast %cst_114 : f32 to vector<64x128xf32>
    %265 = arith.maximumf %263, %264 : vector<64x128xf32>
    %266 = arith.addf %225, %265 : vector<64x128xf32>
    %c1_i32_115 = arith.constant 1 : i32
    %267 = tpu.dynamic_rotate %242 by %c1_i32_115 dim 0 : vector<64x128xf32>, i32 -> vector<64x128xf32>
    %cst_116 = arith.constant 0x7F800000 : f32
    %268 = vector.broadcast %cst_116 : f32 to vector<64x128xf32>
    %269 = arith.select %13, %267, %268 : vector<64x128xi1>, vector<64x128xf32>
    %270 = arith.minimumf %269, %242 : vector<64x128xf32>
    %c63_i32_117 = arith.constant 63 : i32
    %271 = tpu.dynamic_rotate %242 by %c63_i32_117 dim 0 : vector<64x128xf32>, i32 -> vector<64x128xf32>
    %cst_118 = arith.constant 0x7F800000 : f32
    %272 = vector.broadcast %cst_118 : f32 to vector<64x128xf32>
    %273 = arith.select %15, %271, %272 : vector<64x128xi1>, vector<64x128xf32>
    %274 = arith.minimumf %270, %273 : vector<64x128xf32>
    %c1_i32_119 = arith.constant 1 : i32
    %275 = tpu.dynamic_rotate %242 by %c1_i32_119 dim 1 : vector<64x128xf32>, i32 -> vector<64x128xf32>
    %cst_120 = arith.constant 0x7F800000 : f32
    %276 = vector.broadcast %cst_120 : f32 to vector<64x128xf32>
    %277 = arith.select %20, %275, %276 : vector<64x128xi1>, vector<64x128xf32>
    %278 = arith.minimumf %277, %242 : vector<64x128xf32>
    %c127_i32_121 = arith.constant 127 : i32
    %279 = tpu.dynamic_rotate %242 by %c127_i32_121 dim 1 : vector<64x128xf32>, i32 -> vector<64x128xf32>
    %cst_122 = arith.constant 0x7F800000 : f32
    %280 = vector.broadcast %cst_122 : f32 to vector<64x128xf32>
    %281 = arith.select %22, %279, %280 : vector<64x128xi1>, vector<64x128xf32>
    %282 = arith.minimumf %278, %281 : vector<64x128xf32>
    %283 = arith.minimumf %274, %282 : vector<64x128xf32>
    %c1_i32_123 = arith.constant 1 : i32
    %284 = tpu.dynamic_rotate %283 by %c1_i32_123 dim 0 : vector<64x128xf32>, i32 -> vector<64x128xf32>
    %cst_124 = arith.constant 0xFF800000 : f32
    %285 = vector.broadcast %cst_124 : f32 to vector<64x128xf32>
    %286 = arith.select %13, %284, %285 : vector<64x128xi1>, vector<64x128xf32>
    %287 = arith.maximumf %286, %283 : vector<64x128xf32>
    %c63_i32_125 = arith.constant 63 : i32
    %288 = tpu.dynamic_rotate %283 by %c63_i32_125 dim 0 : vector<64x128xf32>, i32 -> vector<64x128xf32>
    %cst_126 = arith.constant 0xFF800000 : f32
    %289 = vector.broadcast %cst_126 : f32 to vector<64x128xf32>
    %290 = arith.select %15, %288, %289 : vector<64x128xi1>, vector<64x128xf32>
    %291 = arith.maximumf %287, %290 : vector<64x128xf32>
    %c1_i32_127 = arith.constant 1 : i32
    %292 = tpu.dynamic_rotate %291 by %c1_i32_127 dim 1 : vector<64x128xf32>, i32 -> vector<64x128xf32>
    %cst_128 = arith.constant 0xFF800000 : f32
    %293 = vector.broadcast %cst_128 : f32 to vector<64x128xf32>
    %294 = arith.select %20, %292, %293 : vector<64x128xi1>, vector<64x128xf32>
    %295 = arith.maximumf %294, %291 : vector<64x128xf32>
    %c127_i32_129 = arith.constant 127 : i32
    %296 = tpu.dynamic_rotate %291 by %c127_i32_129 dim 1 : vector<64x128xf32>, i32 -> vector<64x128xf32>
    %cst_130 = arith.constant 0xFF800000 : f32
    %297 = vector.broadcast %cst_130 : f32 to vector<64x128xf32>
    %298 = arith.select %22, %296, %297 : vector<64x128xi1>, vector<64x128xf32>
    %299 = arith.maximumf %295, %298 : vector<64x128xf32>
    %300 = arith.subf %242, %299 : vector<64x128xf32>
    %cst_131 = arith.constant 0.000000e+00 : f32
    %301 = vector.broadcast %cst_131 : f32 to vector<64x128xf32>
    %302 = arith.maximumf %300, %301 : vector<64x128xf32>
    %303 = arith.mulf %266, %302 : vector<64x128xf32>
    %304 = arith.subf %302, %303 : vector<64x128xf32>
    %cst_132 = arith.constant 0.000000e+00 : f32
    %305 = vector.broadcast %cst_132 : f32 to vector<64x128xf32>
    %306 = arith.maximumf %304, %305 : vector<64x128xf32>
    %307 = arith.addf %266, %306 : vector<64x128xf32>
    %c1_i32_133 = arith.constant 1 : i32
    %308 = tpu.dynamic_rotate %283 by %c1_i32_133 dim 0 : vector<64x128xf32>, i32 -> vector<64x128xf32>
    %cst_134 = arith.constant 0x7F800000 : f32
    %309 = vector.broadcast %cst_134 : f32 to vector<64x128xf32>
    %310 = arith.select %13, %308, %309 : vector<64x128xi1>, vector<64x128xf32>
    %311 = arith.minimumf %310, %283 : vector<64x128xf32>
    %c63_i32_135 = arith.constant 63 : i32
    %312 = tpu.dynamic_rotate %283 by %c63_i32_135 dim 0 : vector<64x128xf32>, i32 -> vector<64x128xf32>
    %cst_136 = arith.constant 0x7F800000 : f32
    %313 = vector.broadcast %cst_136 : f32 to vector<64x128xf32>
    %314 = arith.select %15, %312, %313 : vector<64x128xi1>, vector<64x128xf32>
    %315 = arith.minimumf %311, %314 : vector<64x128xf32>
    %c1_i32_137 = arith.constant 1 : i32
    %316 = tpu.dynamic_rotate %283 by %c1_i32_137 dim 1 : vector<64x128xf32>, i32 -> vector<64x128xf32>
    %cst_138 = arith.constant 0x7F800000 : f32
    %317 = vector.broadcast %cst_138 : f32 to vector<64x128xf32>
    %318 = arith.select %20, %316, %317 : vector<64x128xi1>, vector<64x128xf32>
    %319 = arith.minimumf %318, %283 : vector<64x128xf32>
    %c127_i32_139 = arith.constant 127 : i32
    %320 = tpu.dynamic_rotate %283 by %c127_i32_139 dim 1 : vector<64x128xf32>, i32 -> vector<64x128xf32>
    %cst_140 = arith.constant 0x7F800000 : f32
    %321 = vector.broadcast %cst_140 : f32 to vector<64x128xf32>
    %322 = arith.select %22, %320, %321 : vector<64x128xi1>, vector<64x128xf32>
    %323 = arith.minimumf %319, %322 : vector<64x128xf32>
    %324 = arith.minimumf %315, %323 : vector<64x128xf32>
    %c1_i32_141 = arith.constant 1 : i32
    %325 = tpu.dynamic_rotate %324 by %c1_i32_141 dim 0 : vector<64x128xf32>, i32 -> vector<64x128xf32>
    %cst_142 = arith.constant 0xFF800000 : f32
    %326 = vector.broadcast %cst_142 : f32 to vector<64x128xf32>
    %327 = arith.select %13, %325, %326 : vector<64x128xi1>, vector<64x128xf32>
    %328 = arith.maximumf %327, %324 : vector<64x128xf32>
    %c63_i32_143 = arith.constant 63 : i32
    %329 = tpu.dynamic_rotate %324 by %c63_i32_143 dim 0 : vector<64x128xf32>, i32 -> vector<64x128xf32>
    %cst_144 = arith.constant 0xFF800000 : f32
    %330 = vector.broadcast %cst_144 : f32 to vector<64x128xf32>
    %331 = arith.select %15, %329, %330 : vector<64x128xi1>, vector<64x128xf32>
    %332 = arith.maximumf %328, %331 : vector<64x128xf32>
    %c1_i32_145 = arith.constant 1 : i32
    %333 = tpu.dynamic_rotate %332 by %c1_i32_145 dim 1 : vector<64x128xf32>, i32 -> vector<64x128xf32>
    %cst_146 = arith.constant 0xFF800000 : f32
    %334 = vector.broadcast %cst_146 : f32 to vector<64x128xf32>
    %335 = arith.select %20, %333, %334 : vector<64x128xi1>, vector<64x128xf32>
    %336 = arith.maximumf %335, %332 : vector<64x128xf32>
    %c127_i32_147 = arith.constant 127 : i32
    %337 = tpu.dynamic_rotate %332 by %c127_i32_147 dim 1 : vector<64x128xf32>, i32 -> vector<64x128xf32>
    %cst_148 = arith.constant 0xFF800000 : f32
    %338 = vector.broadcast %cst_148 : f32 to vector<64x128xf32>
    %339 = arith.select %22, %337, %338 : vector<64x128xi1>, vector<64x128xf32>
    %340 = arith.maximumf %336, %339 : vector<64x128xf32>
    %341 = arith.subf %283, %340 : vector<64x128xf32>
    %cst_149 = arith.constant 0.000000e+00 : f32
    %342 = vector.broadcast %cst_149 : f32 to vector<64x128xf32>
    %343 = arith.maximumf %341, %342 : vector<64x128xf32>
    %344 = arith.mulf %307, %343 : vector<64x128xf32>
    %345 = arith.subf %343, %344 : vector<64x128xf32>
    %cst_150 = arith.constant 0.000000e+00 : f32
    %346 = vector.broadcast %cst_150 : f32 to vector<64x128xf32>
    %347 = arith.maximumf %345, %346 : vector<64x128xf32>
    %348 = arith.addf %307, %347 : vector<64x128xf32>
    %349 = arith.mulf %27, %30 : vector<64x128xf32>
    %cst_151 = arith.constant dense<0.000000e+00> : vector<8x128xf32>
    %350 = tpu.matmul %23, %349, %cst_151 {dimension_numbers = #tpu.dot_dimension_numbers<[1], [0], [0], [1], [0, 0, 1, 1], [], []>} : vector<8x64xf32>, vector<64x128xf32>, vector<8x128xf32> -> vector<8x128xf32>
    %351 = vector.extract_strided_slice %350 {offsets = [0, 0], sizes = [1, 128], strides = [1, 1]} : vector<8x128xf32> to vector<1x128xf32>
    %cst_152 = arith.constant dense<0.000000e+00> : vector<8x128xf32>
    %352 = tpu.matmul %23, %27, %cst_152 {dimension_numbers = #tpu.dot_dimension_numbers<[1], [0], [0], [1], [0, 0, 1, 1], [], []>} : vector<8x64xf32>, vector<64x128xf32>, vector<8x128xf32> -> vector<8x128xf32>
    %353 = vector.extract_strided_slice %352 {offsets = [0, 0], sizes = [1, 128], strides = [1, 1]} : vector<8x128xf32> to vector<1x128xf32>
    %cst_153 = arith.constant dense<0.000000e+00> : vector<8x128xf32>
    %354 = tpu.matmul %23, %30, %cst_153 {dimension_numbers = #tpu.dot_dimension_numbers<[1], [0], [0], [1], [0, 0, 1, 1], [], []>} : vector<8x64xf32>, vector<64x128xf32>, vector<8x128xf32> -> vector<8x128xf32>
    %355 = vector.extract_strided_slice %354 {offsets = [0, 0], sizes = [1, 128], strides = [1, 1]} : vector<8x128xf32> to vector<1x128xf32>
    %356 = arith.mulf %189, %27 : vector<64x128xf32>
    %cst_154 = arith.constant dense<0.000000e+00> : vector<8x128xf32>
    %357 = tpu.matmul %23, %356, %cst_154 {dimension_numbers = #tpu.dot_dimension_numbers<[1], [0], [0], [1], [0, 0, 1, 1], [], []>} : vector<8x64xf32>, vector<64x128xf32>, vector<8x128xf32> -> vector<8x128xf32>
    %358 = vector.extract_strided_slice %357 {offsets = [0, 0], sizes = [1, 128], strides = [1, 1]} : vector<8x128xf32> to vector<1x128xf32>
    %cst_155 = arith.constant dense<0.000000e+00> : vector<8x128xf32>
    %359 = tpu.matmul %23, %189, %cst_155 {dimension_numbers = #tpu.dot_dimension_numbers<[1], [0], [0], [1], [0, 0, 1, 1], [], []>} : vector<8x64xf32>, vector<64x128xf32>, vector<8x128xf32> -> vector<8x128xf32>
    %360 = vector.extract_strided_slice %359 {offsets = [0, 0], sizes = [1, 128], strides = [1, 1]} : vector<8x128xf32> to vector<1x128xf32>
    %361 = arith.mulf %348, %30 : vector<64x128xf32>
    %cst_156 = arith.constant dense<0.000000e+00> : vector<8x128xf32>
    %362 = tpu.matmul %23, %361, %cst_156 {dimension_numbers = #tpu.dot_dimension_numbers<[1], [0], [0], [1], [0, 0, 1, 1], [], []>} : vector<8x64xf32>, vector<64x128xf32>, vector<8x128xf32> -> vector<8x128xf32>
    %363 = vector.extract_strided_slice %362 {offsets = [0, 0], sizes = [1, 128], strides = [1, 1]} : vector<8x128xf32> to vector<1x128xf32>
    %cst_157 = arith.constant dense<0.000000e+00> : vector<8x128xf32>
    %364 = tpu.matmul %23, %348, %cst_157 {dimension_numbers = #tpu.dot_dimension_numbers<[1], [0], [0], [1], [0, 0, 1, 1], [], []>} : vector<8x64xf32>, vector<64x128xf32>, vector<8x128xf32> -> vector<8x128xf32>
    %365 = vector.extract_strided_slice %364 {offsets = [0, 0], sizes = [1, 128], strides = [1, 1]} : vector<8x128xf32> to vector<1x128xf32>
    %cst_158 = arith.constant 0.000000e+00 : f32
    %366 = vector.broadcast %cst_158 : f32 to vector<1x128xf32>
    %367 = tpu.concatenate %351, %353, %355, %358, %360, %363, %365, %366 in 0 : vector<1x128xf32>, vector<1x128xf32>, vector<1x128xf32>, vector<1x128xf32>, vector<1x128xf32>, vector<1x128xf32>, vector<1x128xf32>, vector<1x128xf32> -> vector<8x128xf32>
    %368 = arith.addf %24, %367 : vector<8x128xf32>
    %c1_i32_159 = arith.constant 1 : i32
    %c0_160 = arith.constant 0 : index
    %c0_161 = arith.constant 0 : index
    %c0_162 = arith.constant 0 : index
    %369 = vector.load %arg4[%c0_160, %c0_161, %c0_162] : memref<1x8x128xf32, #tpu.memory_space<vmem>>, vector<1x8x128xf32>
    %370 = vector.shape_cast %368 : vector<8x128xf32> to vector<1x8x128xf32>
    %371 = arith.addf %369, %370 : vector<1x8x128xf32>
    %c0_163 = arith.constant 0 : index
    %c0_164 = arith.constant 0 : index
    %c0_165 = arith.constant 0 : index
    %372 = vector.load %arg4[%c0_163, %c0_164, %c0_165] : memref<1x8x128xf32, #tpu.memory_space<vmem>>, vector<1x8x128xf32>
    tpu.vector_store %arg4[%c0_163, %c0_164, %c0_165], %371 {strides = array<i32>} : memref<1x8x128xf32, #tpu.memory_space<vmem>>, vector<1x8x128xf32>,
    return
  }
  func.func @transform_0(%arg0: i32, %arg1: i32) -> (i32, i32, i32) {
    %c1_i32 = arith.constant 1 : i32
    %0 = arith.muli %arg0, %c1_i32 : i32
    %1 = arith.addi %0, %arg1 : i32
    %c0_i32 = arith.constant 0 : i32
    %c0_i32_0 = arith.constant 0 : i32
    %c0_i32_1 = arith.constant 0 : i32
    return %1, %c0_i32, %c0_i32_0 : i32, i32, i32
  }
  func.func @transform_1(%arg0: i32, %arg1: i32) -> (i32, i32, i32) {
    %c1_i32 = arith.constant 1 : i32
    %0 = arith.muli %arg0, %c1_i32 : i32
    %1 = arith.addi %0, %arg1 : i32
    %c0_i32 = arith.constant 0 : i32
    %c0_i32_0 = arith.constant 0 : i32
    %c0_i32_1 = arith.constant 0 : i32
    return %1, %c0_i32, %c0_i32_0 : i32, i32, i32
  }
  func.func @transform_2(%arg0: i32, %arg1: i32) -> (i32, i32, i32) {
    %c0_i32 = arith.constant 0 : i32
    %c0_i32_0 = arith.constant 0 : i32
    %c0_i32_1 = arith.constant 0 : i32
    return %arg0, %c0_i32, %c0_i32_0 : i32, i32, i32
  }
}

</mosaic_0001>

<llo_original>
// kernel: tpu_custom_call.1
$region0: #{tpu_custom_call.1}
  #allocation0 [shape = 'u32[]', space=smem, size = 0x4, offset = 0x4, fixed_abs, tag = 'smem constant byte address 0x4 - core index']
  #allocation1 [shape = 'u32[144,128]{1,0:T(1,128)}', space=vmem, size = 0x12000, scoped, tag = 'internal scratch']
  %s0 = inlined_call_operand.hbm [shape: f32[1,64,128], index: 0, kind: input, shape index: {}]
  %s1 = inlined_call_operand.hbm [shape: f32[1,64,128], index: 1, kind: input, shape index: {}]
  %s2 = inlined_call_operand.hbm [shape: f32[1,8,128], index: 2, kind: output, shape index: {}]
  %s3 = sld [smem:[#allocation0]]
  $region30: #{tpu_custom_call.1} parent=0
    _
  %s5 = ssub.s32 1, %s3
  %s6 = scalar_select 0, %s5, %s3
  $region1: #{tpu_custom_call.1} parent=0
    #allocation2 [shape = 'u8[32768]{0}', space=vmem, size = 0x8000, scoped, tag = 'input window, operand 0, single buffered']
    #allocation3 [shape = 's32[1]{0}', space=sflag, size = 0x4, scoped, tag = 'scoped memory for tpu_custom_call.1']
    #allocation4 [shape = 's32[1]{0}', space=sflag, size = 0x4, scoped, tag = 'scoped memory for tpu_custom_call.1']
    #allocation5 [shape = 'u8[32768]{0}', space=vmem, size = 0x8000, scoped, tag = 'input window, operand 1, single buffered']
    #allocation6 [shape = 's32[1]{0}', space=sflag, size = 0x4, scoped, tag = 'scoped memory for tpu_custom_call.1']
    #allocation7 [shape = 'u8[4096]{0}', space=vmem, size = 0x1000, scoped, tag = 'output window, operand 0, single buffered']
    %7 = vsyncpa [#allocation3], 0
    %8 = vsyncpa [#allocation6], 0
    %9 = vsyncpa [#allocation4], 0
    // Predicated region
    $region2: #{tpu_custom_call.1} parent=1 // pred_check
      _
    $region3: #{tpu_custom_call.1} parent=1 // pred_check_branch
      %11 = sbr.rel (0) target = $region5
    $region4: #{tpu_custom_call.1} parent=1 // pred_region
      %s12 = sadd.s32 0, 0
      %s14 = ssub.s32 1024, 1024
      %15 = vsyncadd [#allocation3], %s14
      %s16 = smul.addr %s12, 8
      %s17 = smul.addr %s16, 128
      %s18 = scalar_lea.hbm %s0, %s17
      %s19 = sshll.u32 [#allocation2], 4
      %s20 = int_to_ptr.vmem [resolvable:$true] %s19
      %25 = dma.hbm_to_vmem [thread:$0]  %s18, 1024, %s20, [#allocation3], 128, 128, 8
    $region5: #{tpu_custom_call.1} parent=1 // pred_fallthru
      _
    // Predicated region
    $region6: #{tpu_custom_call.1} parent=1 // pred_check
      _
    $region7: #{tpu_custom_call.1} parent=1 // pred_check_branch
      %27 = sbr.rel (0) target = $region9
    $region8: #{tpu_custom_call.1} parent=1 // pred_region
      %s28 = sadd.s32 0, 0
      %s30 = ssub.s32 1024, 1024
      %31 = vsyncadd [#allocation6], %s30
      %s32 = smul.addr %s28, 8
      %s33 = smul.addr %s32, 128
      %s34 = scalar_lea.hbm %s1, %s33
      %s35 = sshll.u32 [#allocation5], 4
      %s36 = int_to_ptr.vmem [resolvable:$true] %s35
      %41 = dma.hbm_to_vmem [thread:$0]  %s34, 1024, %s36, [#allocation6], 128, 128, 8
    $region9: #{tpu_custom_call.1} parent=1 // pred_fallthru
      _
    // Predicated region
    $region10: #{tpu_custom_call.1} parent=1 // pred_check
      _
    $region11: #{tpu_custom_call.1} parent=1 // pred_check_branch
      %43 = sbr.rel (0) target = $region13
    $region12: #{tpu_custom_call.1} parent=1 // pred_region
      %44 = dma.done [#allocation3], 1024
    $region13: #{tpu_custom_call.1} parent=1 // pred_fallthru
      _
    // Predicated region
    $region14: #{tpu_custom_call.1} parent=1 // pred_check
      _
    $region15: #{tpu_custom_call.1} parent=1 // pred_check_branch
      %46 = sbr.rel (0) target = $region17
    $region16: #{tpu_custom_call.1} parent=1 // pred_region
      %47 = dma.done [#allocation6], 1024
    $region17: #{tpu_custom_call.1} parent=1 // pred_fallthru
      _
    %s48 = sadd.s32 0, 0
    %s49 = sadd.s32 0, 0
    %p50 = scmp.eq.s32.totalorder 0, 0
    // Predicated region
    $region18: #{tpu_custom_call.1} parent=1 // pred_check
      %p51 = pneg %p50
    $region19: #{tpu_custom_call.1} parent=1 // pred_check_branch
      %53 = sbr.rel (%p51) target = $region21
    $region20: #{tpu_custom_call.1} parent=1 // pred_region
      %54 = vst [vmem:[#allocation7] sm:$0xff] 0.0
    $region21: #{tpu_custom_call.1} parent=1 // pred_fallthru
      _
    %v55 = vlaneseq
    %v56 = vshrl.u32 %v55, 7
    %v57 = vadd.s32 %v56, 8
    %v58 = vadd.s32 %v56, 16
    %v59 = vadd.s32 %v56, 24
    %v60 = vadd.s32 %v56, 32
    %v61 = vadd.s32 %v56, 40
    %v62 = vadd.s32 %v56, 48
    %v63 = vadd.s32 %v56, 56
    %v64 = vlaneseq
    %v65 = vand.u32 %v64, 127
    %v66 = vand.u32 %v56, 15
    %v67 = vand.u32 %v57, 15
    %v68 = vand.u32 %v58, 15
    %v69 = vand.u32 %v59, 15
    %v70 = vand.u32 %v60, 15
    %v71 = vand.u32 %v61, 15
    %v72 = vand.u32 %v62, 15
    %v73 = vand.u32 %v63, 15
    %v74 = vand.u32 %v65, 15
    %vm75 = vcmp.ge.s32.totalorder %v66, 1
    %vm76 = vcmp.ge.s32.totalorder %v67, 1
    %vm77 = vcmp.ge.s32.totalorder %v68, 1
    %vm78 = vcmp.ge.s32.totalorder %v69, 1
    %vm79 = vcmp.ge.s32.totalorder %v70, 1
    %vm80 = vcmp.ge.s32.totalorder %v71, 1
    %vm81 = vcmp.ge.s32.totalorder %v72, 1
    %vm82 = vcmp.ge.s32.totalorder %v73, 1
    %vm83 = vcmp.lt.s32.totalorder %v66, 16
    %vm84 = vcmp.lt.s32.totalorder %v67, 16
    %vm85 = vcmp.lt.s32.totalorder %v68, 16
    %vm86 = vcmp.lt.s32.totalorder %v69, 16
    %vm87 = vcmp.lt.s32.totalorder %v70, 16
    %vm88 = vcmp.lt.s32.totalorder %v71, 16
    %vm89 = vcmp.lt.s32.totalorder %v72, 16
    %vm90 = vcmp.lt.s32.totalorder %v73, 16
    %vm91 = vmand %vm75, %vm83
    %vm92 = vmand %vm76, %vm84
    %vm93 = vmand %vm77, %vm85
    %vm94 = vmand %vm78, %vm86
    %vm95 = vmand %vm79, %vm87
    %vm96 = vmand %vm80, %vm88
    %vm97 = vmand %vm81, %vm89
    %vm98 = vmand %vm82, %vm90
    %vm99 = vcmp.lt.s32.totalorder %v66, 15
    %vm100 = vcmp.lt.s32.totalorder %v67, 15
    %vm101 = vcmp.lt.s32.totalorder %v68, 15
    %vm102 = vcmp.lt.s32.totalorder %v69, 15
    %vm103 = vcmp.lt.s32.totalorder %v70, 15
    %vm104 = vcmp.lt.s32.totalorder %v71, 15
    %vm105 = vcmp.lt.s32.totalorder %v72, 15
    %vm106 = vcmp.lt.s32.totalorder %v73, 15
    %vm107 = vcmp.ge.s32.totalorder %v74, 1
    %vm108 = vcmp.lt.s32.totalorder %v74, 16
    %vm109 = vmand %vm107, %vm108
    %vm110 = vcmp.lt.s32.totalorder %v74, 15
    %v111 = vld [vmem:[#allocation2] sm:$0xff]
    %v112 = vld [vmem:[#allocation2 + $0x8] sm:$0xff]
    %v113 = vld [vmem:[#allocation2 + $0x10] sm:$0xff]
    %v114 = vld [vmem:[#allocation2 + $0x18] sm:$0xff]
    %v115 = vld [vmem:[#allocation2 + $0x20] sm:$0xff]
    %v116 = vld [vmem:[#allocation2 + $0x28] sm:$0xff]
    %v117 = vld [vmem:[#allocation2 + $0x30] sm:$0xff]
    %v118 = vld [vmem:[#allocation2 + $0x38] sm:$0xff]
    %v119 = vld [vmem:[#allocation5] sm:$0xff]
    %v120 = vld [vmem:[#allocation5 + $0x8] sm:$0xff]
    %v121 = vld [vmem:[#allocation5 + $0x10] sm:$0xff]
    %v122 = vld [vmem:[#allocation5 + $0x18] sm:$0xff]
    %v123 = vld [vmem:[#allocation5 + $0x20] sm:$0xff]
    %v124 = vld [vmem:[#allocation5 + $0x28] sm:$0xff]
    %v125 = vld [vmem:[#allocation5 + $0x30] sm:$0xff]
    %v126 = vld [vmem:[#allocation5 + $0x38] sm:$0xff]
    %v127 = vrot.slane %v119, 7
    %v128 = vrot.slane %v120, 7
    %v129 = vrot.slane %v121, 7
    %v130 = vrot.slane %v122, 7
    %v131 = vrot.slane %v123, 7
    %v132 = vrot.slane %v124, 7
    %v133 = vrot.slane %v125, 7
    %v134 = vrot.slane %v126, 7
    %vm135 = vcmp.lt.s32.totalorder %v56, 1
    %v136 = vsel %vm135, %v133, %v134
    %v137 = vsel %vm135, %v132, %v133
    %v138 = vsel %vm135, %v131, %v132
    %v139 = vsel %vm135, %v130, %v131
    %v140 = vsel %vm135, %v129, %v130
    %v141 = vsel %vm135, %v128, %v129
    %v142 = vsel %vm135, %v127, %v128
    %v143 = vsel %vm135, %v134, %v127
    %v144 = vsel %vm91, %v143, inf
    %v145 = vsel %vm92, %v142, inf
    %v146 = vsel %vm93, %v141, inf
    %v147 = vsel %vm94, %v140, inf
    %v148 = vsel %vm95, %v139, inf
    %v149 = vsel %vm96, %v138, inf
    %v150 = vsel %vm97, %v137, inf
    %v151 = vsel %vm98, %v136, inf
    %v152 = vmin.f32 %v144, %v119
    %v153 = vmin.f32 %v145, %v120
    %v154 = vmin.f32 %v146, %v121
    %v155 = vmin.f32 %v147, %v122
    %v156 = vmin.f32 %v148, %v123
    %v157 = vmin.f32 %v149, %v124
    %v158 = vmin.f32 %v150, %v125
    %v159 = vmin.f32 %v151, %v126
    %v160 = vrot.slane %v119, 1
    %v161 = vrot.slane %v120, 1
    %v162 = vrot.slane %v121, 1
    %v163 = vrot.slane %v122, 1
    %v164 = vrot.slane %v123, 1
    %v165 = vrot.slane %v124, 1
    %v166 = vrot.slane %v125, 1
    %v167 = vrot.slane %v126, 1
    %vm168 = vcmp.lt.s32.totalorder %v56, 7
    %v169 = vsel %vm168, %v166, %v167
    %v170 = vsel %vm168, %v165, %v166
    %v171 = vsel %vm168, %v164, %v165
    %v172 = vsel %vm168, %v163, %v164
    %v173 = vsel %vm168, %v162, %v163
    %v174 = vsel %vm168, %v161, %v162
    %v175 = vsel %vm168, %v160, %v161
    %v176 = vsel %vm168, %v167, %v160
    %v177 = vsel %vm99, %v175, inf
    %v178 = vsel %vm100, %v174, inf
    %v179 = vsel %vm101, %v173, inf
    %v180 = vsel %vm102, %v172, inf
    %v181 = vsel %vm103, %v171, inf
    %v182 = vsel %vm104, %v170, inf
    %v183 = vsel %vm105, %v169, inf
    %v184 = vsel %vm106, %v176, inf
    %v185 = vmin.f32 %v152, %v177
    %v186 = vmin.f32 %v153, %v178
    %v187 = vmin.f32 %v154, %v179
    %v188 = vmin.f32 %v155, %v180
    %v189 = vmin.f32 %v156, %v181
    %v190 = vmin.f32 %v157, %v182
    %v191 = vmin.f32 %v158, %v183
    %v192 = vmin.f32 %v159, %v184
    %193 = vrot.lane.b32.xlu0 %v119, 1
    %v194 = vpop.permute.xlu0 %193
    %195 = vrot.lane.b32.xlu0 %v120, 1
    %v196 = vpop.permute.xlu0 %195
    %197 = vrot.lane.b32.xlu0 %v121, 1
    %v198 = vpop.permute.xlu0 %197
    %199 = vrot.lane.b32.xlu0 %v122, 1
    %v200 = vpop.permute.xlu0 %199
    %201 = vrot.lane.b32.xlu0 %v123, 1
    %v202 = vpop.permute.xlu0 %201
    %203 = vrot.lane.b32.xlu0 %v124, 1
    %v204 = vpop.permute.xlu0 %203
    %205 = vrot.lane.b32.xlu0 %v125, 1
    %v206 = vpop.permute.xlu0 %205
    %207 = vrot.lane.b32.xlu0 %v126, 1
    %v208 = vpop.permute.xlu0 %207
    %v209 = vsel %vm109, %v194, inf
    %v210 = vsel %vm109, %v196, inf
    %v211 = vsel %vm109, %v198, inf
    %v212 = vsel %vm109, %v200, inf
    %v213 = vsel %vm109, %v202, inf
    %v214 = vsel %vm109, %v204, inf
    %v215 = vsel %vm109, %v206, inf
    %v216 = vsel %vm109, %v208, inf
    %v217 = vmin.f32 %v209, %v119
    %v218 = vmin.f32 %v210, %v120
    %v219 = vmin.f32 %v211, %v121
    %v220 = vmin.f32 %v212, %v122
    %v221 = vmin.f32 %v213, %v123
    %v222 = vmin.f32 %v214, %v124
    %v223 = vmin.f32 %v215, %v125
    %v224 = vmin.f32 %v216, %v126
    %225 = vrot.lane.b32.xlu0 %v119, 127
    %v226 = vpop.permute.xlu0 %225
    %227 = vrot.lane.b32.xlu0 %v120, 127
    %v228 = vpop.permute.xlu0 %227
    %229 = vrot.lane.b32.xlu0 %v121, 127
    %v230 = vpop.permute.xlu0 %229
    %231 = vrot.lane.b32.xlu0 %v122, 127
    %v232 = vpop.permute.xlu0 %231
    %233 = vrot.lane.b32.xlu0 %v123, 127
    %v234 = vpop.permute.xlu0 %233
    %235 = vrot.lane.b32.xlu0 %v124, 127
    %v236 = vpop.permute.xlu0 %235
    %237 = vrot.lane.b32.xlu0 %v125, 127
    %v238 = vpop.permute.xlu0 %237
    %239 = vrot.lane.b32.xlu0 %v126, 127
    %v240 = vpop.permute.xlu0 %239
    %v241 = vsel %vm110, %v226, inf
    %v242 = vsel %vm110, %v228, inf
    %v243 = vsel %vm110, %v230, inf
    %v244 = vsel %vm110, %v232, inf
    %v245 = vsel %vm110, %v234, inf
    %v246 = vsel %vm110, %v236, inf
    %v247 = vsel %vm110, %v238, inf
    %v248 = vsel %vm110, %v240, inf
    %v249 = vmin.f32 %v217, %v241
    %v250 = vmin.f32 %v218, %v242
    %v251 = vmin.f32 %v219, %v243
    %v252 = vmin.f32 %v220, %v244
    %v253 = vmin.f32 %v221, %v245
    %v254 = vmin.f32 %v222, %v246
    %v255 = vmin.f32 %v223, %v247
    %v256 = vmin.f32 %v224, %v248
    %v257 = vmin.f32 %v185, %v249
    %v258 = vmin.f32 %v186, %v250
    %v259 = vmin.f32 %v187, %v251
    %v260 = vmin.f32 %v188, %v252
    %v261 = vmin.f32 %v189, %v253
    %v262 = vmin.f32 %v190, %v254
    %v263 = vmin.f32 %v191, %v255
    %v264 = vmin.f32 %v192, %v256
    %v265 = vrot.slane %v257, 7
    %v266 = vrot.slane %v258, 7
    %v267 = vrot.slane %v259, 7
    %v268 = vrot.slane %v260, 7
    %v269 = vrot.slane %v261, 7
    %v270 = vrot.slane %v262, 7
    %v271 = vrot.slane %v263, 7
    %v272 = vrot.slane %v264, 7
    %v273 = vsel %vm135, %v271, %v272
    %v274 = vsel %vm135, %v270, %v271
    %v275 = vsel %vm135, %v269, %v270
    %v276 = vsel %vm135, %v268, %v269
    %v277 = vsel %vm135, %v267, %v268
    %v278 = vsel %vm135, %v266, %v267
    %v279 = vsel %vm135, %v265, %v266
    %v280 = vsel %vm135, %v272, %v265
    %v281 = vsel %vm91, %v280, -inf
    %v282 = vsel %vm92, %v279, -inf
    %v283 = vsel %vm93, %v278, -inf
    %v284 = vsel %vm94, %v277, -inf
    %v285 = vsel %vm95, %v276, -inf
    %v286 = vsel %vm96, %v275, -inf
    %v287 = vsel %vm97, %v274, -inf
    %v288 = vsel %vm98, %v273, -inf
    %v289 = vmax.f32 %v281, %v257
    %v290 = vmax.f32 %v282, %v258
    %v291 = vmax.f32 %v283, %v259
    %v292 = vmax.f32 %v284, %v260
    %v293 = vmax.f32 %v285, %v261
    %v294 = vmax.f32 %v286, %v262
    %v295 = vmax.f32 %v287, %v263
    %v296 = vmax.f32 %v288, %v264
    %v297 = vrot.slane %v257, 1
    %v298 = vrot.slane %v258, 1
    %v299 = vrot.slane %v259, 1
    %v300 = vrot.slane %v260, 1
    %v301 = vrot.slane %v261, 1
    %v302 = vrot.slane %v262, 1
    %v303 = vrot.slane %v263, 1
    %v304 = vrot.slane %v264, 1
    %v305 = vsel %vm168, %v303, %v304
    %v306 = vsel %vm168, %v302, %v303
    %v307 = vsel %vm168, %v301, %v302
    %v308 = vsel %vm168, %v300, %v301
    %v309 = vsel %vm168, %v299, %v300
    %v310 = vsel %vm168, %v298, %v299
    %v311 = vsel %vm168, %v297, %v298
    %v312 = vsel %vm168, %v304, %v297
    %v313 = vsel %vm99, %v311, -inf
    %v314 = vsel %vm100, %v310, -inf
    %v315 = vsel %vm101, %v309, -inf
    %v316 = vsel %vm102, %v308, -inf
    %v317 = vsel %vm103, %v307, -inf
    %v318 = vsel %vm104, %v306, -inf
    %v319 = vsel %vm105, %v305, -inf
    %v320 = vsel %vm106, %v312, -inf
    %v321 = vmax.f32 %v289, %v313
    %v322 = vmax.f32 %v290, %v314
    %v323 = vmax.f32 %v291, %v315
    %v324 = vmax.f32 %v292, %v316
    %v325 = vmax.f32 %v293, %v317
    %v326 = vmax.f32 %v294, %v318
    %v327 = vmax.f32 %v295, %v319
    %v328 = vmax.f32 %v296, %v320
    %329 = vrot.lane.b32.xlu0 %v321, 1
    %v330 = vpop.permute.xlu0 %329
    %331 = vrot.lane.b32.xlu0 %v322, 1
    %v332 = vpop.permute.xlu0 %331
    %333 = vrot.lane.b32.xlu0 %v323, 1
    %v334 = vpop.permute.xlu0 %333
    %335 = vrot.lane.b32.xlu0 %v324, 1
    %v336 = vpop.permute.xlu0 %335
    %337 = vrot.lane.b32.xlu0 %v325, 1
    %v338 = vpop.permute.xlu0 %337
    %339 = vrot.lane.b32.xlu0 %v326, 1
    %v340 = vpop.permute.xlu0 %339
    %341 = vrot.lane.b32.xlu0 %v327, 1
    %v342 = vpop.permute.xlu0 %341
    %343 = vrot.lane.b32.xlu0 %v328, 1
    %v344 = vpop.permute.xlu0 %343
    %v345 = vsel %vm109, %v330, -inf
    %v346 = vsel %vm109, %v332, -inf
    %v347 = vsel %vm109, %v334, -inf
    %v348 = vsel %vm109, %v336, -inf
    %v349 = vsel %vm109, %v338, -inf
    %v350 = vsel %vm109, %v340, -inf
    %v351 = vsel %vm109, %v342, -inf
    %v352 = vsel %vm109, %v344, -inf
    %v353 = vmax.f32 %v345, %v321
    %v354 = vmax.f32 %v346, %v322
    %v355 = vmax.f32 %v347, %v323
    %v356 = vmax.f32 %v348, %v324
    %v357 = vmax.f32 %v349, %v325
    %v358 = vmax.f32 %v350, %v326
    %v359 = vmax.f32 %v351, %v327
    %v360 = vmax.f32 %v352, %v328
    %361 = vrot.lane.b32.xlu0 %v321, 127
    %v362 = vpop.permute.xlu0 %361
    %363 = vrot.lane.b32.xlu0 %v322, 127
    %v364 = vpop.permute.xlu0 %363
    %365 = vrot.lane.b32.xlu0 %v323, 127
    %v366 = vpop.permute.xlu0 %365
    %367 = vrot.lane.b32.xlu0 %v324, 127
    %v368 = vpop.permute.xlu0 %367
    %369 = vrot.lane.b32.xlu0 %v325, 127
    %v370 = vpop.permute.xlu0 %369
    %371 = vrot.lane.b32.xlu0 %v326, 127
    %v372 = vpop.permute.xlu0 %371
    %373 = vrot.lane.b32.xlu0 %v327, 127
    %v374 = vpop.permute.xlu0 %373
    %375 = vrot.lane.b32.xlu0 %v328, 127
    %v376 = vpop.permute.xlu0 %375
    %v377 = vsel %vm110, %v362, -inf
    %v378 = vsel %vm110, %v364, -inf
    %v379 = vsel %vm110, %v366, -inf
    %v380 = vsel %vm110, %v368, -inf
    %v381 = vsel %vm110, %v370, -inf
    %v382 = vsel %vm110, %v372, -inf
    %v383 = vsel %vm110, %v374, -inf
    %v384 = vsel %vm110, %v376, -inf
    %v385 = vmax.f32 %v353, %v377
    %v386 = vmax.f32 %v354, %v378
    %v387 = vmax.f32 %v355, %v379
    %v388 = vmax.f32 %v356, %v380
    %v389 = vmax.f32 %v357, %v381
    %v390 = vmax.f32 %v358, %v382
    %v391 = vmax.f32 %v359, %v383
    %v392 = vmax.f32 %v360, %v384
    %v393 = vsub.f32 %v119, %v385
    %v394 = vsub.f32 %v120, %v386
    %v395 = vsub.f32 %v121, %v387
    %v396 = vsub.f32 %v122, %v388
    %v397 = vsub.f32 %v123, %v389
    %v398 = vsub.f32 %v124, %v390
    %v399 = vsub.f32 %v125, %v391
    %v400 = vsub.f32 %v126, %v392
    %v401 = vmax.f32 %v393, 0.0
    %v402 = vmax.f32 %v394, 0.0
    %v403 = vmax.f32 %v395, 0.0
    %v404 = vmax.f32 %v396, 0.0
    %v405 = vmax.f32 %v397, 0.0
    %v406 = vmax.f32 %v398, 0.0
    %v407 = vmax.f32 %v399, 0.0
    %v408 = vmax.f32 %v400, 0.0
    %v409 = vsel %vm91, %v280, inf
    %v410 = vsel %vm92, %v279, inf
    %v411 = vsel %vm93, %v278, inf
    %v412 = vsel %vm94, %v277, inf
    %v413 = vsel %vm95, %v276, inf
    %v414 = vsel %vm96, %v275, inf
    %v415 = vsel %vm97, %v274, inf
    %v416 = vsel %vm98, %v273, inf
    %v417 = vmin.f32 %v409, %v257
    %v418 = vmin.f32 %v410, %v258
    %v419 = vmin.f32 %v411, %v259
    %v420 = vmin.f32 %v412, %v260
    %v421 = vmin.f32 %v413, %v261
    %v422 = vmin.f32 %v414, %v262
    %v423 = vmin.f32 %v415, %v263
    %v424 = vmin.f32 %v416, %v264
    %v425 = vsel %vm99, %v311, inf
    %v426 = vsel %vm100, %v310, inf
    %v427 = vsel %vm101, %v309, inf
    %v428 = vsel %vm102, %v308, inf
    %v429 = vsel %vm103, %v307, inf
    %v430 = vsel %vm104, %v306, inf
    %v431 = vsel %vm105, %v305, inf
    %v432 = vsel %vm106, %v312, inf
    %v433 = vmin.f32 %v417, %v425
    %v434 = vmin.f32 %v418, %v426
    %v435 = vmin.f32 %v419, %v427
    %v436 = vmin.f32 %v420, %v428
    %v437 = vmin.f32 %v421, %v429
    %v438 = vmin.f32 %v422, %v430
    %v439 = vmin.f32 %v423, %v431
    %v440 = vmin.f32 %v424, %v432
    %441 = vrot.lane.b32.xlu0 %v257, 1
    %v442 = vpop.permute.xlu0 %441
    %443 = vrot.lane.b32.xlu0 %v258, 1
    %v444 = vpop.permute.xlu0 %443
    %445 = vrot.lane.b32.xlu0 %v259, 1
    %v446 = vpop.permute.xlu0 %445
    %447 = vrot.lane.b32.xlu0 %v260, 1
    %v448 = vpop.permute.xlu0 %447
    %449 = vrot.lane.b32.xlu0 %v261, 1
    %v450 = vpop.permute.xlu0 %449
    %451 = vrot.lane.b32.xlu0 %v262, 1
    %v452 = vpop.permute.xlu0 %451
    %453 = vrot.lane.b32.xlu0 %v263, 1
    %v454 = vpop.permute.xlu0 %453
    %455 = vrot.lane.b32.xlu0 %v264, 1
    %v456 = vpop.permute.xlu0 %455
    %v457 = vsel %vm109, %v442, inf
    %v458 = vsel %vm109, %v444, inf
    %v459 = vsel %vm109, %v446, inf
    %v460 = vsel %vm109, %v448, inf
    %v461 = vsel %vm109, %v450, inf
    %v462 = vsel %vm109, %v452, inf
    %v463 = vsel %vm109, %v454, inf
    %v464 = vsel %vm109, %v456, inf
    %v465 = vmin.f32 %v457, %v257
    %v466 = vmin.f32 %v458, %v258
    %v467 = vmin.f32 %v459, %v259
    %v468 = vmin.f32 %v460, %v260
    %v469 = vmin.f32 %v461, %v261
    %v470 = vmin.f32 %v462, %v262
    %v471 = vmin.f32 %v463, %v263
    %v472 = vmin.f32 %v464, %v264
    %473 = vrot.lane.b32.xlu0 %v257, 127
    %v474 = vpop.permute.xlu0 %473
    %475 = vrot.lane.b32.xlu0 %v258, 127
    %v476 = vpop.permute.xlu0 %475
    %477 = vrot.lane.b32.xlu0 %v259, 127
    %v478 = vpop.permute.xlu0 %477
    %479 = vrot.lane.b32.xlu0 %v260, 127
    %v480 = vpop.permute.xlu0 %479
    %481 = vrot.lane.b32.xlu0 %v261, 127
    %v482 = vpop.permute.xlu0 %481
    %483 = vrot.lane.b32.xlu0 %v262, 127
    %v484 = vpop.permute.xlu0 %483
    %485 = vrot.lane.b32.xlu0 %v263, 127
    %v486 = vpop.permute.xlu0 %485
    %487 = vrot.lane.b32.xlu0 %v264, 127
    %v488 = vpop.permute.xlu0 %487
    %v489 = vsel %vm110, %v474, inf
    %v490 = vsel %vm110, %v476, inf
    %v491 = vsel %vm110, %v478, inf
    %v492 = vsel %vm110, %v480, inf
    %v493 = vsel %vm110, %v482, inf
    %v494 = vsel %vm110, %v484, inf
    %v495 = vsel %vm110, %v486, inf
    %v496 = vsel %vm110, %v488, inf
    %v497 = vmin.f32 %v465, %v489
    %v498 = vmin.f32 %v466, %v490
    %v499 = vmin.f32 %v467, %v491
    %v500 = vmin.f32 %v468, %v492
    %v501 = vmin.f32 %v469, %v493
    %v502 = vmin.f32 %v470, %v494
    %v503 = vmin.f32 %v471, %v495
    %v504 = vmin.f32 %v472, %v496
    %v505 = vmin.f32 %v433, %v497
    %v506 = vmin.f32 %v434, %v498
    %v507 = vmin.f32 %v435, %v499
    %v508 = vmin.f32 %v436, %v500
    %v509 = vmin.f32 %v437, %v501
    %v510 = vmin.f32 %v438, %v502
    %v511 = vmin.f32 %v439, %v503
    %v512 = vmin.f32 %v440, %v504
    %v513 = vrot.slane %v505, 7
    %v514 = vrot.slane %v506, 7
    %v515 = vrot.slane %v507, 7
    %v516 = vrot.slane %v508, 7
    %v517 = vrot.slane %v509, 7
    %v518 = vrot.slane %v510, 7
    %v519 = vrot.slane %v511, 7
    %v520 = vrot.slane %v512, 7
    %v521 = vsel %vm135, %v519, %v520
    %v522 = vsel %vm135, %v518, %v519
    %v523 = vsel %vm135, %v517, %v518
    %v524 = vsel %vm135, %v516, %v517
    %v525 = vsel %vm135, %v515, %v516
    %v526 = vsel %vm135, %v514, %v515
    %v527 = vsel %vm135, %v513, %v514
    %v528 = vsel %vm135, %v520, %v513
    %v529 = vsel %vm91, %v528, -inf
    %v530 = vsel %vm92, %v527, -inf
    %v531 = vsel %vm93, %v526, -inf
    %v532 = vsel %vm94, %v525, -inf
    %v533 = vsel %vm95, %v524, -inf
    %v534 = vsel %vm96, %v523, -inf
    %v535 = vsel %vm97, %v522, -inf
    %v536 = vsel %vm98, %v521, -inf
    %v537 = vmax.f32 %v529, %v505
    %v538 = vmax.f32 %v530, %v506
    %v539 = vmax.f32 %v531, %v507
    %v540 = vmax.f32 %v532, %v508
    %v541 = vmax.f32 %v533, %v509
    %v542 = vmax.f32 %v534, %v510
    %v543 = vmax.f32 %v535, %v511
    %v544 = vmax.f32 %v536, %v512
    %v545 = vrot.slane %v505, 1
    %v546 = vrot.slane %v506, 1
    %v547 = vrot.slane %v507, 1
    %v548 = vrot.slane %v508, 1
    %v549 = vrot.slane %v509, 1
    %v550 = vrot.slane %v510, 1
    %v551 = vrot.slane %v511, 1
    %v552 = vrot.slane %v512, 1
    %v553 = vsel %vm168, %v551, %v552
    %v554 = vsel %vm168, %v550, %v551
    %v555 = vsel %vm168, %v549, %v550
    %v556 = vsel %vm168, %v548, %v549
    %v557 = vsel %vm168, %v547, %v548
    %v558 = vsel %vm168, %v546, %v547
    %v559 = vsel %vm168, %v545, %v546
    %v560 = vsel %vm168, %v552, %v545
    %v561 = vsel %vm99, %v559, -inf
    %v562 = vsel %vm100, %v558, -inf
    %v563 = vsel %vm101, %v557, -inf
    %v564 = vsel %vm102, %v556, -inf
    %v565 = vsel %vm103, %v555, -inf
    %v566 = vsel %vm104, %v554, -inf
    %v567 = vsel %vm105, %v553, -inf
    %v568 = vsel %vm106, %v560, -inf
    %v569 = vmax.f32 %v537, %v561
    %v570 = vmax.f32 %v538, %v562
    %v571 = vmax.f32 %v539, %v563
    %v572 = vmax.f32 %v540, %v564
    %v573 = vmax.f32 %v541, %v565
    %v574 = vmax.f32 %v542, %v566
    %v575 = vmax.f32 %v543, %v567
    %v576 = vmax.f32 %v544, %v568
    %577 = vrot.lane.b32.xlu0 %v569, 1
    %v578 = vpop.permute.xlu0 %577
    %579 = vrot.lane.b32.xlu0 %v570, 1
    %v580 = vpop.permute.xlu0 %579
    %581 = vrot.lane.b32.xlu0 %v571, 1
    %v582 = vpop.permute.xlu0 %581
    %583 = vrot.lane.b32.xlu0 %v572, 1
    %v584 = vpop.permute.xlu0 %583
    %585 = vrot.lane.b32.xlu0 %v573, 1
    %v586 = vpop.permute.xlu0 %585
    %587 = vrot.lane.b32.xlu0 %v574, 1
    %v588 = vpop.permute.xlu0 %587
    %589 = vrot.lane.b32.xlu0 %v575, 1
    %v590 = vpop.permute.xlu0 %589
    %591 = vrot.lane.b32.xlu0 %v576, 1
    %v592 = vpop.permute.xlu0 %591
    %v593 = vsel %vm109, %v578, -inf
    %v594 = vsel %vm109, %v580, -inf
    %v595 = vsel %vm109, %v582, -inf
    %v596 = vsel %vm109, %v584, -inf
    %v597 = vsel %vm109, %v586, -inf
    %v598 = vsel %vm109, %v588, -inf
    %v599 = vsel %vm109, %v590, -inf
    %v600 = vsel %vm109, %v592, -inf
    %v601 = vmax.f32 %v593, %v569
    %v602 = vmax.f32 %v594, %v570
    %v603 = vmax.f32 %v595, %v571
    %v604 = vmax.f32 %v596, %v572
    %v605 = vmax.f32 %v597, %v573
    %v606 = vmax.f32 %v598, %v574
    %v607 = vmax.f32 %v599, %v575
    %v608 = vmax.f32 %v600, %v576
    %609 = vrot.lane.b32.xlu0 %v569, 127
    %v610 = vpop.permute.xlu0 %609
    %611 = vrot.lane.b32.xlu0 %v570, 127
    %v612 = vpop.permute.xlu0 %611
    %613 = vrot.lane.b32.xlu0 %v571, 127
    %v614 = vpop.permute.xlu0 %613
    %615 = vrot.lane.b32.xlu0 %v572, 127
    %v616 = vpop.permute.xlu0 %615
    %617 = vrot.lane.b32.xlu0 %v573, 127
    %v618 = vpop.permute.xlu0 %617
    %619 = vrot.lane.b32.xlu0 %v574, 127
    %v620 = vpop.permute.xlu0 %619
    %621 = vrot.lane.b32.xlu0 %v575, 127
    %v622 = vpop.permute.xlu0 %621
    %623 = vrot.lane.b32.xlu0 %v576, 127
    %v624 = vpop.permute.xlu0 %623
    %v625 = vsel %vm110, %v610, -inf
    %v626 = vsel %vm110, %v612, -inf
    %v627 = vsel %vm110, %v614, -inf
    %v628 = vsel %vm110, %v616, -inf
    %v629 = vsel %vm110, %v618, -inf
    %v630 = vsel %vm110, %v620, -inf
    %v631 = vsel %vm110, %v622, -inf
    %v632 = vsel %vm110, %v624, -inf
    %v633 = vmax.f32 %v601, %v625
    %v634 = vmax.f32 %v602, %v626
    %v635 = vmax.f32 %v603, %v627
    %v636 = vmax.f32 %v604, %v628
    %v637 = vmax.f32 %v605, %v629
    %v638 = vmax.f32 %v606, %v630
    %v639 = vmax.f32 %v607, %v631
    %v640 = vmax.f32 %v608, %v632
    %v641 = vsub.f32 %v257, %v633
    %v642 = vsub.f32 %v258, %v634
    %v643 = vsub.f32 %v259, %v635
    %v644 = vsub.f32 %v260, %v636
    %v645 = vsub.f32 %v261, %v637
    %v646 = vsub.f32 %v262, %v638
    %v647 = vsub.f32 %v263, %v639
    %v648 = vsub.f32 %v264, %v640
    %v649 = vmax.f32 %v641, 0.0
    %v650 = vmax.f32 %v642, 0.0
    %v651 = vmax.f32 %v643, 0.0
    %v652 = vmax.f32 %v644, 0.0
    %v653 = vmax.f32 %v645, 0.0
    %v654 = vmax.f32 %v646, 0.0
    %v655 = vmax.f32 %v647, 0.0
    %v656 = vmax.f32 %v648, 0.0
    %v657 = vmul.f32 %v401, %v649
    %v658 = vmul.f32 %v402, %v650
    %v659 = vmul.f32 %v403, %v651
    %v660 = vmul.f32 %v404, %v652
    %v661 = vmul.f32 %v405, %v653
    %v662 = vmul.f32 %v406, %v654
    %v663 = vmul.f32 %v407, %v655
    %v664 = vmul.f32 %v408, %v656
    %v665 = vsub.f32 %v649, %v657
    %v666 = vsub.f32 %v650, %v658
    %v667 = vsub.f32 %v651, %v659
    %v668 = vsub.f32 %v652, %v660
    %v669 = vsub.f32 %v653, %v661
    %v670 = vsub.f32 %v654, %v662
    %v671 = vsub.f32 %v655, %v663
    %v672 = vsub.f32 %v656, %v664
    %v673 = vmax.f32 %v665, 0.0
    %v674 = vmax.f32 %v666, 0.0
    %v675 = vmax.f32 %v667, 0.0
    %v676 = vmax.f32 %v668, 0.0
    %v677 = vmax.f32 %v669, 0.0
    %v678 = vmax.f32 %v670, 0.0
    %v679 = vmax.f32 %v671, 0.0
    %v680 = vmax.f32 %v672, 0.0
    %v681 = vadd.f32 %v401, %v673
    %v682 = vadd.f32 %v402, %v674
    %v683 = vadd.f32 %v403, %v675
    %v684 = vadd.f32 %v404, %v676
    %v685 = vadd.f32 %v405, %v677
    %v686 = vadd.f32 %v406, %v678
    %v687 = vadd.f32 %v407, %v679
    %v688 = vadd.f32 %v408, %v680
    %v689 = vsel %vm91, %v528, inf
    %v690 = vsel %vm92, %v527, inf
    %v691 = vsel %vm93, %v526, inf
    %v692 = vsel %vm94, %v525, inf
    %v693 = vsel %vm95, %v524, inf
    %v694 = vsel %vm96, %v523, inf
    %v695 = vsel %vm97, %v522, inf
    %v696 = vsel %vm98, %v521, inf
    %v697 = vmin.f32 %v689, %v505
    %v698 = vmin.f32 %v690, %v506
    %v699 = vmin.f32 %v691, %v507
    %v700 = vmin.f32 %v692, %v508
    %v701 = vmin.f32 %v693, %v509
    %v702 = vmin.f32 %v694, %v510
    %v703 = vmin.f32 %v695, %v511
    %v704 = vmin.f32 %v696, %v512
    %v705 = vsel %vm99, %v559, inf
    %v706 = vsel %vm100, %v558, inf
    %v707 = vsel %vm101, %v557, inf
    %v708 = vsel %vm102, %v556, inf
    %v709 = vsel %vm103, %v555, inf
    %v710 = vsel %vm104, %v554, inf
    %v711 = vsel %vm105, %v553, inf
    %v712 = vsel %vm106, %v560, inf
    %v713 = vmin.f32 %v697, %v705
    %v714 = vmin.f32 %v698, %v706
    %v715 = vmin.f32 %v699, %v707
    %v716 = vmin.f32 %v700, %v708
    %v717 = vmin.f32 %v701, %v709
    %v718 = vmin.f32 %v702, %v710
    %v719 = vmin.f32 %v703, %v711
    %v720 = vmin.f32 %v704, %v712
    %721 = vrot.lane.b32.xlu0 %v505, 1
    %v722 = vpop.permute.xlu0 %721
    %723 = vrot.lane.b32.xlu0 %v506, 1
    %v724 = vpop.permute.xlu0 %723
    %725 = vrot.lane.b32.xlu0 %v507, 1
    %v726 = vpop.permute.xlu0 %725
    %727 = vrot.lane.b32.xlu0 %v508, 1
    %v728 = vpop.permute.xlu0 %727
    %729 = vrot.lane.b32.xlu0 %v509, 1
    %v730 = vpop.permute.xlu0 %729
    %731 = vrot.lane.b32.xlu0 %v510, 1
    %v732 = vpop.permute.xlu0 %731
    %733 = vrot.lane.b32.xlu0 %v511, 1
    %v734 = vpop.permute.xlu0 %733
    %735 = vrot.lane.b32.xlu0 %v512, 1
    %v736 = vpop.permute.xlu0 %735
    %v737 = vsel %vm109, %v722, inf
    %v738 = vsel %vm109, %v724, inf
    %v739 = vsel %vm109, %v726, inf
    %v740 = vsel %vm109, %v728, inf
    %v741 = vsel %vm109, %v730, inf
    %v742 = vsel %vm109, %v732, inf
    %v743 = vsel %vm109, %v734, inf
    %v744 = vsel %vm109, %v736, inf
    %v745 = vmin.f32 %v737, %v505
    %v746 = vmin.f32 %v738, %v506
    %v747 = vmin.f32 %v739, %v507
    %v748 = vmin.f32 %v740, %v508
    %v749 = vmin.f32 %v741, %v509
    %v750 = vmin.f32 %v742, %v510
    %v751 = vmin.f32 %v743, %v511
    %v752 = vmin.f32 %v744, %v512
    %753 = vrot.lane.b32.xlu0 %v505, 127
    %v754 = vpop.permute.xlu0 %753
    %755 = vrot.lane.b32.xlu0 %v506, 127
    %v756 = vpop.permute.xlu0 %755
    %757 = vrot.lane.b32.xlu0 %v507, 127
    %v758 = vpop.permute.xlu0 %757
    %759 = vrot.lane.b32.xlu0 %v508, 127
    %v760 = vpop.permute.xlu0 %759
    %761 = vrot.lane.b32.xlu0 %v509, 127
    %v762 = vpop.permute.xlu0 %761
    %763 = vrot.lane.b32.xlu0 %v510, 127
    %v764 = vpop.permute.xlu0 %763
    %765 = vrot.lane.b32.xlu0 %v511, 127
    %v766 = vpop.permute.xlu0 %765
    %767 = vrot.lane.b32.xlu0 %v512, 127
    %v768 = vpop.permute.xlu0 %767
    %v769 = vsel %vm110, %v754, inf
    %v770 = vsel %vm110, %v756, inf
    %v771 = vsel %vm110, %v758, inf
    %v772 = vsel %vm110, %v760, inf
    %v773 = vsel %vm110, %v762, inf
    %v774 = vsel %vm110, %v764, inf
    %v775 = vsel %vm110, %v766, inf
    %v776 = vsel %vm110, %v768, inf
    %v777 = vmin.f32 %v745, %v769
    %v778 = vmin.f32 %v746, %v770
    %v779 = vmin.f32 %v747, %v771
    %v780 = vmin.f32 %v748, %v772
    %v781 = vmin.f32 %v749, %v773
    %v782 = vmin.f32 %v750, %v774
    %v783 = vmin.f32 %v751, %v775
    %v784 = vmin.f32 %v752, %v776
    %v785 = vmin.f32 %v713, %v777
    %v786 = vmin.f32 %v714, %v778
    %v787 = vmin.f32 %v715, %v779
    %v788 = vmin.f32 %v716, %v780
    %v789 = vmin.f32 %v717, %v781
    %v790 = vmin.f32 %v718, %v782
    %v791 = vmin.f32 %v719, %v783
    %v792 = vmin.f32 %v720, %v784
    %v793 = vrot.slane %v785, 7
    %v794 = vrot.slane %v786, 7
    %v795 = vrot.slane %v787, 7
    %v796 = vrot.slane %v788, 7
    %v797 = vrot.slane %v789, 7
    %v798 = vrot.slane %v790, 7
    %v799 = vrot.slane %v791, 7
    %v800 = vrot.slane %v792, 7
    %v801 = vsel %vm135, %v799, %v800
    %v802 = vsel %vm135, %v798, %v799
    %v803 = vsel %vm135, %v797, %v798
    %v804 = vsel %vm135, %v796, %v797
    %v805 = vsel %vm135, %v795, %v796
    %v806 = vsel %vm135, %v794, %v795
    %v807 = vsel %vm135, %v793, %v794
    %v808 = vsel %vm135, %v800, %v793
    %v809 = vsel %vm91, %v808, -inf
    %v810 = vsel %vm92, %v807, -inf
    %v811 = vsel %vm93, %v806, -inf
    %v812 = vsel %vm94, %v805, -inf
    %v813 = vsel %vm95, %v804, -inf
    %v814 = vsel %vm96, %v803, -inf
    %v815 = vsel %vm97, %v802, -inf
    %v816 = vsel %vm98, %v801, -inf
    %v817 = vmax.f32 %v809, %v785
    %v818 = vmax.f32 %v810, %v786
    %v819 = vmax.f32 %v811, %v787
    %v820 = vmax.f32 %v812, %v788
    %v821 = vmax.f32 %v813, %v789
    %v822 = vmax.f32 %v814, %v790
    %v823 = vmax.f32 %v815, %v791
    %v824 = vmax.f32 %v816, %v792
    %v825 = vrot.slane %v785, 1
    %v826 = vrot.slane %v786, 1
    %v827 = vrot.slane %v787, 1
    %v828 = vrot.slane %v788, 1
    %v829 = vrot.slane %v789, 1
    %v830 = vrot.slane %v790, 1
    %v831 = vrot.slane %v791, 1
    %v832 = vrot.slane %v792, 1
    %v833 = vsel %vm168, %v831, %v832
    %v834 = vsel %vm168, %v830, %v831
    %v835 = vsel %vm168, %v829, %v830
    %v836 = vsel %vm168, %v828, %v829
    %v837 = vsel %vm168, %v827, %v828
    %v838 = vsel %vm168, %v826, %v827
    %v839 = vsel %vm168, %v825, %v826
    %v840 = vsel %vm168, %v832, %v825
    %v841 = vsel %vm99, %v839, -inf
    %v842 = vsel %vm100, %v838, -inf
    %v843 = vsel %vm101, %v837, -inf
    %v844 = vsel %vm102, %v836, -inf
    %v845 = vsel %vm103, %v835, -inf
    %v846 = vsel %vm104, %v834, -inf
    %v847 = vsel %vm105, %v833, -inf
    %v848 = vsel %vm106, %v840, -inf
    %v849 = vmax.f32 %v817, %v841
    %v850 = vmax.f32 %v818, %v842
    %v851 = vmax.f32 %v819, %v843
    %v852 = vmax.f32 %v820, %v844
    %v853 = vmax.f32 %v821, %v845
    %v854 = vmax.f32 %v822, %v846
    %v855 = vmax.f32 %v823, %v847
    %v856 = vmax.f32 %v824, %v848
    %857 = vrot.lane.b32.xlu0 %v849, 1
    %v858 = vpop.permute.xlu0 %857
    %859 = vrot.lane.b32.xlu0 %v850, 1
    %v860 = vpop.permute.xlu0 %859
    %861 = vrot.lane.b32.xlu0 %v851, 1
    %v862 = vpop.permute.xlu0 %861
    %863 = vrot.lane.b32.xlu0 %v852, 1
    %v864 = vpop.permute.xlu0 %863
    %865 = vrot.lane.b32.xlu0 %v853, 1
    %v866 = vpop.permute.xlu0 %865
    %867 = vrot.lane.b32.xlu0 %v854, 1
    %v868 = vpop.permute.xlu0 %867
    %869 = vrot.lane.b32.xlu0 %v855, 1
    %v870 = vpop.permute.xlu0 %869
    %871 = vrot.lane.b32.xlu0 %v856, 1
    %v872 = vpop.permute.xlu0 %871
    %v873 = vsel %vm109, %v858, -inf
    %v874 = vsel %vm109, %v860, -inf
    %v875 = vsel %vm109, %v862, -inf
    %v876 = vsel %vm109, %v864, -inf
    %v877 = vsel %vm109, %v866, -inf
    %v878 = vsel %vm109, %v868, -inf
    %v879 = vsel %vm109, %v870, -inf
    %v880 = vsel %vm109, %v872, -inf
    %v881 = vmax.f32 %v873, %v849
    %v882 = vmax.f32 %v874, %v850
    %v883 = vmax.f32 %v875, %v851
    %v884 = vmax.f32 %v876, %v852
    %v885 = vmax.f32 %v877, %v853
    %v886 = vmax.f32 %v878, %v854
    %v887 = vmax.f32 %v879, %v855
    %v888 = vmax.f32 %v880, %v856
    %889 = vrot.lane.b32.xlu0 %v849, 127
    %v890 = vpop.permute.xlu0 %889
    %891 = vrot.lane.b32.xlu0 %v850, 127
    %v892 = vpop.permute.xlu0 %891
    %893 = vrot.lane.b32.xlu0 %v851, 127
    %v894 = vpop.permute.xlu0 %893
    %895 = vrot.lane.b32.xlu0 %v852, 127
    %v896 = vpop.permute.xlu0 %895
    %897 = vrot.lane.b32.xlu0 %v853, 127
    %v898 = vpop.permute.xlu0 %897
    %899 = vrot.lane.b32.xlu0 %v854, 127
    %v900 = vpop.permute.xlu0 %899
    %901 = vrot.lane.b32.xlu0 %v855, 127
    %v902 = vpop.permute.xlu0 %901
    %903 = vrot.lane.b32.xlu0 %v856, 127
    %v904 = vpop.permute.xlu0 %903
    %v905 = vsel %vm110, %v890, -inf
    %v906 = vsel %vm110, %v892, -inf
    %v907 = vsel %vm110, %v894, -inf
    %v908 = vsel %vm110, %v896, -inf
    %v909 = vsel %vm110, %v898, -inf
    %v910 = vsel %vm110, %v900, -inf
    %v911 = vsel %vm110, %v902, -inf
    %v912 = vsel %vm110, %v904, -inf
    %v913 = vmax.f32 %v881, %v905
    %v914 = vmax.f32 %v882, %v906
    %v915 = vmax.f32 %v883, %v907
    %v916 = vmax.f32 %v884, %v908
    %v917 = vmax.f32 %v885, %v909
    %v918 = vmax.f32 %v886, %v910
    %v919 = vmax.f32 %v887, %v911
    %v920 = vmax.f32 %v888, %v912
    %v921 = vsub.f32 %v505, %v913
    %v922 = vsub.f32 %v506, %v914
    %v923 = vsub.f32 %v507, %v915
    %v924 = vsub.f32 %v508, %v916
    %v925 = vsub.f32 %v509, %v917
    %v926 = vsub.f32 %v510, %v918
    %v927 = vsub.f32 %v511, %v919
    %v928 = vsub.f32 %v512, %v920
    %v929 = vmax.f32 %v921, 0.0
    %v930 = vmax.f32 %v922, 0.0
    %v931 = vmax.f32 %v923, 0.0
    %v932 = vmax.f32 %v924, 0.0
    %v933 = vmax.f32 %v925, 0.0
    %v934 = vmax.f32 %v926, 0.0
    %v935 = vmax.f32 %v927, 0.0
    %v936 = vmax.f32 %v928, 0.0
    %v937 = vmul.f32 %v681, %v929
    %v938 = vmul.f32 %v682, %v930
    %v939 = vmul.f32 %v683, %v931
    %v940 = vmul.f32 %v684, %v932
    %v941 = vmul.f32 %v685, %v933
    %v942 = vmul.f32 %v686, %v934
    %v943 = vmul.f32 %v687, %v935
    %v944 = vmul.f32 %v688, %v936
    %v945 = vsub.f32 %v929, %v937
    %v946 = vsub.f32 %v930, %v938
    %v947 = vsub.f32 %v931, %v939
    %v948 = vsub.f32 %v932, %v940
    %v949 = vsub.f32 %v933, %v941
    %v950 = vsub.f32 %v934, %v942
    %v951 = vsub.f32 %v935, %v943
    %v952 = vsub.f32 %v936, %v944
    %v953 = vmax.f32 %v945, 0.0
    %v954 = vmax.f32 %v946, 0.0
    %v955 = vmax.f32 %v947, 0.0
    %v956 = vmax.f32 %v948, 0.0
    %v957 = vmax.f32 %v949, 0.0
    %v958 = vmax.f32 %v950, 0.0
    %v959 = vmax.f32 %v951, 0.0
    %v960 = vmax.f32 %v952, 0.0
    %v961 = vadd.f32 %v681, %v953
    %v962 = vadd.f32 %v682, %v954
    %v963 = vadd.f32 %v683, %v955
    %v964 = vadd.f32 %v684, %v956
    %v965 = vadd.f32 %v685, %v957
    %v966 = vadd.f32 %v686, %v958
    %v967 = vadd.f32 %v687, %v959
    %v968 = vadd.f32 %v688, %v960
    %v969 = vsel %vm91, %v808, inf
    %v970 = vsel %vm92, %v807, inf
    %v971 = vsel %vm93, %v806, inf
    %v972 = vsel %vm94, %v805, inf
    %v973 = vsel %vm95, %v804, inf
    %v974 = vsel %vm96, %v803, inf
    %v975 = vsel %vm97, %v802, inf
    %v976 = vsel %vm98, %v801, inf
    %v977 = vmin.f32 %v969, %v785
    %v978 = vmin.f32 %v970, %v786
    %v979 = vmin.f32 %v971, %v787
    %v980 = vmin.f32 %v972, %v788
    %v981 = vmin.f32 %v973, %v789
    %v982 = vmin.f32 %v974, %v790
    %v983 = vmin.f32 %v975, %v791
    %v984 = vmin.f32 %v976, %v792
    %v985 = vsel %vm99, %v839, inf
    %v986 = vsel %vm100, %v838, inf
    %v987 = vsel %vm101, %v837, inf
    %v988 = vsel %vm102, %v836, inf
    %v989 = vsel %vm103, %v835, inf
    %v990 = vsel %vm104, %v834, inf
    %v991 = vsel %vm105, %v833, inf
    %v992 = vsel %vm106, %v840, inf
    %v993 = vmin.f32 %v977, %v985
    %v994 = vmin.f32 %v978, %v986
    %v995 = vmin.f32 %v979, %v987
    %v996 = vmin.f32 %v980, %v988
    %v997 = vmin.f32 %v981, %v989
    %v998 = vmin.f32 %v982, %v990
    %v999 = vmin.f32 %v983, %v991
    %v1000 = vmin.f32 %v984, %v992
    %1001 = vrot.lane.b32.xlu0 %v785, 1
    %v1002 = vpop.permute.xlu0 %1001
    %1003 = vrot.lane.b32.xlu0 %v786, 1
    %v1004 = vpop.permute.xlu0 %1003
    %1005 = vrot.lane.b32.xlu0 %v787, 1
    %v1006 = vpop.permute.xlu0 %1005
    %1007 = vrot.lane.b32.xlu0 %v788, 1
    %v1008 = vpop.permute.xlu0 %1007
    %1009 = vrot.lane.b32.xlu0 %v789, 1
    %v1010 = vpop.permute.xlu0 %1009
    %1011 = vrot.lane.b32.xlu0 %v790, 1
    %v1012 = vpop.permute.xlu0 %1011
    %1013 = vrot.lane.b32.xlu0 %v791, 1
    %v1014 = vpop.permute.xlu0 %1013
    %1015 = vrot.lane.b32.xlu0 %v792, 1
    %v1016 = vpop.permute.xlu0 %1015
    %v1017 = vsel %vm109, %v1002, inf
    %v1018 = vsel %vm109, %v1004, inf
    %v1019 = vsel %vm109, %v1006, inf
    %v1020 = vsel %vm109, %v1008, inf
    %v1021 = vsel %vm109, %v1010, inf
    %v1022 = vsel %vm109, %v1012, inf
    %v1023 = vsel %vm109, %v1014, inf
    %v1024 = vsel %vm109, %v1016, inf
    %v1025 = vmin.f32 %v1017, %v785
    %v1026 = vmin.f32 %v1018, %v786
    %v1027 = vmin.f32 %v1019, %v787
    %v1028 = vmin.f32 %v1020, %v788
    %v1029 = vmin.f32 %v1021, %v789
    %v1030 = vmin.f32 %v1022, %v790
    %v1031 = vmin.f32 %v1023, %v791
    %v1032 = vmin.f32 %v1024, %v792
    %1033 = vrot.lane.b32.xlu0 %v785, 127
    %v1034 = vpop.permute.xlu0 %1033
    %1035 = vrot.lane.b32.xlu0 %v786, 127
    %v1036 = vpop.permute.xlu0 %1035
    %1037 = vrot.lane.b32.xlu0 %v787, 127
    %v1038 = vpop.permute.xlu0 %1037
    %1039 = vrot.lane.b32.xlu0 %v788, 127
    %v1040 = vpop.permute.xlu0 %1039
    %1041 = vrot.lane.b32.xlu0 %v789, 127
    %v1042 = vpop.permute.xlu0 %1041
    %1043 = vrot.lane.b32.xlu0 %v790, 127
    %v1044 = vpop.permute.xlu0 %1043
    %1045 = vrot.lane.b32.xlu0 %v791, 127
    %v1046 = vpop.permute.xlu0 %1045
    %1047 = vrot.lane.b32.xlu0 %v792, 127
    %v1048 = vpop.permute.xlu0 %1047
    %v1049 = vsel %vm110, %v1034, inf
    %v1050 = vsel %vm110, %v1036, inf
    %v1051 = vsel %vm110, %v1038, inf
    %v1052 = vsel %vm110, %v1040, inf
    %v1053 = vsel %vm110, %v1042, inf
    %v1054 = vsel %vm110, %v1044, inf
    %v1055 = vsel %vm110, %v1046, inf
    %v1056 = vsel %vm110, %v1048, inf
    %v1057 = vmin.f32 %v1025, %v1049
    %v1058 = vmin.f32 %v1026, %v1050
    %v1059 = vmin.f32 %v1027, %v1051
    %v1060 = vmin.f32 %v1028, %v1052
    %v1061 = vmin.f32 %v1029, %v1053
    %v1062 = vmin.f32 %v1030, %v1054
    %v1063 = vmin.f32 %v1031, %v1055
    %v1064 = vmin.f32 %v1032, %v1056
    %v1065 = vmin.f32 %v993, %v1057
    %v1066 = vmin.f32 %v994, %v1058
    %v1067 = vmin.f32 %v995, %v1059
    %v1068 = vmin.f32 %v996, %v1060
    %v1069 = vmin.f32 %v997, %v1061
    %v1070 = vmin.f32 %v998, %v1062
    %v1071 = vmin.f32 %v999, %v1063
    %v1072 = vmin.f32 %v1000, %v1064
    %v1073 = vrot.slane %v1065, 7
    %v1074 = vrot.slane %v1066, 7
    %v1075 = vrot.slane %v1067, 7
    %v1076 = vrot.slane %v1068, 7
    %v1077 = vrot.slane %v1069, 7
    %v1078 = vrot.slane %v1070, 7
    %v1079 = vrot.slane %v1071, 7
    %v1080 = vrot.slane %v1072, 7
    %v1081 = vsel %vm135, %v1079, %v1080
    %v1082 = vsel %vm135, %v1078, %v1079
    %v1083 = vsel %vm135, %v1077, %v1078
    %v1084 = vsel %vm135, %v1076, %v1077
    %v1085 = vsel %vm135, %v1075, %v1076
    %v1086 = vsel %vm135, %v1074, %v1075
    %v1087 = vsel %vm135, %v1073, %v1074
    %v1088 = vsel %vm135, %v1080, %v1073
    %v1089 = vsel %vm91, %v1088, -inf
    %v1090 = vsel %vm92, %v1087, -inf
    %v1091 = vsel %vm93, %v1086, -inf
    %v1092 = vsel %vm94, %v1085, -inf
    %v1093 = vsel %vm95, %v1084, -inf
    %v1094 = vsel %vm96, %v1083, -inf
    %v1095 = vsel %vm97, %v1082, -inf
    %v1096 = vsel %vm98, %v1081, -inf
    %v1097 = vmax.f32 %v1089, %v1065
    %v1098 = vmax.f32 %v1090, %v1066
    %v1099 = vmax.f32 %v1091, %v1067
    %v1100 = vmax.f32 %v1092, %v1068
    %v1101 = vmax.f32 %v1093, %v1069
    %v1102 = vmax.f32 %v1094, %v1070
    %v1103 = vmax.f32 %v1095, %v1071
    %v1104 = vmax.f32 %v1096, %v1072
    %v1105 = vrot.slane %v1065, 1
    %v1106 = vrot.slane %v1066, 1
    %v1107 = vrot.slane %v1067, 1
    %v1108 = vrot.slane %v1068, 1
    %v1109 = vrot.slane %v1069, 1
    %v1110 = vrot.slane %v1070, 1
    %v1111 = vrot.slane %v1071, 1
    %v1112 = vrot.slane %v1072, 1
    %v1113 = vsel %vm168, %v1111, %v1112
    %v1114 = vsel %vm168, %v1110, %v1111
    %v1115 = vsel %vm168, %v1109, %v1110
    %v1116 = vsel %vm168, %v1108, %v1109
    %v1117 = vsel %vm168, %v1107, %v1108
    %v1118 = vsel %vm168, %v1106, %v1107
    %v1119 = vsel %vm168, %v1105, %v1106
    %v1120 = vsel %vm168, %v1112, %v1105
    %v1121 = vsel %vm99, %v1119, -inf
    %v1122 = vsel %vm100, %v1118, -inf
    %v1123 = vsel %vm101, %v1117, -inf
    %v1124 = vsel %vm102, %v1116, -inf
    %v1125 = vsel %vm103, %v1115, -inf
    %v1126 = vsel %vm104, %v1114, -inf
    %v1127 = vsel %vm105, %v1113, -inf
    %v1128 = vsel %vm106, %v1120, -inf
    %v1129 = vmax.f32 %v1097, %v1121
    %v1130 = vmax.f32 %v1098, %v1122
    %v1131 = vmax.f32 %v1099, %v1123
    %v1132 = vmax.f32 %v1100, %v1124
    %v1133 = vmax.f32 %v1101, %v1125
    %v1134 = vmax.f32 %v1102, %v1126
    %v1135 = vmax.f32 %v1103, %v1127
    %v1136 = vmax.f32 %v1104, %v1128
    %1137 = vrot.lane.b32.xlu0 %v1129, 1
    %v1138 = vpop.permute.xlu0 %1137
    %1139 = vrot.lane.b32.xlu0 %v1130, 1
    %v1140 = vpop.permute.xlu0 %1139
    %1141 = vrot.lane.b32.xlu0 %v1131, 1
    %v1142 = vpop.permute.xlu0 %1141
    %1143 = vrot.lane.b32.xlu0 %v1132, 1
    %v1144 = vpop.permute.xlu0 %1143
    %1145 = vrot.lane.b32.xlu0 %v1133, 1
    %v1146 = vpop.permute.xlu0 %1145
    %1147 = vrot.lane.b32.xlu0 %v1134, 1
    %v1148 = vpop.permute.xlu0 %1147
    %1149 = vrot.lane.b32.xlu0 %v1135, 1
    %v1150 = vpop.permute.xlu0 %1149
    %1151 = vrot.lane.b32.xlu0 %v1136, 1
    %v1152 = vpop.permute.xlu0 %1151
    %v1153 = vsel %vm109, %v1138, -inf
    %v1154 = vsel %vm109, %v1140, -inf
    %v1155 = vsel %vm109, %v1142, -inf
    %v1156 = vsel %vm109, %v1144, -inf
    %v1157 = vsel %vm109, %v1146, -inf
    %v1158 = vsel %vm109, %v1148, -inf
    %v1159 = vsel %vm109, %v1150, -inf
    %v1160 = vsel %vm109, %v1152, -inf
    %v1161 = vmax.f32 %v1153, %v1129
    %v1162 = vmax.f32 %v1154, %v1130
    %v1163 = vmax.f32 %v1155, %v1131
    %v1164 = vmax.f32 %v1156, %v1132
    %v1165 = vmax.f32 %v1157, %v1133
    %v1166 = vmax.f32 %v1158, %v1134
    %v1167 = vmax.f32 %v1159, %v1135
    %v1168 = vmax.f32 %v1160, %v1136
    %1169 = vrot.lane.b32.xlu0 %v1129, 127
    %v1170 = vpop.permute.xlu0 %1169
    %1171 = vrot.lane.b32.xlu0 %v1130, 127
    %v1172 = vpop.permute.xlu0 %1171
    %1173 = vrot.lane.b32.xlu0 %v1131, 127
    %v1174 = vpop.permute.xlu0 %1173
    %1175 = vrot.lane.b32.xlu0 %v1132, 127
    %v1176 = vpop.permute.xlu0 %1175
    %1177 = vrot.lane.b32.xlu0 %v1133, 127
    %v1178 = vpop.permute.xlu0 %1177
    %1179 = vrot.lane.b32.xlu0 %v1134, 127
    %v1180 = vpop.permute.xlu0 %1179
    %1181 = vrot.lane.b32.xlu0 %v1135, 127
    %v1182 = vpop.permute.xlu0 %1181
    %1183 = vrot.lane.b32.xlu0 %v1136, 127
    %v1184 = vpop.permute.xlu0 %1183
    %v1185 = vsel %vm110, %v1170, -inf
    %v1186 = vsel %vm110, %v1172, -inf
    %v1187 = vsel %vm110, %v1174, -inf
    %v1188 = vsel %vm110, %v1176, -inf
    %v1189 = vsel %vm110, %v1178, -inf
    %v1190 = vsel %vm110, %v1180, -inf
    %v1191 = vsel %vm110, %v1182, -inf
    %v1192 = vsel %vm110, %v1184, -inf
    %v1193 = vmax.f32 %v1161, %v1185
    %v1194 = vmax.f32 %v1162, %v1186
    %v1195 = vmax.f32 %v1163, %v1187
    %v1196 = vmax.f32 %v1164, %v1188
    %v1197 = vmax.f32 %v1165, %v1189
    %v1198 = vmax.f32 %v1166, %v1190
    %v1199 = vmax.f32 %v1167, %v1191
    %v1200 = vmax.f32 %v1168, %v1192
    %v1201 = vsub.f32 %v785, %v1193
    %v1202 = vsub.f32 %v786, %v1194
    %v1203 = vsub.f32 %v787, %v1195
    %v1204 = vsub.f32 %v788, %v1196
    %v1205 = vsub.f32 %v789, %v1197
    %v1206 = vsub.f32 %v790, %v1198
    %v1207 = vsub.f32 %v791, %v1199
    %v1208 = vsub.f32 %v792, %v1200
    %v1209 = vmax.f32 %v1201, 0.0
    %v1210 = vmax.f32 %v1202, 0.0
    %v1211 = vmax.f32 %v1203, 0.0
    %v1212 = vmax.f32 %v1204, 0.0
    %v1213 = vmax.f32 %v1205, 0.0
    %v1214 = vmax.f32 %v1206, 0.0
    %v1215 = vmax.f32 %v1207, 0.0
    %v1216 = vmax.f32 %v1208, 0.0
    %v1217 = vmul.f32 %v961, %v1209
    %v1218 = vmul.f32 %v962, %v1210
    %v1219 = vmul.f32 %v963, %v1211
    %v1220 = vmul.f32 %v964, %v1212
    %v1221 = vmul.f32 %v965, %v1213
    %v1222 = vmul.f32 %v966, %v1214
    %v1223 = vmul.f32 %v967, %v1215
    %v1224 = vmul.f32 %v968, %v1216
    %v1225 = vsub.f32 %v1209, %v1217
    %v1226 = vsub.f32 %v1210, %v1218
    %v1227 = vsub.f32 %v1211, %v1219
    %v1228 = vsub.f32 %v1212, %v1220
    %v1229 = vsub.f32 %v1213, %v1221
    %v1230 = vsub.f32 %v1214, %v1222
    %v1231 = vsub.f32 %v1215, %v1223
    %v1232 = vsub.f32 %v1216, %v1224
    %v1233 = vmax.f32 %v1225, 0.0
    %v1234 = vmax.f32 %v1226, 0.0
    %v1235 = vmax.f32 %v1227, 0.0
    %v1236 = vmax.f32 %v1228, 0.0
    %v1237 = vmax.f32 %v1229, 0.0
    %v1238 = vmax.f32 %v1230, 0.0
    %v1239 = vmax.f32 %v1231, 0.0
    %v1240 = vmax.f32 %v1232, 0.0
    %v1241 = vadd.f32 %v961, %v1233
    %v1242 = vadd.f32 %v962, %v1234
    %v1243 = vadd.f32 %v963, %v1235
    %v1244 = vadd.f32 %v964, %v1236
    %v1245 = vadd.f32 %v965, %v1237
    %v1246 = vadd.f32 %v966, %v1238
    %v1247 = vadd.f32 %v967, %v1239
    %v1248 = vadd.f32 %v968, %v1240
    %v1249 = vrot.slane %v111, 7
    %v1250 = vrot.slane %v112, 7
    %v1251 = vrot.slane %v113, 7
    %v1252 = vrot.slane %v114, 7
    %v1253 = vrot.slane %v115, 7
    %v1254 = vrot.slane %v116, 7
    %v1255 = vrot.slane %v117, 7
    %v1256 = vrot.slane %v118, 7
    %v1257 = vsel %vm135, %v1255, %v1256
    %v1258 = vsel %vm135, %v1254, %v1255
    %v1259 = vsel %vm135, %v1253, %v1254
    %v1260 = vsel %vm135, %v1252, %v1253
    %v1261 = vsel %vm135, %v1251, %v1252
    %v1262 = vsel %vm135, %v1250, %v1251
    %v1263 = vsel %vm135, %v1249, %v1250
    %v1264 = vsel %vm135, %v1256, %v1249
    %v1265 = vsel %vm91, %v1264, inf
    %v1266 = vsel %vm92, %v1263, inf
    %v1267 = vsel %vm93, %v1262, inf
    %v1268 = vsel %vm94, %v1261, inf
    %v1269 = vsel %vm95, %v1260, inf
    %v1270 = vsel %vm96, %v1259, inf
    %v1271 = vsel %vm97, %v1258, inf
    %v1272 = vsel %vm98, %v1257, inf
    %v1273 = vmin.f32 %v1265, %v111
    %v1274 = vmin.f32 %v1266, %v112
    %v1275 = vmin.f32 %v1267, %v113
    %v1276 = vmin.f32 %v1268, %v114
    %v1277 = vmin.f32 %v1269, %v115
    %v1278 = vmin.f32 %v1270, %v116
    %v1279 = vmin.f32 %v1271, %v117
    %v1280 = vmin.f32 %v1272, %v118
    %v1281 = vrot.slane %v111, 1
    %v1282 = vrot.slane %v112, 1
    %v1283 = vrot.slane %v113, 1
    %v1284 = vrot.slane %v114, 1
    %v1285 = vrot.slane %v115, 1
    %v1286 = vrot.slane %v116, 1
    %v1287 = vrot.slane %v117, 1
    %v1288 = vrot.slane %v118, 1
    %v1289 = vsel %vm168, %v1287, %v1288
    %v1290 = vsel %vm168, %v1286, %v1287
    %v1291 = vsel %vm168, %v1285, %v1286
    %v1292 = vsel %vm168, %v1284, %v1285
    %v1293 = vsel %vm168, %v1283, %v1284
    %v1294 = vsel %vm168, %v1282, %v1283
    %v1295 = vsel %vm168, %v1281, %v1282
    %v1296 = vsel %vm168, %v1288, %v1281
    %v1297 = vsel %vm99, %v1295, inf
    %v1298 = vsel %vm100, %v1294, inf
    %v1299 = vsel %vm101, %v1293, inf
    %v1300 = vsel %vm102, %v1292, inf
    %v1301 = vsel %vm103, %v1291, inf
    %v1302 = vsel %vm104, %v1290, inf
    %v1303 = vsel %vm105, %v1289, inf
    %v1304 = vsel %vm106, %v1296, inf
    %v1305 = vmin.f32 %v1273, %v1297
    %v1306 = vmin.f32 %v1274, %v1298
    %v1307 = vmin.f32 %v1275, %v1299
    %v1308 = vmin.f32 %v1276, %v1300
    %v1309 = vmin.f32 %v1277, %v1301
    %v1310 = vmin.f32 %v1278, %v1302
    %v1311 = vmin.f32 %v1279, %v1303
    %v1312 = vmin.f32 %v1280, %v1304
    %1313 = vrot.lane.b32.xlu0 %v111, 1
    %v1314 = vpop.permute.xlu0 %1313
    %1315 = vrot.lane.b32.xlu0 %v112, 1
    %v1316 = vpop.permute.xlu0 %1315
    %1317 = vrot.lane.b32.xlu0 %v113, 1
    %v1318 = vpop.permute.xlu0 %1317
    %1319 = vrot.lane.b32.xlu0 %v114, 1
    %v1320 = vpop.permute.xlu0 %1319
    %1321 = vrot.lane.b32.xlu0 %v115, 1
    %v1322 = vpop.permute.xlu0 %1321
    %1323 = vrot.lane.b32.xlu0 %v116, 1
    %v1324 = vpop.permute.xlu0 %1323
    %1325 = vrot.lane.b32.xlu0 %v117, 1
    %v1326 = vpop.permute.xlu0 %1325
    %1327 = vrot.lane.b32.xlu0 %v118, 1
    %v1328 = vpop.permute.xlu0 %1327
    %v1329 = vsel %vm109, %v1314, inf
    %v1330 = vsel %vm109, %v1316, inf
    %v1331 = vsel %vm109, %v1318, inf
    %v1332 = vsel %vm109, %v1320, inf
    %v1333 = vsel %vm109, %v1322, inf
    %v1334 = vsel %vm109, %v1324, inf
    %v1335 = vsel %vm109, %v1326, inf
    %v1336 = vsel %vm109, %v1328, inf
    %v1337 = vmin.f32 %v1329, %v111
    %v1338 = vmin.f32 %v1330, %v112
    %v1339 = vmin.f32 %v1331, %v113
    %v1340 = vmin.f32 %v1332, %v114
    %v1341 = vmin.f32 %v1333, %v115
    %v1342 = vmin.f32 %v1334, %v116
    %v1343 = vmin.f32 %v1335, %v117
    %v1344 = vmin.f32 %v1336, %v118
    %1345 = vrot.lane.b32.xlu0 %v111, 127
    %v1346 = vpop.permute.xlu0 %1345
    %1347 = vrot.lane.b32.xlu0 %v112, 127
    %v1348 = vpop.permute.xlu0 %1347
    %1349 = vrot.lane.b32.xlu0 %v113, 127
    %v1350 = vpop.permute.xlu0 %1349
    %1351 = vrot.lane.b32.xlu0 %v114, 127
    %v1352 = vpop.permute.xlu0 %1351
    %1353 = vrot.lane.b32.xlu0 %v115, 127
    %v1354 = vpop.permute.xlu0 %1353
    %1355 = vrot.lane.b32.xlu0 %v116, 127
    %v1356 = vpop.permute.xlu0 %1355
    %1357 = vrot.lane.b32.xlu0 %v117, 127
    %v1358 = vpop.permute.xlu0 %1357
    %1359 = vrot.lane.b32.xlu0 %v118, 127
    %v1360 = vpop.permute.xlu0 %1359
    %v1361 = vsel %vm110, %v1346, inf
    %v1362 = vsel %vm110, %v1348, inf
    %v1363 = vsel %vm110, %v1350, inf
    %v1364 = vsel %vm110, %v1352, inf
    %v1365 = vsel %vm110, %v1354, inf
    %v1366 = vsel %vm110, %v1356, inf
    %v1367 = vsel %vm110, %v1358, inf
    %v1368 = vsel %vm110, %v1360, inf
    %v1369 = vmin.f32 %v1337, %v1361
    %v1370 = vmin.f32 %v1338, %v1362
    %v1371 = vmin.f32 %v1339, %v1363
    %v1372 = vmin.f32 %v1340, %v1364
    %v1373 = vmin.f32 %v1341, %v1365
    %v1374 = vmin.f32 %v1342, %v1366
    %v1375 = vmin.f32 %v1343, %v1367
    %v1376 = vmin.f32 %v1344, %v1368
    %v1377 = vmin.f32 %v1305, %v1369
    %v1378 = vmin.f32 %v1306, %v1370
    %v1379 = vmin.f32 %v1307, %v1371
    %v1380 = vmin.f32 %v1308, %v1372
    %v1381 = vmin.f32 %v1309, %v1373
    %v1382 = vmin.f32 %v1310, %v1374
    %v1383 = vmin.f32 %v1311, %v1375
    %v1384 = vmin.f32 %v1312, %v1376
    %v1385 = vrot.slane %v1377, 7
    %v1386 = vrot.slane %v1378, 7
    %v1387 = vrot.slane %v1379, 7
    %v1388 = vrot.slane %v1380, 7
    %v1389 = vrot.slane %v1381, 7
    %v1390 = vrot.slane %v1382, 7
    %v1391 = vrot.slane %v1383, 7
    %v1392 = vrot.slane %v1384, 7
    %v1393 = vsel %vm135, %v1391, %v1392
    %v1394 = vsel %vm135, %v1390, %v1391
    %v1395 = vsel %vm135, %v1389, %v1390
    %v1396 = vsel %vm135, %v1388, %v1389
    %v1397 = vsel %vm135, %v1387, %v1388
    %v1398 = vsel %vm135, %v1386, %v1387
    %v1399 = vsel %vm135, %v1385, %v1386
    %v1400 = vsel %vm135, %v1392, %v1385
    %v1401 = vsel %vm91, %v1400, -inf
    %v1402 = vsel %vm92, %v1399, -inf
    %v1403 = vsel %vm93, %v1398, -inf
    %v1404 = vsel %vm94, %v1397, -inf
    %v1405 = vsel %vm95, %v1396, -inf
    %v1406 = vsel %vm96, %v1395, -inf
    %v1407 = vsel %vm97, %v1394, -inf
    %v1408 = vsel %vm98, %v1393, -inf
    %v1409 = vmax.f32 %v1401, %v1377
    %v1410 = vmax.f32 %v1402, %v1378
    %v1411 = vmax.f32 %v1403, %v1379
    %v1412 = vmax.f32 %v1404, %v1380
    %v1413 = vmax.f32 %v1405, %v1381
    %v1414 = vmax.f32 %v1406, %v1382
    %v1415 = vmax.f32 %v1407, %v1383
    %v1416 = vmax.f32 %v1408, %v1384
    %v1417 = vrot.slane %v1377, 1
    %v1418 = vrot.slane %v1378, 1
    %v1419 = vrot.slane %v1379, 1
    %v1420 = vrot.slane %v1380, 1
    %v1421 = vrot.slane %v1381, 1
    %v1422 = vrot.slane %v1382, 1
    %v1423 = vrot.slane %v1383, 1
    %v1424 = vrot.slane %v1384, 1
    %v1425 = vsel %vm168, %v1423, %v1424
    %v1426 = vsel %vm168, %v1422, %v1423
    %v1427 = vsel %vm168, %v1421, %v1422
    %v1428 = vsel %vm168, %v1420, %v1421
    %v1429 = vsel %vm168, %v1419, %v1420
    %v1430 = vsel %vm168, %v1418, %v1419
    %v1431 = vsel %vm168, %v1417, %v1418
    %v1432 = vsel %vm168, %v1424, %v1417
    %v1433 = vsel %vm99, %v1431, -inf
    %v1434 = vsel %vm100, %v1430, -inf
    %v1435 = vsel %vm101, %v1429, -inf
    %v1436 = vsel %vm102, %v1428, -inf
    %v1437 = vsel %vm103, %v1427, -inf
    %v1438 = vsel %vm104, %v1426, -inf
    %v1439 = vsel %vm105, %v1425, -inf
    %v1440 = vsel %vm106, %v1432, -inf
    %v1441 = vmax.f32 %v1409, %v1433
    %v1442 = vmax.f32 %v1410, %v1434
    %v1443 = vmax.f32 %v1411, %v1435
    %v1444 = vmax.f32 %v1412, %v1436
    %v1445 = vmax.f32 %v1413, %v1437
    %v1446 = vmax.f32 %v1414, %v1438
    %v1447 = vmax.f32 %v1415, %v1439
    %v1448 = vmax.f32 %v1416, %v1440
    %1449 = vrot.lane.b32.xlu0 %v1441, 1
    %v1450 = vpop.permute.xlu0 %1449
    %1451 = vrot.lane.b32.xlu0 %v1442, 1
    %v1452 = vpop.permute.xlu0 %1451
    %1453 = vrot.lane.b32.xlu0 %v1443, 1
    %v1454 = vpop.permute.xlu0 %1453
    %1455 = vrot.lane.b32.xlu0 %v1444, 1
    %v1456 = vpop.permute.xlu0 %1455
    %1457 = vrot.lane.b32.xlu0 %v1445, 1
    %v1458 = vpop.permute.xlu0 %1457
    %1459 = vrot.lane.b32.xlu0 %v1446, 1
    %v1460 = vpop.permute.xlu0 %1459
    %1461 = vrot.lane.b32.xlu0 %v1447, 1
    %v1462 = vpop.permute.xlu0 %1461
    %1463 = vrot.lane.b32.xlu0 %v1448, 1
    %v1464 = vpop.permute.xlu0 %1463
    %v1465 = vsel %vm109, %v1450, -inf
    %v1466 = vsel %vm109, %v1452, -inf
    %v1467 = vsel %vm109, %v1454, -inf
    %v1468 = vsel %vm109, %v1456, -inf
    %v1469 = vsel %vm109, %v1458, -inf
    %v1470 = vsel %vm109, %v1460, -inf
    %v1471 = vsel %vm109, %v1462, -inf
    %v1472 = vsel %vm109, %v1464, -inf
    %v1473 = vmax.f32 %v1465, %v1441
    %v1474 = vmax.f32 %v1466, %v1442
    %v1475 = vmax.f32 %v1467, %v1443
    %v1476 = vmax.f32 %v1468, %v1444
    %v1477 = vmax.f32 %v1469, %v1445
    %v1478 = vmax.f32 %v1470, %v1446
    %v1479 = vmax.f32 %v1471, %v1447
    %v1480 = vmax.f32 %v1472, %v1448
    %1481 = vrot.lane.b32.xlu0 %v1441, 127
    %v1482 = vpop.permute.xlu0 %1481
    %1483 = vrot.lane.b32.xlu0 %v1442, 127
    %v1484 = vpop.permute.xlu0 %1483
    %1485 = vrot.lane.b32.xlu0 %v1443, 127
    %v1486 = vpop.permute.xlu0 %1485
    %1487 = vrot.lane.b32.xlu0 %v1444, 127
    %v1488 = vpop.permute.xlu0 %1487
    %1489 = vrot.lane.b32.xlu0 %v1445, 127
    %v1490 = vpop.permute.xlu0 %1489
    %1491 = vrot.lane.b32.xlu0 %v1446, 127
    %v1492 = vpop.permute.xlu0 %1491
    %1493 = vrot.lane.b32.xlu0 %v1447, 127
    %v1494 = vpop.permute.xlu0 %1493
    %1495 = vrot.lane.b32.xlu0 %v1448, 127
    %v1496 = vpop.permute.xlu0 %1495
    %v1497 = vsel %vm110, %v1482, -inf
    %v1498 = vsel %vm110, %v1484, -inf
    %v1499 = vsel %vm110, %v1486, -inf
    %v1500 = vsel %vm110, %v1488, -inf
    %v1501 = vsel %vm110, %v1490, -inf
    %v1502 = vsel %vm110, %v1492, -inf
    %v1503 = vsel %vm110, %v1494, -inf
    %v1504 = vsel %vm110, %v1496, -inf
    %v1505 = vmax.f32 %v1473, %v1497
    %v1506 = vmax.f32 %v1474, %v1498
    %v1507 = vmax.f32 %v1475, %v1499
    %v1508 = vmax.f32 %v1476, %v1500
    %v1509 = vmax.f32 %v1477, %v1501
    %v1510 = vmax.f32 %v1478, %v1502
    %v1511 = vmax.f32 %v1479, %v1503
    %v1512 = vmax.f32 %v1480, %v1504
    %v1513 = vsub.f32 %v111, %v1505
    %v1514 = vsub.f32 %v112, %v1506
    %v1515 = vsub.f32 %v113, %v1507
    %v1516 = vsub.f32 %v114, %v1508
    %v1517 = vsub.f32 %v115, %v1509
    %v1518 = vsub.f32 %v116, %v1510
    %v1519 = vsub.f32 %v117, %v1511
    %v1520 = vsub.f32 %v118, %v1512
    %v1521 = vmax.f32 %v1513, 0.0
    %v1522 = vmax.f32 %v1514, 0.0
    %v1523 = vmax.f32 %v1515, 0.0
    %v1524 = vmax.f32 %v1516, 0.0
    %v1525 = vmax.f32 %v1517, 0.0
    %v1526 = vmax.f32 %v1518, 0.0
    %v1527 = vmax.f32 %v1519, 0.0
    %v1528 = vmax.f32 %v1520, 0.0
    %v1529 = vsel %vm91, %v1400, inf
    %v1530 = vsel %vm92, %v1399, inf
    %v1531 = vsel %vm93, %v1398, inf
    %v1532 = vsel %vm94, %v1397, inf
    %v1533 = vsel %vm95, %v1396, inf
    %v1534 = vsel %vm96, %v1395, inf
    %v1535 = vsel %vm97, %v1394, inf
    %v1536 = vsel %vm98, %v1393, inf
    %v1537 = vmin.f32 %v1529, %v1377
    %v1538 = vmin.f32 %v1530, %v1378
    %v1539 = vmin.f32 %v1531, %v1379
    %v1540 = vmin.f32 %v1532, %v1380
    %v1541 = vmin.f32 %v1533, %v1381
    %v1542 = vmin.f32 %v1534, %v1382
    %v1543 = vmin.f32 %v1535, %v1383
    %v1544 = vmin.f32 %v1536, %v1384
    %v1545 = vsel %vm99, %v1431, inf
    %v1546 = vsel %vm100, %v1430, inf
    %v1547 = vsel %vm101, %v1429, inf
    %v1548 = vsel %vm102, %v1428, inf
    %v1549 = vsel %vm103, %v1427, inf
    %v1550 = vsel %vm104, %v1426, inf
    %v1551 = vsel %vm105, %v1425, inf
    %v1552 = vsel %vm106, %v1432, inf
    %v1553 = vmin.f32 %v1537, %v1545
    %v1554 = vmin.f32 %v1538, %v1546
    %v1555 = vmin.f32 %v1539, %v1547
    %v1556 = vmin.f32 %v1540, %v1548
    %v1557 = vmin.f32 %v1541, %v1549
    %v1558 = vmin.f32 %v1542, %v1550
    %v1559 = vmin.f32 %v1543, %v1551
    %v1560 = vmin.f32 %v1544, %v1552
    %1561 = vrot.lane.b32.xlu0 %v1377, 1
    %v1562 = vpop.permute.xlu0 %1561
    %1563 = vrot.lane.b32.xlu0 %v1378, 1
    %v1564 = vpop.permute.xlu0 %1563
    %1565 = vrot.lane.b32.xlu0 %v1379, 1
    %v1566 = vpop.permute.xlu0 %1565
    %1567 = vrot.lane.b32.xlu0 %v1380, 1
    %v1568 = vpop.permute.xlu0 %1567
    %1569 = vrot.lane.b32.xlu0 %v1381, 1
    %v1570 = vpop.permute.xlu0 %1569
    %1571 = vrot.lane.b32.xlu0 %v1382, 1
    %v1572 = vpop.permute.xlu0 %1571
    %1573 = vrot.lane.b32.xlu0 %v1383, 1
    %v1574 = vpop.permute.xlu0 %1573
    %1575 = vrot.lane.b32.xlu0 %v1384, 1
    %v1576 = vpop.permute.xlu0 %1575
    %v1577 = vsel %vm109, %v1562, inf
    %v1578 = vsel %vm109, %v1564, inf
    %v1579 = vsel %vm109, %v1566, inf
    %v1580 = vsel %vm109, %v1568, inf
    %v1581 = vsel %vm109, %v1570, inf
    %v1582 = vsel %vm109, %v1572, inf
    %v1583 = vsel %vm109, %v1574, inf
    %v1584 = vsel %vm109, %v1576, inf
    %v1585 = vmin.f32 %v1577, %v1377
    %v1586 = vmin.f32 %v1578, %v1378
    %v1587 = vmin.f32 %v1579, %v1379
    %v1588 = vmin.f32 %v1580, %v1380
    %v1589 = vmin.f32 %v1581, %v1381
    %v1590 = vmin.f32 %v1582, %v1382
    %v1591 = vmin.f32 %v1583, %v1383
    %v1592 = vmin.f32 %v1584, %v1384
    %1593 = vrot.lane.b32.xlu0 %v1377, 127
    %v1594 = vpop.permute.xlu0 %1593
    %1595 = vrot.lane.b32.xlu0 %v1378, 127
    %v1596 = vpop.permute.xlu0 %1595
    %1597 = vrot.lane.b32.xlu0 %v1379, 127
    %v1598 = vpop.permute.xlu0 %1597
    %1599 = vrot.lane.b32.xlu0 %v1380, 127
    %v1600 = vpop.permute.xlu0 %1599
    %1601 = vrot.lane.b32.xlu0 %v1381, 127
    %v1602 = vpop.permute.xlu0 %1601
    %1603 = vrot.lane.b32.xlu0 %v1382, 127
    %v1604 = vpop.permute.xlu0 %1603
    %1605 = vrot.lane.b32.xlu0 %v1383, 127
    %v1606 = vpop.permute.xlu0 %1605
    %1607 = vrot.lane.b32.xlu0 %v1384, 127
    %v1608 = vpop.permute.xlu0 %1607
    %v1609 = vsel %vm110, %v1594, inf
    %v1610 = vsel %vm110, %v1596, inf
    %v1611 = vsel %vm110, %v1598, inf
    %v1612 = vsel %vm110, %v1600, inf
    %v1613 = vsel %vm110, %v1602, inf
    %v1614 = vsel %vm110, %v1604, inf
    %v1615 = vsel %vm110, %v1606, inf
    %v1616 = vsel %vm110, %v1608, inf
    %v1617 = vmin.f32 %v1585, %v1609
    %v1618 = vmin.f32 %v1586, %v1610
    %v1619 = vmin.f32 %v1587, %v1611
    %v1620 = vmin.f32 %v1588, %v1612
    %v1621 = vmin.f32 %v1589, %v1613
    %v1622 = vmin.f32 %v1590, %v1614
    %v1623 = vmin.f32 %v1591, %v1615
    %v1624 = vmin.f32 %v1592, %v1616
    %v1625 = vmin.f32 %v1553, %v1617
    %v1626 = vmin.f32 %v1554, %v1618
    %v1627 = vmin.f32 %v1555, %v1619
    %v1628 = vmin.f32 %v1556, %v1620
    %v1629 = vmin.f32 %v1557, %v1621
    %v1630 = vmin.f32 %v1558, %v1622
    %v1631 = vmin.f32 %v1559, %v1623
    %v1632 = vmin.f32 %v1560, %v1624
    %v1633 = vrot.slane %v1625, 7
    %v1634 = vrot.slane %v1626, 7
    %v1635 = vrot.slane %v1627, 7
    %v1636 = vrot.slane %v1628, 7
    %v1637 = vrot.slane %v1629, 7
    %v1638 = vrot.slane %v1630, 7
    %v1639 = vrot.slane %v1631, 7
    %v1640 = vrot.slane %v1632, 7
    %v1641 = vsel %vm135, %v1639, %v1640
    %v1642 = vsel %vm135, %v1638, %v1639
    %v1643 = vsel %vm135, %v1637, %v1638
    %v1644 = vsel %vm135, %v1636, %v1637
    %v1645 = vsel %vm135, %v1635, %v1636
    %v1646 = vsel %vm135, %v1634, %v1635
    %v1647 = vsel %vm135, %v1633, %v1634
    %v1648 = vsel %vm135, %v1640, %v1633
    %v1649 = vsel %vm91, %v1648, -inf
    %v1650 = vsel %vm92, %v1647, -inf
    %v1651 = vsel %vm93, %v1646, -inf
    %v1652 = vsel %vm94, %v1645, -inf
    %v1653 = vsel %vm95, %v1644, -inf
    %v1654 = vsel %vm96, %v1643, -inf
    %v1655 = vsel %vm97, %v1642, -inf
    %v1656 = vsel %vm98, %v1641, -inf
    %v1657 = vmax.f32 %v1649, %v1625
    %v1658 = vmax.f32 %v1650, %v1626
    %v1659 = vmax.f32 %v1651, %v1627
    %v1660 = vmax.f32 %v1652, %v1628
    %v1661 = vmax.f32 %v1653, %v1629
    %v1662 = vmax.f32 %v1654, %v1630
    %v1663 = vmax.f32 %v1655, %v1631
    %v1664 = vmax.f32 %v1656, %v1632
    %v1665 = vrot.slane %v1625, 1
    %v1666 = vrot.slane %v1626, 1
    %v1667 = vrot.slane %v1627, 1
    %v1668 = vrot.slane %v1628, 1
    %v1669 = vrot.slane %v1629, 1
    %v1670 = vrot.slane %v1630, 1
    %v1671 = vrot.slane %v1631, 1
    %v1672 = vrot.slane %v1632, 1
    %v1673 = vsel %vm168, %v1671, %v1672
    %v1674 = vsel %vm168, %v1670, %v1671
    %v1675 = vsel %vm168, %v1669, %v1670
    %v1676 = vsel %vm168, %v1668, %v1669
    %v1677 = vsel %vm168, %v1667, %v1668
    %v1678 = vsel %vm168, %v1666, %v1667
    %v1679 = vsel %vm168, %v1665, %v1666
    %v1680 = vsel %vm168, %v1672, %v1665
    %v1681 = vsel %vm99, %v1679, -inf
    %v1682 = vsel %vm100, %v1678, -inf
    %v1683 = vsel %vm101, %v1677, -inf
    %v1684 = vsel %vm102, %v1676, -inf
    %v1685 = vsel %vm103, %v1675, -inf
    %v1686 = vsel %vm104, %v1674, -inf
    %v1687 = vsel %vm105, %v1673, -inf
    %v1688 = vsel %vm106, %v1680, -inf
    %v1689 = vmax.f32 %v1657, %v1681
    %v1690 = vmax.f32 %v1658, %v1682
    %v1691 = vmax.f32 %v1659, %v1683
    %v1692 = vmax.f32 %v1660, %v1684
    %v1693 = vmax.f32 %v1661, %v1685
    %v1694 = vmax.f32 %v1662, %v1686
    %v1695 = vmax.f32 %v1663, %v1687
    %v1696 = vmax.f32 %v1664, %v1688
    %1697 = vrot.lane.b32.xlu0 %v1689, 1
    %v1698 = vpop.permute.xlu0 %1697
    %1699 = vrot.lane.b32.xlu0 %v1690, 1
    %v1700 = vpop.permute.xlu0 %1699
    %1701 = vrot.lane.b32.xlu0 %v1691, 1
    %v1702 = vpop.permute.xlu0 %1701
    %1703 = vrot.lane.b32.xlu0 %v1692, 1
    %v1704 = vpop.permute.xlu0 %1703
    %1705 = vrot.lane.b32.xlu0 %v1693, 1
    %v1706 = vpop.permute.xlu0 %1705
    %1707 = vrot.lane.b32.xlu0 %v1694, 1
    %v1708 = vpop.permute.xlu0 %1707
    %1709 = vrot.lane.b32.xlu0 %v1695, 1
    %v1710 = vpop.permute.xlu0 %1709
    %1711 = vrot.lane.b32.xlu0 %v1696, 1
    %v1712 = vpop.permute.xlu0 %1711
    %v1713 = vsel %vm109, %v1698, -inf
    %v1714 = vsel %vm109, %v1700, -inf
    %v1715 = vsel %vm109, %v1702, -inf
    %v1716 = vsel %vm109, %v1704, -inf
    %v1717 = vsel %vm109, %v1706, -inf
    %v1718 = vsel %vm109, %v1708, -inf
    %v1719 = vsel %vm109, %v1710, -inf
    %v1720 = vsel %vm109, %v1712, -inf
    %v1721 = vmax.f32 %v1713, %v1689
    %v1722 = vmax.f32 %v1714, %v1690
    %v1723 = vmax.f32 %v1715, %v1691
    %v1724 = vmax.f32 %v1716, %v1692
    %v1725 = vmax.f32 %v1717, %v1693
    %v1726 = vmax.f32 %v1718, %v1694
    %v1727 = vmax.f32 %v1719, %v1695
    %v1728 = vmax.f32 %v1720, %v1696
    %1729 = vrot.lane.b32.xlu0 %v1689, 127
    %v1730 = vpop.permute.xlu0 %1729
    %1731 = vrot.lane.b32.xlu0 %v1690, 127
    %v1732 = vpop.permute.xlu0 %1731
    %1733 = vrot.lane.b32.xlu0 %v1691, 127
    %v1734 = vpop.permute.xlu0 %1733
    %1735 = vrot.lane.b32.xlu0 %v1692, 127
    %v1736 = vpop.permute.xlu0 %1735
    %1737 = vrot.lane.b32.xlu0 %v1693, 127
    %v1738 = vpop.permute.xlu0 %1737
    %1739 = vrot.lane.b32.xlu0 %v1694, 127
    %v1740 = vpop.permute.xlu0 %1739
    %1741 = vrot.lane.b32.xlu0 %v1695, 127
    %v1742 = vpop.permute.xlu0 %1741
    %1743 = vrot.lane.b32.xlu0 %v1696, 127
    %v1744 = vpop.permute.xlu0 %1743
    %v1745 = vsel %vm110, %v1730, -inf
    %v1746 = vsel %vm110, %v1732, -inf
    %v1747 = vsel %vm110, %v1734, -inf
    %v1748 = vsel %vm110, %v1736, -inf
    %v1749 = vsel %vm110, %v1738, -inf
    %v1750 = vsel %vm110, %v1740, -inf
    %v1751 = vsel %vm110, %v1742, -inf
    %v1752 = vsel %vm110, %v1744, -inf
    %v1753 = vmax.f32 %v1721, %v1745
    %v1754 = vmax.f32 %v1722, %v1746
    %v1755 = vmax.f32 %v1723, %v1747
    %v1756 = vmax.f32 %v1724, %v1748
    %v1757 = vmax.f32 %v1725, %v1749
    %v1758 = vmax.f32 %v1726, %v1750
    %v1759 = vmax.f32 %v1727, %v1751
    %v1760 = vmax.f32 %v1728, %v1752
    %v1761 = vsub.f32 %v1377, %v1753
    %v1762 = vsub.f32 %v1378, %v1754
    %v1763 = vsub.f32 %v1379, %v1755
    %v1764 = vsub.f32 %v1380, %v1756
    %v1765 = vsub.f32 %v1381, %v1757
    %v1766 = vsub.f32 %v1382, %v1758
    %v1767 = vsub.f32 %v1383, %v1759
    %v1768 = vsub.f32 %v1384, %v1760
    %v1769 = vmax.f32 %v1761, 0.0
    %v1770 = vmax.f32 %v1762, 0.0
    %v1771 = vmax.f32 %v1763, 0.0
    %v1772 = vmax.f32 %v1764, 0.0
    %v1773 = vmax.f32 %v1765, 0.0
    %v1774 = vmax.f32 %v1766, 0.0
    %v1775 = vmax.f32 %v1767, 0.0
    %v1776 = vmax.f32 %v1768, 0.0
    %v1777 = vmul.f32 %v1521, %v1769
    %v1778 = vmul.f32 %v1522, %v1770
    %v1779 = vmul.f32 %v1523, %v1771
    %v1780 = vmul.f32 %v1524, %v1772
    %v1781 = vmul.f32 %v1525, %v1773
    %v1782 = vmul.f32 %v1526, %v1774
    %v1783 = vmul.f32 %v1527, %v1775
    %v1784 = vmul.f32 %v1528, %v1776
    %v1785 = vsub.f32 %v1769, %v1777
    %v1786 = vsub.f32 %v1770, %v1778
    %v1787 = vsub.f32 %v1771, %v1779
    %v1788 = vsub.f32 %v1772, %v1780
    %v1789 = vsub.f32 %v1773, %v1781
    %v1790 = vsub.f32 %v1774, %v1782
    %v1791 = vsub.f32 %v1775, %v1783
    %v1792 = vsub.f32 %v1776, %v1784
    %v1793 = vmax.f32 %v1785, 0.0
    %v1794 = vmax.f32 %v1786, 0.0
    %v1795 = vmax.f32 %v1787, 0.0
    %v1796 = vmax.f32 %v1788, 0.0
    %v1797 = vmax.f32 %v1789, 0.0
    %v1798 = vmax.f32 %v1790, 0.0
    %v1799 = vmax.f32 %v1791, 0.0
    %v1800 = vmax.f32 %v1792, 0.0
    %v1801 = vadd.f32 %v1521, %v1793
    %v1802 = vadd.f32 %v1522, %v1794
    %v1803 = vadd.f32 %v1523, %v1795
    %v1804 = vadd.f32 %v1524, %v1796
    %v1805 = vadd.f32 %v1525, %v1797
    %v1806 = vadd.f32 %v1526, %v1798
    %v1807 = vadd.f32 %v1527, %v1799
    %v1808 = vadd.f32 %v1528, %v1800
    %v1809 = vsel %vm91, %v1648, inf
    %v1810 = vsel %vm92, %v1647, inf
    %v1811 = vsel %vm93, %v1646, inf
    %v1812 = vsel %vm94, %v1645, inf
    %v1813 = vsel %vm95, %v1644, inf
    %v1814 = vsel %vm96, %v1643, inf
    %v1815 = vsel %vm97, %v1642, inf
    %v1816 = vsel %vm98, %v1641, inf
    %v1817 = vmin.f32 %v1809, %v1625
    %v1818 = vmin.f32 %v1810, %v1626
    %v1819 = vmin.f32 %v1811, %v1627
    %v1820 = vmin.f32 %v1812, %v1628
    %v1821 = vmin.f32 %v1813, %v1629
    %v1822 = vmin.f32 %v1814, %v1630
    %v1823 = vmin.f32 %v1815, %v1631
    %v1824 = vmin.f32 %v1816, %v1632
    %v1825 = vsel %vm99, %v1679, inf
    %v1826 = vsel %vm100, %v1678, inf
    %v1827 = vsel %vm101, %v1677, inf
    %v1828 = vsel %vm102, %v1676, inf
    %v1829 = vsel %vm103, %v1675, inf
    %v1830 = vsel %vm104, %v1674, inf
    %v1831 = vsel %vm105, %v1673, inf
    %v1832 = vsel %vm106, %v1680, inf
    %v1833 = vmin.f32 %v1817, %v1825
    %v1834 = vmin.f32 %v1818, %v1826
    %v1835 = vmin.f32 %v1819, %v1827
    %v1836 = vmin.f32 %v1820, %v1828
    %v1837 = vmin.f32 %v1821, %v1829
    %v1838 = vmin.f32 %v1822, %v1830
    %v1839 = vmin.f32 %v1823, %v1831
    %v1840 = vmin.f32 %v1824, %v1832
    %1841 = vrot.lane.b32.xlu0 %v1625, 1
    %v1842 = vpop.permute.xlu0 %1841
    %1843 = vrot.lane.b32.xlu0 %v1626, 1
    %v1844 = vpop.permute.xlu0 %1843
    %1845 = vrot.lane.b32.xlu0 %v1627, 1
    %v1846 = vpop.permute.xlu0 %1845
    %1847 = vrot.lane.b32.xlu0 %v1628, 1
    %v1848 = vpop.permute.xlu0 %1847
    %1849 = vrot.lane.b32.xlu0 %v1629, 1
    %v1850 = vpop.permute.xlu0 %1849
    %1851 = vrot.lane.b32.xlu0 %v1630, 1
    %v1852 = vpop.permute.xlu0 %1851
    %1853 = vrot.lane.b32.xlu0 %v1631, 1
    %v1854 = vpop.permute.xlu0 %1853
    %1855 = vrot.lane.b32.xlu0 %v1632, 1
    %v1856 = vpop.permute.xlu0 %1855
    %v1857 = vsel %vm109, %v1842, inf
    %v1858 = vsel %vm109, %v1844, inf
    %v1859 = vsel %vm109, %v1846, inf
    %v1860 = vsel %vm109, %v1848, inf
    %v1861 = vsel %vm109, %v1850, inf
    %v1862 = vsel %vm109, %v1852, inf
    %v1863 = vsel %vm109, %v1854, inf
    %v1864 = vsel %vm109, %v1856, inf
    %v1865 = vmin.f32 %v1857, %v1625
    %v1866 = vmin.f32 %v1858, %v1626
    %v1867 = vmin.f32 %v1859, %v1627
    %v1868 = vmin.f32 %v1860, %v1628
    %v1869 = vmin.f32 %v1861, %v1629
    %v1870 = vmin.f32 %v1862, %v1630
    %v1871 = vmin.f32 %v1863, %v1631
    %v1872 = vmin.f32 %v1864, %v1632
    %1873 = vrot.lane.b32.xlu0 %v1625, 127
    %v1874 = vpop.permute.xlu0 %1873
    %1875 = vrot.lane.b32.xlu0 %v1626, 127
    %v1876 = vpop.permute.xlu0 %1875
    %1877 = vrot.lane.b32.xlu0 %v1627, 127
    %v1878 = vpop.permute.xlu0 %1877
    %1879 = vrot.lane.b32.xlu0 %v1628, 127
    %v1880 = vpop.permute.xlu0 %1879
    %1881 = vrot.lane.b32.xlu0 %v1629, 127
    %v1882 = vpop.permute.xlu0 %1881
    %1883 = vrot.lane.b32.xlu0 %v1630, 127
    %v1884 = vpop.permute.xlu0 %1883
    %1885 = vrot.lane.b32.xlu0 %v1631, 127
    %v1886 = vpop.permute.xlu0 %1885
    %1887 = vrot.lane.b32.xlu0 %v1632, 127
    %v1888 = vpop.permute.xlu0 %1887
    %v1889 = vsel %vm110, %v1874, inf
    %v1890 = vsel %vm110, %v1876, inf
    %v1891 = vsel %vm110, %v1878, inf
    %v1892 = vsel %vm110, %v1880, inf
    %v1893 = vsel %vm110, %v1882, inf
    %v1894 = vsel %vm110, %v1884, inf
    %v1895 = vsel %vm110, %v1886, inf
    %v1896 = vsel %vm110, %v1888, inf
    %v1897 = vmin.f32 %v1865, %v1889
    %v1898 = vmin.f32 %v1866, %v1890
    %v1899 = vmin.f32 %v1867, %v1891
    %v1900 = vmin.f32 %v1868, %v1892
    %v1901 = vmin.f32 %v1869, %v1893
    %v1902 = vmin.f32 %v1870, %v1894
    %v1903 = vmin.f32 %v1871, %v1895
    %v1904 = vmin.f32 %v1872, %v1896
    %v1905 = vmin.f32 %v1833, %v1897
    %v1906 = vmin.f32 %v1834, %v1898
    %v1907 = vmin.f32 %v1835, %v1899
    %v1908 = vmin.f32 %v1836, %v1900
    %v1909 = vmin.f32 %v1837, %v1901
    %v1910 = vmin.f32 %v1838, %v1902
    %v1911 = vmin.f32 %v1839, %v1903
    %v1912 = vmin.f32 %v1840, %v1904
    %v1913 = vrot.slane %v1905, 7
    %v1914 = vrot.slane %v1906, 7
    %v1915 = vrot.slane %v1907, 7
    %v1916 = vrot.slane %v1908, 7
    %v1917 = vrot.slane %v1909, 7
    %v1918 = vrot.slane %v1910, 7
    %v1919 = vrot.slane %v1911, 7
    %v1920 = vrot.slane %v1912, 7
    %v1921 = vsel %vm135, %v1919, %v1920
    %v1922 = vsel %vm135, %v1918, %v1919
    %v1923 = vsel %vm135, %v1917, %v1918
    %v1924 = vsel %vm135, %v1916, %v1917
    %v1925 = vsel %vm135, %v1915, %v1916
    %v1926 = vsel %vm135, %v1914, %v1915
    %v1927 = vsel %vm135, %v1913, %v1914
    %v1928 = vsel %vm135, %v1920, %v1913
    %v1929 = vsel %vm91, %v1928, -inf
    %v1930 = vsel %vm92, %v1927, -inf
    %v1931 = vsel %vm93, %v1926, -inf
    %v1932 = vsel %vm94, %v1925, -inf
    %v1933 = vsel %vm95, %v1924, -inf
    %v1934 = vsel %vm96, %v1923, -inf
    %v1935 = vsel %vm97, %v1922, -inf
    %v1936 = vsel %vm98, %v1921, -inf
    %v1937 = vmax.f32 %v1929, %v1905
    %v1938 = vmax.f32 %v1930, %v1906
    %v1939 = vmax.f32 %v1931, %v1907
    %v1940 = vmax.f32 %v1932, %v1908
    %v1941 = vmax.f32 %v1933, %v1909
    %v1942 = vmax.f32 %v1934, %v1910
    %v1943 = vmax.f32 %v1935, %v1911
    %v1944 = vmax.f32 %v1936, %v1912
    %v1945 = vrot.slane %v1905, 1
    %v1946 = vrot.slane %v1906, 1
    %v1947 = vrot.slane %v1907, 1
    %v1948 = vrot.slane %v1908, 1
    %v1949 = vrot.slane %v1909, 1
    %v1950 = vrot.slane %v1910, 1
    %v1951 = vrot.slane %v1911, 1
    %v1952 = vrot.slane %v1912, 1
    %v1953 = vsel %vm168, %v1951, %v1952
    %v1954 = vsel %vm168, %v1950, %v1951
    %v1955 = vsel %vm168, %v1949, %v1950
    %v1956 = vsel %vm168, %v1948, %v1949
    %v1957 = vsel %vm168, %v1947, %v1948
    %v1958 = vsel %vm168, %v1946, %v1947
    %v1959 = vsel %vm168, %v1945, %v1946
    %v1960 = vsel %vm168, %v1952, %v1945
    %v1961 = vsel %vm99, %v1959, -inf
    %v1962 = vsel %vm100, %v1958, -inf
    %v1963 = vsel %vm101, %v1957, -inf
    %v1964 = vsel %vm102, %v1956, -inf
    %v1965 = vsel %vm103, %v1955, -inf
    %v1966 = vsel %vm104, %v1954, -inf
    %v1967 = vsel %vm105, %v1953, -inf
    %v1968 = vsel %vm106, %v1960, -inf
    %v1969 = vmax.f32 %v1937, %v1961
    %v1970 = vmax.f32 %v1938, %v1962
    %v1971 = vmax.f32 %v1939, %v1963
    %v1972 = vmax.f32 %v1940, %v1964
    %v1973 = vmax.f32 %v1941, %v1965
    %v1974 = vmax.f32 %v1942, %v1966
    %v1975 = vmax.f32 %v1943, %v1967
    %v1976 = vmax.f32 %v1944, %v1968
    %1977 = vrot.lane.b32.xlu0 %v1969, 1
    %v1978 = vpop.permute.xlu0 %1977
    %1979 = vrot.lane.b32.xlu0 %v1970, 1
    %v1980 = vpop.permute.xlu0 %1979
    %1981 = vrot.lane.b32.xlu0 %v1971, 1
    %v1982 = vpop.permute.xlu0 %1981
    %1983 = vrot.lane.b32.xlu0 %v1972, 1
    %v1984 = vpop.permute.xlu0 %1983
    %1985 = vrot.lane.b32.xlu0 %v1973, 1
    %v1986 = vpop.permute.xlu0 %1985
    %1987 = vrot.lane.b32.xlu0 %v1974, 1
    %v1988 = vpop.permute.xlu0 %1987
    %1989 = vrot.lane.b32.xlu0 %v1975, 1
    %v1990 = vpop.permute.xlu0 %1989
    %1991 = vrot.lane.b32.xlu0 %v1976, 1
    %v1992 = vpop.permute.xlu0 %1991
    %v1993 = vsel %vm109, %v1978, -inf
    %v1994 = vsel %vm109, %v1980, -inf
    %v1995 = vsel %vm109, %v1982, -inf
    %v1996 = vsel %vm109, %v1984, -inf
    %v1997 = vsel %vm109, %v1986, -inf
    %v1998 = vsel %vm109, %v1988, -inf
    %v1999 = vsel %vm109, %v1990, -inf
    %v2000 = vsel %vm109, %v1992, -inf
    %v2001 = vmax.f32 %v1993, %v1969
    %v2002 = vmax.f32 %v1994, %v1970
    %v2003 = vmax.f32 %v1995, %v1971
    %v2004 = vmax.f32 %v1996, %v1972
    %v2005 = vmax.f32 %v1997, %v1973
    %v2006 = vmax.f32 %v1998, %v1974
    %v2007 = vmax.f32 %v1999, %v1975
    %v2008 = vmax.f32 %v2000, %v1976
    %2009 = vrot.lane.b32.xlu0 %v1969, 127
    %v2010 = vpop.permute.xlu0 %2009
    %2011 = vrot.lane.b32.xlu0 %v1970, 127
    %v2012 = vpop.permute.xlu0 %2011
    %2013 = vrot.lane.b32.xlu0 %v1971, 127
    %v2014 = vpop.permute.xlu0 %2013
    %2015 = vrot.lane.b32.xlu0 %v1972, 127
    %v2016 = vpop.permute.xlu0 %2015
    %2017 = vrot.lane.b32.xlu0 %v1973, 127
    %v2018 = vpop.permute.xlu0 %2017
    %2019 = vrot.lane.b32.xlu0 %v1974, 127
    %v2020 = vpop.permute.xlu0 %2019
    %2021 = vrot.lane.b32.xlu0 %v1975, 127
    %v2022 = vpop.permute.xlu0 %2021
    %2023 = vrot.lane.b32.xlu0 %v1976, 127
    %v2024 = vpop.permute.xlu0 %2023
    %v2025 = vsel %vm110, %v2010, -inf
    %v2026 = vsel %vm110, %v2012, -inf
    %v2027 = vsel %vm110, %v2014, -inf
    %v2028 = vsel %vm110, %v2016, -inf
    %v2029 = vsel %vm110, %v2018, -inf
    %v2030 = vsel %vm110, %v2020, -inf
    %v2031 = vsel %vm110, %v2022, -inf
    %v2032 = vsel %vm110, %v2024, -inf
    %v2033 = vmax.f32 %v2001, %v2025
    %v2034 = vmax.f32 %v2002, %v2026
    %v2035 = vmax.f32 %v2003, %v2027
    %v2036 = vmax.f32 %v2004, %v2028
    %v2037 = vmax.f32 %v2005, %v2029
    %v2038 = vmax.f32 %v2006, %v2030
    %v2039 = vmax.f32 %v2007, %v2031
    %v2040 = vmax.f32 %v2008, %v2032
    %v2041 = vsub.f32 %v1625, %v2033
    %v2042 = vsub.f32 %v1626, %v2034
    %v2043 = vsub.f32 %v1627, %v2035
    %v2044 = vsub.f32 %v1628, %v2036
    %v2045 = vsub.f32 %v1629, %v2037
    %v2046 = vsub.f32 %v1630, %v2038
    %v2047 = vsub.f32 %v1631, %v2039
    %v2048 = vsub.f32 %v1632, %v2040
    %v2049 = vmax.f32 %v2041, 0.0
    %v2050 = vmax.f32 %v2042, 0.0
    %v2051 = vmax.f32 %v2043, 0.0
    %v2052 = vmax.f32 %v2044, 0.0
    %v2053 = vmax.f32 %v2045, 0.0
    %v2054 = vmax.f32 %v2046, 0.0
    %v2055 = vmax.f32 %v2047, 0.0
    %v2056 = vmax.f32 %v2048, 0.0
    %v2057 = vmul.f32 %v1801, %v2049
    %v2058 = vmul.f32 %v1802, %v2050
    %v2059 = vmul.f32 %v1803, %v2051
    %v2060 = vmul.f32 %v1804, %v2052
    %v2061 = vmul.f32 %v1805, %v2053
    %v2062 = vmul.f32 %v1806, %v2054
    %v2063 = vmul.f32 %v1807, %v2055
    %v2064 = vmul.f32 %v1808, %v2056
    %v2065 = vsub.f32 %v2049, %v2057
    %v2066 = vsub.f32 %v2050, %v2058
    %v2067 = vsub.f32 %v2051, %v2059
    %v2068 = vsub.f32 %v2052, %v2060
    %v2069 = vsub.f32 %v2053, %v2061
    %v2070 = vsub.f32 %v2054, %v2062
    %v2071 = vsub.f32 %v2055, %v2063
    %v2072 = vsub.f32 %v2056, %v2064
    %v2073 = vmax.f32 %v2065, 0.0
    %v2074 = vmax.f32 %v2066, 0.0
    %v2075 = vmax.f32 %v2067, 0.0
    %v2076 = vmax.f32 %v2068, 0.0
    %v2077 = vmax.f32 %v2069, 0.0
    %v2078 = vmax.f32 %v2070, 0.0
    %v2079 = vmax.f32 %v2071, 0.0
    %v2080 = vmax.f32 %v2072, 0.0
    %v2081 = vadd.f32 %v1801, %v2073
    %v2082 = vadd.f32 %v1802, %v2074
    %v2083 = vadd.f32 %v1803, %v2075
    %v2084 = vadd.f32 %v1804, %v2076
    %v2085 = vadd.f32 %v1805, %v2077
    %v2086 = vadd.f32 %v1806, %v2078
    %v2087 = vadd.f32 %v1807, %v2079
    %v2088 = vadd.f32 %v1808, %v2080
    %v2089 = vsel %vm91, %v1928, inf
    %v2090 = vsel %vm92, %v1927, inf
    %v2091 = vsel %vm93, %v1926, inf
    %v2092 = vsel %vm94, %v1925, inf
    %v2093 = vsel %vm95, %v1924, inf
    %v2094 = vsel %vm96, %v1923, inf
    %v2095 = vsel %vm97, %v1922, inf
    %v2096 = vsel %vm98, %v1921, inf
    %v2097 = vmin.f32 %v2089, %v1905
    %v2098 = vmin.f32 %v2090, %v1906
    %v2099 = vmin.f32 %v2091, %v1907
    %v2100 = vmin.f32 %v2092, %v1908
    %v2101 = vmin.f32 %v2093, %v1909
    %v2102 = vmin.f32 %v2094, %v1910
    %v2103 = vmin.f32 %v2095, %v1911
    %v2104 = vmin.f32 %v2096, %v1912
    %v2105 = vsel %vm99, %v1959, inf
    %v2106 = vsel %vm100, %v1958, inf
    %v2107 = vsel %vm101, %v1957, inf
    %v2108 = vsel %vm102, %v1956, inf
    %v2109 = vsel %vm103, %v1955, inf
    %v2110 = vsel %vm104, %v1954, inf
    %v2111 = vsel %vm105, %v1953, inf
    %v2112 = vsel %vm106, %v1960, inf
    %v2113 = vmin.f32 %v2097, %v2105
    %v2114 = vmin.f32 %v2098, %v2106
    %v2115 = vmin.f32 %v2099, %v2107
    %v2116 = vmin.f32 %v2100, %v2108
    %v2117 = vmin.f32 %v2101, %v2109
    %v2118 = vmin.f32 %v2102, %v2110
    %v2119 = vmin.f32 %v2103, %v2111
    %v2120 = vmin.f32 %v2104, %v2112
    %2121 = vrot.lane.b32.xlu0 %v1905, 1
    %v2122 = vpop.permute.xlu0 %2121
    %2123 = vrot.lane.b32.xlu0 %v1906, 1
    %v2124 = vpop.permute.xlu0 %2123
    %2125 = vrot.lane.b32.xlu0 %v1907, 1
    %v2126 = vpop.permute.xlu0 %2125
    %2127 = vrot.lane.b32.xlu0 %v1908, 1
    %v2128 = vpop.permute.xlu0 %2127
    %2129 = vrot.lane.b32.xlu0 %v1909, 1
    %v2130 = vpop.permute.xlu0 %2129
    %2131 = vrot.lane.b32.xlu0 %v1910, 1
    %v2132 = vpop.permute.xlu0 %2131
    %2133 = vrot.lane.b32.xlu0 %v1911, 1
    %v2134 = vpop.permute.xlu0 %2133
    %2135 = vrot.lane.b32.xlu0 %v1912, 1
    %v2136 = vpop.permute.xlu0 %2135
    %v2137 = vsel %vm109, %v2122, inf
    %v2138 = vsel %vm109, %v2124, inf
    %v2139 = vsel %vm109, %v2126, inf
    %v2140 = vsel %vm109, %v2128, inf
    %v2141 = vsel %vm109, %v2130, inf
    %v2142 = vsel %vm109, %v2132, inf
    %v2143 = vsel %vm109, %v2134, inf
    %v2144 = vsel %vm109, %v2136, inf
    %v2145 = vmin.f32 %v2137, %v1905
    %v2146 = vmin.f32 %v2138, %v1906
    %v2147 = vmin.f32 %v2139, %v1907
    %v2148 = vmin.f32 %v2140, %v1908
    %v2149 = vmin.f32 %v2141, %v1909
    %v2150 = vmin.f32 %v2142, %v1910
    %v2151 = vmin.f32 %v2143, %v1911
    %v2152 = vmin.f32 %v2144, %v1912
    %2153 = vrot.lane.b32.xlu0 %v1905, 127
    %v2154 = vpop.permute.xlu0 %2153
    %2155 = vrot.lane.b32.xlu0 %v1906, 127
    %v2156 = vpop.permute.xlu0 %2155
    %2157 = vrot.lane.b32.xlu0 %v1907, 127
    %v2158 = vpop.permute.xlu0 %2157
    %2159 = vrot.lane.b32.xlu0 %v1908, 127
    %v2160 = vpop.permute.xlu0 %2159
    %2161 = vrot.lane.b32.xlu0 %v1909, 127
    %v2162 = vpop.permute.xlu0 %2161
    %2163 = vrot.lane.b32.xlu0 %v1910, 127
    %v2164 = vpop.permute.xlu0 %2163
    %2165 = vrot.lane.b32.xlu0 %v1911, 127
    %v2166 = vpop.permute.xlu0 %2165
    %2167 = vrot.lane.b32.xlu0 %v1912, 127
    %v2168 = vpop.permute.xlu0 %2167
    %v2169 = vsel %vm110, %v2154, inf
    %v2170 = vsel %vm110, %v2156, inf
    %v2171 = vsel %vm110, %v2158, inf
    %v2172 = vsel %vm110, %v2160, inf
    %v2173 = vsel %vm110, %v2162, inf
    %v2174 = vsel %vm110, %v2164, inf
    %v2175 = vsel %vm110, %v2166, inf
    %v2176 = vsel %vm110, %v2168, inf
    %v2177 = vmin.f32 %v2145, %v2169
    %v2178 = vmin.f32 %v2146, %v2170
    %v2179 = vmin.f32 %v2147, %v2171
    %v2180 = vmin.f32 %v2148, %v2172
    %v2181 = vmin.f32 %v2149, %v2173
    %v2182 = vmin.f32 %v2150, %v2174
    %v2183 = vmin.f32 %v2151, %v2175
    %v2184 = vmin.f32 %v2152, %v2176
    %v2185 = vmin.f32 %v2113, %v2177
    %v2186 = vmin.f32 %v2114, %v2178
    %v2187 = vmin.f32 %v2115, %v2179
    %v2188 = vmin.f32 %v2116, %v2180
    %v2189 = vmin.f32 %v2117, %v2181
    %v2190 = vmin.f32 %v2118, %v2182
    %v2191 = vmin.f32 %v2119, %v2183
    %v2192 = vmin.f32 %v2120, %v2184
    %v2193 = vrot.slane %v2185, 7
    %v2194 = vrot.slane %v2186, 7
    %v2195 = vrot.slane %v2187, 7
    %v2196 = vrot.slane %v2188, 7
    %v2197 = vrot.slane %v2189, 7
    %v2198 = vrot.slane %v2190, 7
    %v2199 = vrot.slane %v2191, 7
    %v2200 = vrot.slane %v2192, 7
    %v2201 = vsel %vm135, %v2199, %v2200
    %v2202 = vsel %vm135, %v2198, %v2199
    %v2203 = vsel %vm135, %v2197, %v2198
    %v2204 = vsel %vm135, %v2196, %v2197
    %v2205 = vsel %vm135, %v2195, %v2196
    %v2206 = vsel %vm135, %v2194, %v2195
    %v2207 = vsel %vm135, %v2193, %v2194
    %v2208 = vsel %vm135, %v2200, %v2193
    %v2209 = vsel %vm91, %v2208, -inf
    %v2210 = vsel %vm92, %v2207, -inf
    %v2211 = vsel %vm93, %v2206, -inf
    %v2212 = vsel %vm94, %v2205, -inf
    %v2213 = vsel %vm95, %v2204, -inf
    %v2214 = vsel %vm96, %v2203, -inf
    %v2215 = vsel %vm97, %v2202, -inf
    %v2216 = vsel %vm98, %v2201, -inf
    %v2217 = vmax.f32 %v2209, %v2185
    %v2218 = vmax.f32 %v2210, %v2186
    %v2219 = vmax.f32 %v2211, %v2187
    %v2220 = vmax.f32 %v2212, %v2188
    %v2221 = vmax.f32 %v2213, %v2189
    %v2222 = vmax.f32 %v2214, %v2190
    %v2223 = vmax.f32 %v2215, %v2191
    %v2224 = vmax.f32 %v2216, %v2192
    %v2225 = vrot.slane %v2185, 1
    %v2226 = vrot.slane %v2186, 1
    %v2227 = vrot.slane %v2187, 1
    %v2228 = vrot.slane %v2188, 1
    %v2229 = vrot.slane %v2189, 1
    %v2230 = vrot.slane %v2190, 1
    %v2231 = vrot.slane %v2191, 1
    %v2232 = vrot.slane %v2192, 1
    %v2233 = vsel %vm168, %v2231, %v2232
    %v2234 = vsel %vm168, %v2230, %v2231
    %v2235 = vsel %vm168, %v2229, %v2230
    %v2236 = vsel %vm168, %v2228, %v2229
    %v2237 = vsel %vm168, %v2227, %v2228
    %v2238 = vsel %vm168, %v2226, %v2227
    %v2239 = vsel %vm168, %v2225, %v2226
    %v2240 = vsel %vm168, %v2232, %v2225
    %v2241 = vsel %vm99, %v2239, -inf
    %v2242 = vsel %vm100, %v2238, -inf
    %v2243 = vsel %vm101, %v2237, -inf
    %v2244 = vsel %vm102, %v2236, -inf
    %v2245 = vsel %vm103, %v2235, -inf
    %v2246 = vsel %vm104, %v2234, -inf
    %v2247 = vsel %vm105, %v2233, -inf
    %v2248 = vsel %vm106, %v2240, -inf
    %v2249 = vmax.f32 %v2217, %v2241
    %v2250 = vmax.f32 %v2218, %v2242
    %v2251 = vmax.f32 %v2219, %v2243
    %v2252 = vmax.f32 %v2220, %v2244
    %v2253 = vmax.f32 %v2221, %v2245
    %v2254 = vmax.f32 %v2222, %v2246
    %v2255 = vmax.f32 %v2223, %v2247
    %v2256 = vmax.f32 %v2224, %v2248
    %2257 = vrot.lane.b32.xlu0 %v2249, 1
    %v2258 = vpop.permute.xlu0 %2257
    %2259 = vrot.lane.b32.xlu0 %v2250, 1
    %v2260 = vpop.permute.xlu0 %2259
    %2261 = vrot.lane.b32.xlu0 %v2251, 1
    %v2262 = vpop.permute.xlu0 %2261
    %2263 = vrot.lane.b32.xlu0 %v2252, 1
    %v2264 = vpop.permute.xlu0 %2263
    %2265 = vrot.lane.b32.xlu0 %v2253, 1
    %v2266 = vpop.permute.xlu0 %2265
    %2267 = vrot.lane.b32.xlu0 %v2254, 1
    %v2268 = vpop.permute.xlu0 %2267
    %2269 = vrot.lane.b32.xlu0 %v2255, 1
    %v2270 = vpop.permute.xlu0 %2269
    %2271 = vrot.lane.b32.xlu0 %v2256, 1
    %v2272 = vpop.permute.xlu0 %2271
    %v2273 = vsel %vm109, %v2258, -inf
    %v2274 = vsel %vm109, %v2260, -inf
    %v2275 = vsel %vm109, %v2262, -inf
    %v2276 = vsel %vm109, %v2264, -inf
    %v2277 = vsel %vm109, %v2266, -inf
    %v2278 = vsel %vm109, %v2268, -inf
    %v2279 = vsel %vm109, %v2270, -inf
    %v2280 = vsel %vm109, %v2272, -inf
    %v2281 = vmax.f32 %v2273, %v2249
    %v2282 = vmax.f32 %v2274, %v2250
    %v2283 = vmax.f32 %v2275, %v2251
    %v2284 = vmax.f32 %v2276, %v2252
    %v2285 = vmax.f32 %v2277, %v2253
    %v2286 = vmax.f32 %v2278, %v2254
    %v2287 = vmax.f32 %v2279, %v2255
    %v2288 = vmax.f32 %v2280, %v2256
    %2289 = vrot.lane.b32.xlu0 %v2249, 127
    %v2290 = vpop.permute.xlu0 %2289
    %2291 = vrot.lane.b32.xlu0 %v2250, 127
    %v2292 = vpop.permute.xlu0 %2291
    %2293 = vrot.lane.b32.xlu0 %v2251, 127
    %v2294 = vpop.permute.xlu0 %2293
    %2295 = vrot.lane.b32.xlu0 %v2252, 127
    %v2296 = vpop.permute.xlu0 %2295
    %2297 = vrot.lane.b32.xlu0 %v2253, 127
    %v2298 = vpop.permute.xlu0 %2297
    %2299 = vrot.lane.b32.xlu0 %v2254, 127
    %v2300 = vpop.permute.xlu0 %2299
    %2301 = vrot.lane.b32.xlu0 %v2255, 127
    %v2302 = vpop.permute.xlu0 %2301
    %2303 = vrot.lane.b32.xlu0 %v2256, 127
    %v2304 = vpop.permute.xlu0 %2303
    %v2305 = vsel %vm110, %v2290, -inf
    %v2306 = vsel %vm110, %v2292, -inf
    %v2307 = vsel %vm110, %v2294, -inf
    %v2308 = vsel %vm110, %v2296, -inf
    %v2309 = vsel %vm110, %v2298, -inf
    %v2310 = vsel %vm110, %v2300, -inf
    %v2311 = vsel %vm110, %v2302, -inf
    %v2312 = vsel %vm110, %v2304, -inf
    %v2313 = vmax.f32 %v2281, %v2305
    %v2314 = vmax.f32 %v2282, %v2306
    %v2315 = vmax.f32 %v2283, %v2307
    %v2316 = vmax.f32 %v2284, %v2308
    %v2317 = vmax.f32 %v2285, %v2309
    %v2318 = vmax.f32 %v2286, %v2310
    %v2319 = vmax.f32 %v2287, %v2311
    %v2320 = vmax.f32 %v2288, %v2312
    %v2321 = vsub.f32 %v1905, %v2313
    %v2322 = vsub.f32 %v1906, %v2314
    %v2323 = vsub.f32 %v1907, %v2315
    %v2324 = vsub.f32 %v1908, %v2316
    %v2325 = vsub.f32 %v1909, %v2317
    %v2326 = vsub.f32 %v1910, %v2318
    %v2327 = vsub.f32 %v1911, %v2319
    %v2328 = vsub.f32 %v1912, %v2320
    %v2329 = vmax.f32 %v2321, 0.0
    %v2330 = vmax.f32 %v2322, 0.0
    %v2331 = vmax.f32 %v2323, 0.0
    %v2332 = vmax.f32 %v2324, 0.0
    %v2333 = vmax.f32 %v2325, 0.0
    %v2334 = vmax.f32 %v2326, 0.0
    %v2335 = vmax.f32 %v2327, 0.0
    %v2336 = vmax.f32 %v2328, 0.0
    %v2337 = vmul.f32 %v2081, %v2329
    %v2338 = vmul.f32 %v2082, %v2330
    %v2339 = vmul.f32 %v2083, %v2331
    %v2340 = vmul.f32 %v2084, %v2332
    %v2341 = vmul.f32 %v2085, %v2333
    %v2342 = vmul.f32 %v2086, %v2334
    %v2343 = vmul.f32 %v2087, %v2335
    %v2344 = vmul.f32 %v2088, %v2336
    %v2345 = vsub.f32 %v2329, %v2337
    %v2346 = vsub.f32 %v2330, %v2338
    %v2347 = vsub.f32 %v2331, %v2339
    %v2348 = vsub.f32 %v2332, %v2340
    %v2349 = vsub.f32 %v2333, %v2341
    %v2350 = vsub.f32 %v2334, %v2342
    %v2351 = vsub.f32 %v2335, %v2343
    %v2352 = vsub.f32 %v2336, %v2344
    %v2353 = vmax.f32 %v2345, 0.0
    %v2354 = vmax.f32 %v2346, 0.0
    %v2355 = vmax.f32 %v2347, 0.0
    %v2356 = vmax.f32 %v2348, 0.0
    %v2357 = vmax.f32 %v2349, 0.0
    %v2358 = vmax.f32 %v2350, 0.0
    %v2359 = vmax.f32 %v2351, 0.0
    %v2360 = vmax.f32 %v2352, 0.0
    %v2361 = vadd.f32 %v2081, %v2353
    %v2362 = vadd.f32 %v2082, %v2354
    %v2363 = vadd.f32 %v2083, %v2355
    %v2364 = vadd.f32 %v2084, %v2356
    %v2365 = vadd.f32 %v2085, %v2357
    %v2366 = vadd.f32 %v2086, %v2358
    %v2367 = vadd.f32 %v2087, %v2359
    %v2368 = vadd.f32 %v2088, %v2360
    %v2369 = vmul.f32 %v111, %v119
    %v2370 = vmul.f32 %v112, %v120
    %v2371 = vmul.f32 %v113, %v121
    %v2372 = vmul.f32 %v114, %v122
    %v2373 = vmul.f32 %v115, %v123
    %v2374 = vmul.f32 %v116, %v124
    %v2375 = vmul.f32 %v117, %v125
    %v2376 = vmul.f32 %v118, %v126
    %vm2377 = vcmask 523264
    %v2379 = vsel %vm2377, 1.0, 0
    %2381 = vmatprep.subr.mxu0 0.0
    %2382 = vmatpush1.msra.mxu0 %v2369
    %2383 = vmatprep.subr.mxu0 0.0
    %2384 = vmatpush1.msra.mxu0 %v2370
    %2385 = vmatprep.subr.mxu0 0.0
    %2386 = vmatpush1.msra.mxu0 %v2371
    %2387 = vmatprep.subr.mxu0 0.0
    %2388 = vmatpush1.msra.mxu0 %v2372
    %2389 = vmatprep.subr.mxu0 0.0
    %2390 = vmatpush1.msra.mxu0 %v2373
    %2391 = vmatprep.subr.mxu0 0.0
    %2392 = vmatpush1.msra.mxu0 %v2374
    %2393 = vmatprep.subr.mxu0 0.0
    %2394 = vmatpush1.msra.mxu0 %v2375
    %2395 = vmatprep.subr.mxu0 0.0
    %2396 = vmatpush1.msra.mxu0 %v2376
    %2397 = vmatprep.subr.mxu0 0.0
    %2398 = vmatpush1.msra.mxu0 0.0
    %2399 = vmatprep.subr.mxu0 0.0
    %2400 = vmatpush1.msra.mxu0 0.0
    %2401 = vmatprep.subr.mxu0 0.0
    %2402 = vmatpush1.msra.mxu0 0.0
    %2403 = vmatprep.subr.mxu0 0.0
    %2404 = vmatpush1.msra.mxu0 0.0
    %2405 = vmatprep.subr.mxu0 0.0
    %2406 = vmatpush1.msra.mxu0 0.0
    %2407 = vmatprep.subr.mxu0 0.0
    %2408 = vmatpush1.msra.mxu0 0.0
    %2409 = vmatprep.subr.mxu0 0.0
    %2410 = vmatpush1.msra.mxu0 0.0
    %2411 = vmatprep.subr.mxu0 0.0
    %2412 = vmatpush1.msra.mxu0 0.0
    %2413 = vmatprep.subr.mxu0 0.0
    %2414 = vmatpush1.msra.mxu0 0.0
    %2415 = vmatprep.subr.mxu0 0.0
    %2416 = vmatpush1.msra.mxu0 0.0
    %2417 = vmatprep.subr.mxu0 0.0
    %2418 = vmatpush1.msra.mxu0 0.0
    %2419 = vmatprep.subr.mxu0 0.0
    %2420 = vmatpush1.msra.mxu0 0.0
    %2421 = vmatprep.subr.mxu0 0.0
    %2422 = vmatpush1.msra.mxu0 0.0
    %2423 = vmatprep.subr.mxu0 0.0
    %2424 = vmatpush1.msra.mxu0 0.0
    %2425 = vmatprep.subr.mxu0 0.0
    %2426 = vmatpush1.msra.mxu0 0.0
    %2427 = vmatprep.subr.mxu0 0.0
    %2428 = vmatpush1.msra.mxu0 0.0
    %2429 = vmatprep.subr.mxu0 0.0
    %2430 = vmatpush1.msra.mxu0 0.0
    %2431 = vmatprep.subr.mxu0 0.0
    %2432 = vmatpush1.msra.mxu0 0.0
    %2433 = vmatprep.subr.mxu0 0.0
    %2434 = vmatpush1.msra.mxu0 0.0
    %2435 = vmatprep.subr.mxu0 0.0
    %2436 = vmatpush1.msra.mxu0 0.0
    %2437 = vmatprep.subr.mxu0 0.0
    %2438 = vmatpush1.msra.mxu0 0.0
    %2439 = vmatprep.subr.mxu0 0.0
    %2440 = vmatpush1.msra.mxu0 0.0
    %2441 = vmatprep.subr.mxu0 0.0
    %2442 = vmatpush1.msra.mxu0 0.0
    %2443 = vmatprep.subr.mxu0 0.0
    %2444 = vmatpush1.msra.mxu0 0.0
    %2445 = vmatprep.mubr.f32.mxu0 0.0
    %2446 = vmatmul.mubr.f32.gmra.mrb[0].mxu0 %v2379
    %v2447 = vpop.f32.mrb[0].mxu0
    %v2448 = vadd.f32 0.0, %v2447
    %v2449 = vpop.f32.mrb[0].mxu0
    %2450 = vdwg.mxu0
    %2451 = vmatprep.subr.mxu0 0.0
    %2452 = vmatpush1.msra.mxu0 %v111
    %2453 = vmatprep.subr.mxu0 0.0
    %2454 = vmatpush1.msra.mxu0 %v112
    %2455 = vmatprep.subr.mxu0 0.0
    %2456 = vmatpush1.msra.mxu0 %v113
    %2457 = vmatprep.subr.mxu0 0.0
    %2458 = vmatpush1.msra.mxu0 %v114
    %2459 = vmatprep.subr.mxu0 0.0
    %2460 = vmatpush1.msra.mxu0 %v115
    %2461 = vmatprep.subr.mxu0 0.0
    %2462 = vmatpush1.msra.mxu0 %v116
    %2463 = vmatprep.subr.mxu0 0.0
    %2464 = vmatpush1.msra.mxu0 %v117
    %2465 = vmatprep.subr.mxu0 0.0
    %2466 = vmatpush1.msra.mxu0 %v118
    %2467 = vmatprep.subr.mxu0 0.0
    %2468 = vmatpush1.msra.mxu0 0.0
    %2469 = vmatprep.subr.mxu0 0.0
    %2470 = vmatpush1.msra.mxu0 0.0
    %2471 = vmatprep.subr.mxu0 0.0
    %2472 = vmatpush1.msra.mxu0 0.0
    %2473 = vmatprep.subr.mxu0 0.0
    %2474 = vmatpush1.msra.mxu0 0.0
    %2475 = vmatprep.subr.mxu0 0.0
    %2476 = vmatpush1.msra.mxu0 0.0
    %2477 = vmatprep.subr.mxu0 0.0
    %2478 = vmatpush1.msra.mxu0 0.0
    %2479 = vmatprep.subr.mxu0 0.0
    %2480 = vmatpush1.msra.mxu0 0.0
    %2481 = vmatprep.subr.mxu0 0.0
    %2482 = vmatpush1.msra.mxu0 0.0
    %2483 = vmatprep.subr.mxu0 0.0
    %2484 = vmatpush1.msra.mxu0 0.0
    %2485 = vmatprep.subr.mxu0 0.0
    %2486 = vmatpush1.msra.mxu0 0.0
    %2487 = vmatprep.subr.mxu0 0.0
    %2488 = vmatpush1.msra.mxu0 0.0
    %2489 = vmatprep.subr.mxu0 0.0
    %2490 = vmatpush1.msra.mxu0 0.0
    %2491 = vmatprep.subr.mxu0 0.0
    %2492 = vmatpush1.msra.mxu0 0.0
    %2493 = vmatprep.subr.mxu0 0.0
    %2494 = vmatpush1.msra.mxu0 0.0
    %2495 = vmatprep.subr.mxu0 0.0
    %2496 = vmatpush1.msra.mxu0 0.0
    %2497 = vmatprep.subr.mxu0 0.0
    %2498 = vmatpush1.msra.mxu0 0.0
    %2499 = vmatprep.subr.mxu0 0.0
    %2500 = vmatpush1.msra.mxu0 0.0
    %2501 = vmatprep.subr.mxu0 0.0
    %2502 = vmatpush1.msra.mxu0 0.0
    %2503 = vmatprep.subr.mxu0 0.0
    %2504 = vmatpush1.msra.mxu0 0.0
    %2505 = vmatprep.subr.mxu0 0.0
    %2506 = vmatpush1.msra.mxu0 0.0
    %2507 = vmatprep.subr.mxu0 0.0
    %2508 = vmatpush1.msra.mxu0 0.0
    %2509 = vmatprep.subr.mxu0 0.0
    %2510 = vmatpush1.msra.mxu0 0.0
    %2511 = vmatprep.subr.mxu0 0.0
    %2512 = vmatpush1.msra.mxu0 0.0
    %2513 = vmatprep.subr.mxu0 0.0
    %2514 = vmatpush1.msra.mxu0 0.0
    %2515 = vmatprep.mubr.f32.mxu0 0.0
    %2516 = vmatmul.mubr.f32.gmra.mrb[0].mxu0 %v2379
    %v2517 = vpop.f32.mrb[0].mxu0
    %v2518 = vadd.f32 0.0, %v2517
    %v2519 = vpop.f32.mrb[0].mxu0
    %2520 = vdwg.mxu0
    %2521 = vmatprep.subr.mxu0 0.0
    %2522 = vmatpush1.msra.mxu0 %v119
    %2523 = vmatprep.subr.mxu0 0.0
    %2524 = vmatpush1.msra.mxu0 %v120
    %2525 = vmatprep.subr.mxu0 0.0
    %2526 = vmatpush1.msra.mxu0 %v121
    %2527 = vmatprep.subr.mxu0 0.0
    %2528 = vmatpush1.msra.mxu0 %v122
    %2529 = vmatprep.subr.mxu0 0.0
    %2530 = vmatpush1.msra.mxu0 %v123
    %2531 = vmatprep.subr.mxu0 0.0
    %2532 = vmatpush1.msra.mxu0 %v124
    %2533 = vmatprep.subr.mxu0 0.0
    %2534 = vmatpush1.msra.mxu0 %v125
    %2535 = vmatprep.subr.mxu0 0.0
    %2536 = vmatpush1.msra.mxu0 %v126
    %2537 = vmatprep.subr.mxu0 0.0
    %2538 = vmatpush1.msra.mxu0 0.0
    %2539 = vmatprep.subr.mxu0 0.0
    %2540 = vmatpush1.msra.mxu0 0.0
    %2541 = vmatprep.subr.mxu0 0.0
    %2542 = vmatpush1.msra.mxu0 0.0
    %2543 = vmatprep.subr.mxu0 0.0
    %2544 = vmatpush1.msra.mxu0 0.0
    %2545 = vmatprep.subr.mxu0 0.0
    %2546 = vmatpush1.msra.mxu0 0.0
    %2547 = vmatprep.subr.mxu0 0.0
    %2548 = vmatpush1.msra.mxu0 0.0
    %2549 = vmatprep.subr.mxu0 0.0
    %2550 = vmatpush1.msra.mxu0 0.0
    %2551 = vmatprep.subr.mxu0 0.0
    %2552 = vmatpush1.msra.mxu0 0.0
    %2553 = vmatprep.subr.mxu0 0.0
    %2554 = vmatpush1.msra.mxu0 0.0
    %2555 = vmatprep.subr.mxu0 0.0
    %2556 = vmatpush1.msra.mxu0 0.0
    %2557 = vmatprep.subr.mxu0 0.0
    %2558 = vmatpush1.msra.mxu0 0.0
    %2559 = vmatprep.subr.mxu0 0.0
    %2560 = vmatpush1.msra.mxu0 0.0
    %2561 = vmatprep.subr.mxu0 0.0
    %2562 = vmatpush1.msra.mxu0 0.0
    %2563 = vmatprep.subr.mxu0 0.0
    %2564 = vmatpush1.msra.mxu0 0.0
    %2565 = vmatprep.subr.mxu0 0.0
    %2566 = vmatpush1.msra.mxu0 0.0
    %2567 = vmatprep.subr.mxu0 0.0
    %2568 = vmatpush1.msra.mxu0 0.0
    %2569 = vmatprep.subr.mxu0 0.0
    %2570 = vmatpush1.msra.mxu0 0.0
    %2571 = vmatprep.subr.mxu0 0.0
    %2572 = vmatpush1.msra.mxu0 0.0
    %2573 = vmatprep.subr.mxu0 0.0
    %2574 = vmatpush1.msra.mxu0 0.0
    %2575 = vmatprep.subr.mxu0 0.0
    %2576 = vmatpush1.msra.mxu0 0.0
    %2577 = vmatprep.subr.mxu0 0.0
    %2578 = vmatpush1.msra.mxu0 0.0
    %2579 = vmatprep.subr.mxu0 0.0
    %2580 = vmatpush1.msra.mxu0 0.0
    %2581 = vmatprep.subr.mxu0 0.0
    %2582 = vmatpush1.msra.mxu0 0.0
    %2583 = vmatprep.subr.mxu0 0.0
    %2584 = vmatpush1.msra.mxu0 0.0
    %2585 = vmatprep.mubr.f32.mxu0 0.0
    %2586 = vmatmul.mubr.f32.gmra.mrb[0].mxu0 %v2379
    %v2587 = vpop.f32.mrb[0].mxu0
    %v2588 = vadd.f32 0.0, %v2587
    %v2589 = vpop.f32.mrb[0].mxu0
    %2590 = vdwg.mxu0
    %v2591 = vmul.f32 %v1241, %v111
    %v2592 = vmul.f32 %v1242, %v112
    %v2593 = vmul.f32 %v1243, %v113
    %v2594 = vmul.f32 %v1244, %v114
    %v2595 = vmul.f32 %v1245, %v115
    %v2596 = vmul.f32 %v1246, %v116
    %v2597 = vmul.f32 %v1247, %v117
    %v2598 = vmul.f32 %v1248, %v118
    %2599 = vmatprep.subr.mxu0 0.0
    %2600 = vmatpush1.msra.mxu0 %v2591
    %2601 = vmatprep.subr.mxu0 0.0
    %2602 = vmatpush1.msra.mxu0 %v2592
    %2603 = vmatprep.subr.mxu0 0.0
    %2604 = vmatpush1.msra.mxu0 %v2593
    %2605 = vmatprep.subr.mxu0 0.0
    %2606 = vmatpush1.msra.mxu0 %v2594
    %2607 = vmatprep.subr.mxu0 0.0
    %2608 = vmatpush1.msra.mxu0 %v2595
    %2609 = vmatprep.subr.mxu0 0.0
    %2610 = vmatpush1.msra.mxu0 %v2596
    %2611 = vmatprep.subr.mxu0 0.0
    %2612 = vmatpush1.msra.mxu0 %v2597
    %2613 = vmatprep.subr.mxu0 0.0
    %2614 = vmatpush1.msra.mxu0 %v2598
    %2615 = vmatprep.subr.mxu0 0.0
    %2616 = vmatpush1.msra.mxu0 0.0
    %2617 = vmatprep.subr.mxu0 0.0
    %2618 = vmatpush1.msra.mxu0 0.0
    %2619 = vmatprep.subr.mxu0 0.0
    %2620 = vmatpush1.msra.mxu0 0.0
    %2621 = vmatprep.subr.mxu0 0.0
    %2622 = vmatpush1.msra.mxu0 0.0
    %2623 = vmatprep.subr.mxu0 0.0
    %2624 = vmatpush1.msra.mxu0 0.0
    %2625 = vmatprep.subr.mxu0 0.0
    %2626 = vmatpush1.msra.mxu0 0.0
    %2627 = vmatprep.subr.mxu0 0.0
    %2628 = vmatpush1.msra.mxu0 0.0
    %2629 = vmatprep.subr.mxu0 0.0
    %2630 = vmatpush1.msra.mxu0 0.0
    %2631 = vmatprep.subr.mxu0 0.0
    %2632 = vmatpush1.msra.mxu0 0.0
    %2633 = vmatprep.subr.mxu0 0.0
    %2634 = vmatpush1.msra.mxu0 0.0
    %2635 = vmatprep.subr.mxu0 0.0
    %2636 = vmatpush1.msra.mxu0 0.0
    %2637 = vmatprep.subr.mxu0 0.0
    %2638 = vmatpush1.msra.mxu0 0.0
    %2639 = vmatprep.subr.mxu0 0.0
    %2640 = vmatpush1.msra.mxu0 0.0
    %2641 = vmatprep.subr.mxu0 0.0
    %2642 = vmatpush1.msra.mxu0 0.0
    %2643 = vmatprep.subr.mxu0 0.0
    %2644 = vmatpush1.msra.mxu0 0.0
    %2645 = vmatprep.subr.mxu0 0.0
    %2646 = vmatpush1.msra.mxu0 0.0
    %2647 = vmatprep.subr.mxu0 0.0
    %2648 = vmatpush1.msra.mxu0 0.0
    %2649 = vmatprep.subr.mxu0 0.0
    %2650 = vmatpush1.msra.mxu0 0.0
    %2651 = vmatprep.subr.mxu0 0.0
    %2652 = vmatpush1.msra.mxu0 0.0
    %2653 = vmatprep.subr.mxu0 0.0
    %2654 = vmatpush1.msra.mxu0 0.0
    %2655 = vmatprep.subr.mxu0 0.0
    %2656 = vmatpush1.msra.mxu0 0.0
    %2657 = vmatprep.subr.mxu0 0.0
    %2658 = vmatpush1.msra.mxu0 0.0
    %2659 = vmatprep.subr.mxu0 0.0
    %2660 = vmatpush1.msra.mxu0 0.0
    %2661 = vmatprep.subr.mxu0 0.0
    %2662 = vmatpush1.msra.mxu0 0.0
    %2663 = vmatprep.mubr.f32.mxu0 0.0
    %2664 = vmatmul.mubr.f32.gmra.mrb[0].mxu0 %v2379
    %v2665 = vpop.f32.mrb[0].mxu0
    %v2666 = vadd.f32 0.0, %v2665
    %v2667 = vpop.f32.mrb[0].mxu0
    %2668 = vdwg.mxu0
    %2669 = vmatprep.subr.mxu0 0.0
    %2670 = vmatpush1.msra.mxu0 %v1241
    %2671 = vmatprep.subr.mxu0 0.0
    %2672 = vmatpush1.msra.mxu0 %v1242
    %2673 = vmatprep.subr.mxu0 0.0
    %2674 = vmatpush1.msra.mxu0 %v1243
    %2675 = vmatprep.subr.mxu0 0.0
    %2676 = vmatpush1.msra.mxu0 %v1244
    %2677 = vmatprep.subr.mxu0 0.0
    %2678 = vmatpush1.msra.mxu0 %v1245
    %2679 = vmatprep.subr.mxu0 0.0
    %2680 = vmatpush1.msra.mxu0 %v1246
    %2681 = vmatprep.subr.mxu0 0.0
    %2682 = vmatpush1.msra.mxu0 %v1247
    %2683 = vmatprep.subr.mxu0 0.0
    %2684 = vmatpush1.msra.mxu0 %v1248
    %2685 = vmatprep.subr.mxu0 0.0
    %2686 = vmatpush1.msra.mxu0 0.0
    %2687 = vmatprep.subr.mxu0 0.0
    %2688 = vmatpush1.msra.mxu0 0.0
    %2689 = vmatprep.subr.mxu0 0.0
    %2690 = vmatpush1.msra.mxu0 0.0
    %2691 = vmatprep.subr.mxu0 0.0
    %2692 = vmatpush1.msra.mxu0 0.0
    %2693 = vmatprep.subr.mxu0 0.0
    %2694 = vmatpush1.msra.mxu0 0.0
    %2695 = vmatprep.subr.mxu0 0.0
    %2696 = vmatpush1.msra.mxu0 0.0
    %2697 = vmatprep.subr.mxu0 0.0
    %2698 = vmatpush1.msra.mxu0 0.0
    %2699 = vmatprep.subr.mxu0 0.0
    %2700 = vmatpush1.msra.mxu0 0.0
    %2701 = vmatprep.subr.mxu0 0.0
    %2702 = vmatpush1.msra.mxu0 0.0
    %2703 = vmatprep.subr.mxu0 0.0
    %2704 = vmatpush1.msra.mxu0 0.0
    %2705 = vmatprep.subr.mxu0 0.0
    %2706 = vmatpush1.msra.mxu0 0.0
    %2707 = vmatprep.subr.mxu0 0.0
    %2708 = vmatpush1.msra.mxu0 0.0
    %2709 = vmatprep.subr.mxu0 0.0
    %2710 = vmatpush1.msra.mxu0 0.0
    %2711 = vmatprep.subr.mxu0 0.0
    %2712 = vmatpush1.msra.mxu0 0.0
    %2713 = vmatprep.subr.mxu0 0.0
    %2714 = vmatpush1.msra.mxu0 0.0
    %2715 = vmatprep.subr.mxu0 0.0
    %2716 = vmatpush1.msra.mxu0 0.0
    %2717 = vmatprep.subr.mxu0 0.0
    %2718 = vmatpush1.msra.mxu0 0.0
    %2719 = vmatprep.subr.mxu0 0.0
    %2720 = vmatpush1.msra.mxu0 0.0
    %2721 = vmatprep.subr.mxu0 0.0
    %2722 = vmatpush1.msra.mxu0 0.0
    %2723 = vmatprep.subr.mxu0 0.0
    %2724 = vmatpush1.msra.mxu0 0.0
    %2725 = vmatprep.subr.mxu0 0.0
    %2726 = vmatpush1.msra.mxu0 0.0
    %2727 = vmatprep.subr.mxu0 0.0
    %2728 = vmatpush1.msra.mxu0 0.0
    %2729 = vmatprep.subr.mxu0 0.0
    %2730 = vmatpush1.msra.mxu0 0.0
    %2731 = vmatprep.subr.mxu0 0.0
    %2732 = vmatpush1.msra.mxu0 0.0
    %2733 = vmatprep.mubr.f32.mxu0 0.0
    %2734 = vmatmul.mubr.f32.gmra.mrb[0].mxu0 %v2379
    %v2735 = vpop.f32.mrb[0].mxu0
    %v2736 = vadd.f32 0.0, %v2735
    %v2737 = vpop.f32.mrb[0].mxu0
    %2738 = vdwg.mxu0
    %v2739 = vmul.f32 %v2361, %v119
    %v2740 = vmul.f32 %v2362, %v120
    %v2741 = vmul.f32 %v2363, %v121
    %v2742 = vmul.f32 %v2364, %v122
    %v2743 = vmul.f32 %v2365, %v123
    %v2744 = vmul.f32 %v2366, %v124
    %v2745 = vmul.f32 %v2367, %v125
    %v2746 = vmul.f32 %v2368, %v126
    %2747 = vmatprep.subr.mxu0 0.0
    %2748 = vmatpush1.msra.mxu0 %v2739
    %2749 = vmatprep.subr.mxu0 0.0
    %2750 = vmatpush1.msra.mxu0 %v2740
    %2751 = vmatprep.subr.mxu0 0.0
    %2752 = vmatpush1.msra.mxu0 %v2741
    %2753 = vmatprep.subr.mxu0 0.0
    %2754 = vmatpush1.msra.mxu0 %v2742
    %2755 = vmatprep.subr.mxu0 0.0
    %2756 = vmatpush1.msra.mxu0 %v2743
    %2757 = vmatprep.subr.mxu0 0.0
    %2758 = vmatpush1.msra.mxu0 %v2744
    %2759 = vmatprep.subr.mxu0 0.0
    %2760 = vmatpush1.msra.mxu0 %v2745
    %2761 = vmatprep.subr.mxu0 0.0
    %2762 = vmatpush1.msra.mxu0 %v2746
    %2763 = vmatprep.subr.mxu0 0.0
    %2764 = vmatpush1.msra.mxu0 0.0
    %2765 = vmatprep.subr.mxu0 0.0
    %2766 = vmatpush1.msra.mxu0 0.0
    %2767 = vmatprep.subr.mxu0 0.0
    %2768 = vmatpush1.msra.mxu0 0.0
    %2769 = vmatprep.subr.mxu0 0.0
    %2770 = vmatpush1.msra.mxu0 0.0
    %2771 = vmatprep.subr.mxu0 0.0
    %2772 = vmatpush1.msra.mxu0 0.0
    %2773 = vmatprep.subr.mxu0 0.0
    %2774 = vmatpush1.msra.mxu0 0.0
    %2775 = vmatprep.subr.mxu0 0.0
    %2776 = vmatpush1.msra.mxu0 0.0
    %2777 = vmatprep.subr.mxu0 0.0
    %2778 = vmatpush1.msra.mxu0 0.0
    %2779 = vmatprep.subr.mxu0 0.0
    %2780 = vmatpush1.msra.mxu0 0.0
    %2781 = vmatprep.subr.mxu0 0.0
    %2782 = vmatpush1.msra.mxu0 0.0
    %2783 = vmatprep.subr.mxu0 0.0
    %2784 = vmatpush1.msra.mxu0 0.0
    %2785 = vmatprep.subr.mxu0 0.0
    %2786 = vmatpush1.msra.mxu0 0.0
    %2787 = vmatprep.subr.mxu0 0.0
    %2788 = vmatpush1.msra.mxu0 0.0
    %2789 = vmatprep.subr.mxu0 0.0
    %2790 = vmatpush1.msra.mxu0 0.0
    %2791 = vmatprep.subr.mxu0 0.0
    %2792 = vmatpush1.msra.mxu0 0.0
    %2793 = vmatprep.subr.mxu0 0.0
    %2794 = vmatpush1.msra.mxu0 0.0
    %2795 = vmatprep.subr.mxu0 0.0
    %2796 = vmatpush1.msra.mxu0 0.0
    %2797 = vmatprep.subr.mxu0 0.0
    %2798 = vmatpush1.msra.mxu0 0.0
    %2799 = vmatprep.subr.mxu0 0.0
    %2800 = vmatpush1.msra.mxu0 0.0
    %2801 = vmatprep.subr.mxu0 0.0
    %2802 = vmatpush1.msra.mxu0 0.0
    %2803 = vmatprep.subr.mxu0 0.0
    %2804 = vmatpush1.msra.mxu0 0.0
    %2805 = vmatprep.subr.mxu0 0.0
    %2806 = vmatpush1.msra.mxu0 0.0
    %2807 = vmatprep.subr.mxu0 0.0
    %2808 = vmatpush1.msra.mxu0 0.0
    %2809 = vmatprep.subr.mxu0 0.0
    %2810 = vmatpush1.msra.mxu0 0.0
    %2811 = vmatprep.mubr.f32.mxu0 0.0
    %2812 = vmatmul.mubr.f32.gmra.mrb[0].mxu0 %v2379
    %v2813 = vpop.f32.mrb[0].mxu0
    %v2814 = vadd.f32 0.0, %v2813
    %v2815 = vpop.f32.mrb[0].mxu0
    %2816 = vdwg.mxu0
    %2817 = vmatprep.subr.mxu0 0.0
    %2818 = vmatpush1.msra.mxu0 %v2361
    %2819 = vmatprep.subr.mxu0 0.0
    %2820 = vmatpush1.msra.mxu0 %v2362
    %2821 = vmatprep.subr.mxu0 0.0
    %2822 = vmatpush1.msra.mxu0 %v2363
    %2823 = vmatprep.subr.mxu0 0.0
    %2824 = vmatpush1.msra.mxu0 %v2364
    %2825 = vmatprep.subr.mxu0 0.0
    %2826 = vmatpush1.msra.mxu0 %v2365
    %2827 = vmatprep.subr.mxu0 0.0
    %2828 = vmatpush1.msra.mxu0 %v2366
    %2829 = vmatprep.subr.mxu0 0.0
    %2830 = vmatpush1.msra.mxu0 %v2367
    %2831 = vmatprep.subr.mxu0 0.0
    %2832 = vmatpush1.msra.mxu0 %v2368
    %2833 = vmatprep.subr.mxu0 0.0
    %2834 = vmatpush1.msra.mxu0 0.0
    %2835 = vmatprep.subr.mxu0 0.0
    %2836 = vmatpush1.msra.mxu0 0.0
    %2837 = vmatprep.subr.mxu0 0.0
    %2838 = vmatpush1.msra.mxu0 0.0
    %2839 = vmatprep.subr.mxu0 0.0
    %2840 = vmatpush1.msra.mxu0 0.0
    %2841 = vmatprep.subr.mxu0 0.0
    %2842 = vmatpush1.msra.mxu0 0.0
    %2843 = vmatprep.subr.mxu0 0.0
    %2844 = vmatpush1.msra.mxu0 0.0
    %2845 = vmatprep.subr.mxu0 0.0
    %2846 = vmatpush1.msra.mxu0 0.0
    %2847 = vmatprep.subr.mxu0 0.0
    %2848 = vmatpush1.msra.mxu0 0.0
    %2849 = vmatprep.subr.mxu0 0.0
    %2850 = vmatpush1.msra.mxu0 0.0
    %2851 = vmatprep.subr.mxu0 0.0
    %2852 = vmatpush1.msra.mxu0 0.0
    %2853 = vmatprep.subr.mxu0 0.0
    %2854 = vmatpush1.msra.mxu0 0.0
    %2855 = vmatprep.subr.mxu0 0.0
    %2856 = vmatpush1.msra.mxu0 0.0
    %2857 = vmatprep.subr.mxu0 0.0
    %2858 = vmatpush1.msra.mxu0 0.0
    %2859 = vmatprep.subr.mxu0 0.0
    %2860 = vmatpush1.msra.mxu0 0.0
    %2861 = vmatprep.subr.mxu0 0.0
    %2862 = vmatpush1.msra.mxu0 0.0
    %2863 = vmatprep.subr.mxu0 0.0
    %2864 = vmatpush1.msra.mxu0 0.0
    %2865 = vmatprep.subr.mxu0 0.0
    %2866 = vmatpush1.msra.mxu0 0.0
    %2867 = vmatprep.subr.mxu0 0.0
    %2868 = vmatpush1.msra.mxu0 0.0
    %2869 = vmatprep.subr.mxu0 0.0
    %2870 = vmatpush1.msra.mxu0 0.0
    %2871 = vmatprep.subr.mxu0 0.0
    %2872 = vmatpush1.msra.mxu0 0.0
    %2873 = vmatprep.subr.mxu0 0.0
    %2874 = vmatpush1.msra.mxu0 0.0
    %2875 = vmatprep.subr.mxu0 0.0
    %2876 = vmatpush1.msra.mxu0 0.0
    %2877 = vmatprep.subr.mxu0 0.0
    %2878 = vmatpush1.msra.mxu0 0.0
    %2879 = vmatprep.subr.mxu0 0.0
    %2880 = vmatpush1.msra.mxu0 0.0
    %2881 = vmatprep.mubr.f32.mxu0 0.0
    %2882 = vmatmul.mubr.f32.gmra.mrb[0].mxu0 %v2379
    %v2883 = vpop.f32.mrb[0].mxu0
    %v2884 = vadd.f32 0.0, %v2883
    %v2885 = vpop.f32.mrb[0].mxu0
    %2886 = vdwg.mxu0
    %v2888 = vrot.slane %v2518, 7
    %v2891 = vrot.slane %v2588, 6
    %v2894 = vrot.slane %v2666, 5
    %v2897 = vrot.slane %v2736, 4
    %v2900 = vrot.slane %v2814, 3
    %v2903 = vrot.slane %v2884, 2
    %vm2905 = vcmask 1040384
    %v2906 = vsel %vm2905, %v2448, %v2888
    %vm2907 = vcmask 1041408
    %v2908 = vsel %vm2907, %v2906, %v2891
    %vm2909 = vcmask 1042432
    %v2910 = vsel %vm2909, %v2908, %v2894
    %vm2911 = vcmask 1043456
    %v2912 = vsel %vm2911, %v2910, %v2897
    %vm2913 = vcmask 1044480
    %v2914 = vsel %vm2913, %v2912, %v2900
    %vm2915 = vcmask 1045504
    %v2916 = vsel %vm2915, %v2914, %v2903
    %vm2917 = vcmask 1046528
    %v2918 = vsel %vm2917, %v2916, 0.0
    %v2919 = vadd.f32 %v2918, 0.0
    %v2920 = vld [vmem:[#allocation7] sm:$0xff]
    %v2921 = vadd.f32 %v2920, %v2919
    %2922 = vst [vmem:[#allocation7] sm:$0xff] %v2921
    // Predicated region
    $region22: #{tpu_custom_call.1} parent=1 // pred_check
      _
    $region23: #{tpu_custom_call.1} parent=1 // pred_check_branch
      %2924 = sbr.rel (0) target = $region25
    $region24: #{tpu_custom_call.1} parent=1 // pred_region
      %s2926 = ssub.s32 128, 128
      %2927 = vsyncadd [#allocation4], %s2926
      %s2929 = sshll.u32 [#allocation7], 4
      %s2930 = int_to_ptr.vmem [resolvable:$true] %s2929
      %2932 = dma.vmem_to_hbm [thread:$0]  %s2930, 128, %s2, [#allocation4]
    $region25: #{tpu_custom_call.1} parent=1 // pred_fallthru
      _
    // Predicated region
    $region26: #{tpu_custom_call.1} parent=1 // pred_check
      _
    $region27: #{tpu_custom_call.1} parent=1 // pred_check_branch
      %2934 = sbr.rel (0) target = $region29
    $region28: #{tpu_custom_call.1} parent=1 // pred_region
      %2935 = dma.done [#allocation4], 128
    $region29: #{tpu_custom_call.1} parent=1 // pred_fallthru
      _
    %2936 = vsyncpa [#allocation3], 1
    %2937 = vsyncpa [#allocation6], 1
    %2938 = vsyncpa [#allocation4], 1

</llo_original>
